<compile_context>
chip_gen: v5e
topology: v5e:2x2
jax: 0.10.0
libtpu: 0.0.40
codegen_flags: <defaults>
</compile_context>

<pallas_src>
import jax
import jax.numpy as jnp
from jax import lax
from jax.experimental import pallas as pl
from jax.experimental.pallas import tpu as pltpu


# -----------------------------------------------------------------------------
# Pallas kernels
# -----------------------------------------------------------------------------
def _conv_stack_kernel(p5_ref, w15_ref, b1_ref, w2_ref, b2_ref, o_ref):
    """Fused conv stack for one image.

    p5 rows are 5x5 raw-input patches, pre-ordered (ypar, xpar, yo, xo).
    W15 maps each patch straight to the conv2 im2col row of relu(conv1), so
      h = relu(p5 @ W15 + b1rep)   == im2col(relu(conv1(x)))      (576, 288)
      g = relu(h  @ W2  + b2)      == relu(conv2(...))            (576,  64)
    and the 2x2 max-pool is an elementwise max of 4 contiguous row slabs.
    """
    h = jnp.dot(p5_ref[...], w15_ref[...], preferred_element_type=jnp.float32)
    h = jnp.maximum(h + b1_ref[...], 0.0)            # (576, 288)
    g = jnp.dot(h, w2_ref[...], preferred_element_type=jnp.float32)
    g = jnp.maximum(g + b2_ref[...], 0.0)            # (576, 64)
    n = o_ref.shape[0]                               # 144 pooled pixels
    o_ref[...] = jnp.maximum(
        jnp.maximum(g[0 * n:1 * n], g[1 * n:2 * n]),
        jnp.maximum(g[2 * n:3 * n], g[3 * n:4 * n]),
    )


def _fc_head_kernel(x_ref, w1_ref, b1_ref, w2_ref, b2_ref, o_ref):
    """log_softmax(relu(x @ w1 + b1) @ w2 + b2), fully fused."""
    h = jnp.dot(x_ref[...], w1_ref[...], preferred_element_type=jnp.float32)
    h = jnp.maximum(h + b1_ref[...], 0.0)
    z = jnp.dot(h, w2_ref[...], preferred_element_type=jnp.float32) + b2_ref[...]
    m = jnp.max(z, axis=-1, keepdims=True)
    s = z - m
    o_ref[...] = s - jnp.log(jnp.sum(jnp.exp(s), axis=-1, keepdims=True))


# -----------------------------------------------------------------------------
# pallas_call wrappers
# -----------------------------------------------------------------------------
def pallas_conv_stack(p5, w15, b1rep, w2m, b2, batch):
    """Fused conv1+relu+conv2+relu+2x2-maxpool.  One grid step per image."""
    M, K = p5.shape                 # (B*576, 25)
    H = w15.shape[1]                # 288
    N = w2m.shape[1]                # 64
    rows_in = M // batch            # 576
    rows_out = rows_in // 4         # 144
    return pl.pallas_call(
        _conv_stack_kernel,
        out_shape=jax.ShapeDtypeStruct((batch * rows_out, N), jnp.float32),
        grid_spec=pltpu.PrefetchScalarGridSpec(
            num_scalar_prefetch=0,
            grid=(batch,),
            in_specs=[
                pl.BlockSpec((rows_in, K), lambda b: (b, 0)),
                pl.BlockSpec((K, H), lambda b: (0, 0)),
                pl.BlockSpec((1, H), lambda b: (0, 0)),
                pl.BlockSpec((H, N), lambda b: (0, 0)),
                pl.BlockSpec((1, N), lambda b: (0, 0)),
            ],
            out_specs=pl.BlockSpec((rows_out, N), lambda b: (b, 0)),
        ),
        compiler_params=pltpu.CompilerParams(
            dimension_semantics=("parallel",)),
    )(p5, w15, b1rep, w2m, b2)


def pallas_fc_head(flat, w1, b1_2d, w2, b2_2d):
    """Fused fc1+relu+fc2+log_softmax.  K=9216 in one shot, M padded to 8."""
    B, K = flat.shape
    H = w1.shape[1]                 # 128
    N = w2.shape[1]                 # 10
    Mp = max(8, ((B + 7) // 8) * 8)
    xp = flat if Mp == B else jnp.zeros((Mp, K), jnp.float32).at[:B].set(flat)
    out = pl.pallas_call(
        _fc_head_kernel,
        out_shape=jax.ShapeDtypeStruct((Mp, N), jnp.float32),
        grid_spec=pltpu.PrefetchScalarGridSpec(
            num_scalar_prefetch=0,
            grid=(1,),
            in_specs=[
                pl.BlockSpec((Mp, K), lambda i: (0, 0)),
                pl.BlockSpec((K, H), lambda i: (0, 0)),
                pl.BlockSpec((1, H), lambda i: (0, 0)),
                pl.BlockSpec((H, N), lambda i: (0, 0)),
                pl.BlockSpec((1, N), lambda i: (0, 0)),
            ],
            out_specs=pl.BlockSpec((Mp, N), lambda i: (0, 0)),
        ),
        compiler_params=pltpu.CompilerParams(
            dimension_semantics=("arbitrary",)),
    )(xp, w1, b1_2d, w2, b2_2d)
    return out[:B]


# -----------------------------------------------------------------------------
# Glue (raw-input patch extraction, parameter prep) in plain JAX
# -----------------------------------------------------------------------------
def build_patches5(x_nchw):
    """5x5 im2col of the raw single-channel input, built directly from NCHW.

    Rows per image are ordered (ypar, xpar, yo, xo) so the in-kernel 2x2 pool
    is a max over 4 contiguous row slabs.  Shape: (B*24*24, 25).
    """
    B, _, Hh, Ww = x_nchw.shape
    H2, W2 = Hh - 4, Ww - 4          # combined 5x5 receptive field: 28 -> 24
    Hp, Wp = H2 // 2, W2 // 2        # 12
    img = x_nchw[:, 0]               # (B, 28, 28)
    cols = jnp.stack(
        [img[:, i:i + H2, j:j + W2] for i in range(5) for j in range(5)],
        axis=-1,
    )                                                    # (B, 24, 24, 25)
    cols = cols.reshape(B, Hp, 2, Wp, 2, 25).transpose(0, 2, 4, 1, 3, 5)
    return cols.reshape(B * H2 * W2, 25)


def prepare_params(p):
    """One-time weight layout prep (hoisted out of the forward pass)."""
    f32 = jnp.float32
    # conv1 weights, tap-major: (dy1, dx1, cout1)
    w1k = p["w1"].astype(f32).transpose(2, 3, 1, 0).reshape(3, 3, 32)
    # W15[(i*5+j), (t2*32+c)] = w1[c, 0, i-dy2, j-dx2] when 0<=i-dy2<3, 0<=j-dx2<3
    # (t2 = dy2*3+dx2).  By linearity of conv1 this maps a 5x5 input patch
    # directly to the conv2-im2col row of (pre-relu) conv1.
    ii = jnp.arange(5)[:, None, None, None]
    jj = jnp.arange(5)[None, :, None, None]
    dy2 = jnp.arange(3)[None, None, :, None]
    dx2 = jnp.arange(3)[None, None, None, :]
    a, b = ii - dy2, jj - dx2
    valid = (a >= 0) & (a < 3) & (b >= 0) & (b < 3)
    w15 = jnp.where(valid[..., None],
                    w1k[jnp.clip(a, 0, 2), jnp.clip(b, 0, 2), :], 0.0)
    w15 = w15.reshape(25, 9 * 32)                        # (25, 288)
    return {
        "w15": w15,
        # conv1 bias replicated per conv2 tap: column order (t2, c)
        "b1rep": jnp.tile(p["b1"].astype(f32).reshape(1, 32), (1, 9)),  # (1,288)
        # conv2 weights with rows ordered (t2, cin) to match the kernel layout
        "w2m": p["w2"].astype(f32).transpose(2, 3, 1, 0).reshape(288, 64),
        "b2": p["b2"].astype(f32).reshape(1, 64),
        # fc1 rows permuted from PyTorch flatten order (C,H,W) to our (H,W,C)
        "fc1_w": p["fc1_w"].astype(f32)
                 .reshape(64, 12, 12, 128).transpose(1, 2, 0, 3)
                 .reshape(9216, 128),
        "fc1_b": p["fc1_b"].astype(f32).reshape(1, 128),
        "fc2_w": p["fc2_w"].astype(f32),                 # (128, 10)
        "fc2_b": p["fc2_b"].astype(f32).reshape(1, 10),
    }


def net_forward(x_nchw, q):
    B = x_nchw.shape[0]

    # conv1+relu+conv2+relu+maxpool2, fully fused in one Pallas kernel.
    p5 = build_patches5(x_nchw)                               # (B*576, 25)
    pooled = pallas_conv_stack(p5, q["w15"], q["b1rep"],
                               q["w2m"], q["b2"], B)          # (B*144, 64)

    # dropout1 / dropout2: identity (eval-mode semantics)
    # flatten: rows are (y, x), channels in lanes -> (y, x, c) order, which the
    # permuted fc1 weight expects; the reshape is contiguous (free in XLA).
    flat = pooled.reshape(B, 12 * 12 * 64)                    # (B, 9216)

    # fc1 + relu + fc2 + log_softmax, fused
    return pallas_fc_head(flat, q["fc1_w"], q["fc1_b"], q["fc2_w"], q["fc2_b"])


def reference_forward(x_nchw, p):
    """Pure-JAX reference (independent lowering) for correctness check."""
    dn = ("NCHW", "OIHW", "NCHW")
    h = lax.conv_general_dilated(x_nchw, p["w1"], (1, 1), "VALID",
                                 dimension_numbers=dn)
    h = jax.nn.relu(h + p["b1"][None, :, None, None])
    h = lax.conv_general_dilated(h, p["w2"], (1, 1), "VALID",
                                 dimension_numbers=dn)
    h = jax.nn.relu(h + p["b2"][None, :, None, None])
    h = lax.reduce_window(h, -jnp.inf, lax.max, (1, 1, 2, 2), (1, 1, 2, 2),
                          "VALID")
    h = h.reshape(h.shape[0], -1)
    h = jax.nn.relu(h @ p["fc1_w"] + p["fc1_b"])
    h = h @ p["fc2_w"] + p["fc2_b"]
    return jax.nn.log_softmax(h, axis=-1)


def init_params(key):
    ks = jax.random.split(key, 8)
    return {
        "w1": 0.1 * jax.random.normal(ks[0], (32, 1, 3, 3), jnp.float32),
        "b1": 0.1 * jax.random.normal(ks[1], (32,), jnp.float32),
        "w2": 0.05 * jax.random.normal(ks[2], (64, 32, 3, 3), jnp.float32),
        "b2": 0.1 * jax.random.normal(ks[3], (64,), jnp.float32),
        "fc1_w": 0.02 * jax.random.normal(ks[4], (9216, 128), jnp.float32),
        "fc1_b": 0.1 * jax.random.normal(ks[5], (128,), jnp.float32),
        "fc2_w": 0.1 * jax.random.normal(ks[6], (128, 10), jnp.float32),
        "fc2_b": 0.1 * jax.random.normal(ks[7], (10,), jnp.float32),
    }


if __name__ == "__main__":
    key = jax.random.PRNGKey(0)
    k_x, k_p = jax.random.split(key)
    # MNIST-style input implied by fc1 in_features = 9216 = 64 * 12 * 12
    x = jax.random.normal(k_x, (2, 1, 28, 28), jnp.float32)
    params = init_params(k_p)
    prepped = prepare_params(params)          # hoisted, one-time weight prep

    fwd = jax.jit(net_forward)
    out = jax.block_until_ready(fwd(x, prepped))

    ref = jax.block_until_ready(reference_forward(x, params))
    assert out.shape == (2, 10)
    max_err = float(jnp.max(jnp.abs(out - ref)))
    assert max_err < 1e-3, f"mismatch vs reference: {max_err}"

    # TODO(synk): Dropout2d layers are implemented as identity (inference mode);
    # training-mode stochastic channel masking is not reproduced.
    print("KERNEL_OK")
</pallas_src>

<mosaic_0001>
module attributes {stable_mosaic.version = 11 : i64} {
  func.func @_conv_stack_kernel(%arg0: i32, %arg1: memref<576x25xf32, #tpu.memory_space<vmem>>, %arg2: memref<25x288xf32, #tpu.memory_space<vmem>>, %arg3: memref<1x288xf32, #tpu.memory_space<vmem>>, %arg4: memref<288x64xf32, #tpu.memory_space<vmem>>, %arg5: memref<1x64xf32, #tpu.memory_space<vmem>>, %arg6: memref<144x64xf32, #tpu.memory_space<vmem>>) attributes {dimension_semantics = [#tpu.dimension_semantics<parallel>], iteration_bounds = array<i64: 2>, scalar_prefetch = 0 : i64, scratch_operands = 0 : i64, tpu.core_type = #tpu.core_type<tc>, window_params = [{transform_indices = @transform_0, window_bounds = array<i64: 576, 25>}, {pipeline_mode = #tpu.pipeline_mode<synchronous>, transform_indices = @transform_1, window_bounds = array<i64: 25, 288>}, {pipeline_mode = #tpu.pipeline_mode<synchronous>, transform_indices = @transform_2, window_bounds = array<i64: 1, 288>}, {pipeline_mode = #tpu.pipeline_mode<synchronous>, transform_indices = @transform_3, window_bounds = array<i64: 288, 64>}, {pipeline_mode = #tpu.pipeline_mode<synchronous>, transform_indices = @transform_4, window_bounds = array<i64: 1, 64>}, {transform_indices = @transform_5, window_bounds = array<i64: 144, 64>}]} {
    %c0 = arith.constant 0 : index
    %c0_0 = arith.constant 0 : index
    %0 = vector.load %arg1[%c0, %c0_0] : memref<576x25xf32, #tpu.memory_space<vmem>>, vector<576x25xf32>
    %c0_1 = arith.constant 0 : index
    %c0_2 = arith.constant 0 : index
    %1 = vector.load %arg2[%c0_1, %c0_2] : memref<25x288xf32, #tpu.memory_space<vmem>>, vector<25x288xf32>
    %cst = arith.constant dense<0.000000e+00> : vector<576x288xf32>
    %2 = tpu.matmul %0, %1, %cst {dimension_numbers = #tpu.dot_dimension_numbers<[1], [0], [0], [1], [0, 0, 1, 1], [], []>} : vector<576x25xf32>, vector<25x288xf32>, vector<576x288xf32> -> vector<576x288xf32>
    %c0_3 = arith.constant 0 : index
    %c0_4 = arith.constant 0 : index
    %3 = vector.load %arg3[%c0_3, %c0_4] : memref<1x288xf32, #tpu.memory_space<vmem>>, vector<1x288xf32>
    %4 = vector.broadcast %3 : vector<1x288xf32> to vector<576x288xf32>
    %5 = arith.addf %2, %4 : vector<576x288xf32>
    %cst_5 = arith.constant 0.000000e+00 : f32
    %6 = vector.broadcast %cst_5 : f32 to vector<576x288xf32>
    %7 = arith.maximumf %5, %6 : vector<576x288xf32>
    %c0_6 = arith.constant 0 : index
    %c0_7 = arith.constant 0 : index
    %8 = vector.load %arg4[%c0_6, %c0_7] : memref<288x64xf32, #tpu.memory_space<vmem>>, vector<288x64xf32>
    %cst_8 = arith.constant dense<0.000000e+00> : vector<576x64xf32>
    %9 = tpu.matmul %7, %8, %cst_8 {dimension_numbers = #tpu.dot_dimension_numbers<[1], [0], [0], [1], [0, 0, 1, 1], [], []>} : vector<576x288xf32>, vector<288x64xf32>, vector<576x64xf32> -> vector<576x64xf32>
    %c0_9 = arith.constant 0 : index
    %c0_10 = arith.constant 0 : index
    %10 = vector.load %arg5[%c0_9, %c0_10] : memref<1x64xf32, #tpu.memory_space<vmem>>, vector<1x64xf32>
    %11 = vector.broadcast %10 : vector<1x64xf32> to vector<576x64xf32>
    %12 = arith.addf %9, %11 : vector<576x64xf32>
    %cst_11 = arith.constant 0.000000e+00 : f32
    %13 = vector.broadcast %cst_11 : f32 to vector<576x64xf32>
    %14 = arith.maximumf %12, %13 : vector<576x64xf32>
    %15 = vector.extract_strided_slice %14 {offsets = [0, 0], sizes = [144, 64], strides = [1, 1]} : vector<576x64xf32> to vector<144x64xf32>
    %16 = vector.extract_strided_slice %14 {offsets = [144, 0], sizes = [144, 64], strides = [1, 1]} : vector<576x64xf32> to vector<144x64xf32>
    %17 = arith.maximumf %15, %16 : vector<144x64xf32>
    %18 = vector.extract_strided_slice %14 {offsets = [288, 0], sizes = [144, 64], strides = [1, 1]} : vector<576x64xf32> to vector<144x64xf32>
    %19 = vector.extract_strided_slice %14 {offsets = [432, 0], sizes = [144, 64], strides = [1, 1]} : vector<576x64xf32> to vector<144x64xf32>
    %20 = arith.maximumf %18, %19 : vector<144x64xf32>
    %21 = arith.maximumf %17, %20 : vector<144x64xf32>
    %c0_12 = arith.constant 0 : index
    %c0_13 = arith.constant 0 : index
    %22 = vector.load %arg6[%c0_12, %c0_13] : memref<144x64xf32, #tpu.memory_space<vmem>>, vector<144x64xf32>
    tpu.vector_store %arg6[%c0_12, %c0_13], %21 {strides = array<i32>} : memref<144x64xf32, #tpu.memory_space<vmem>>, vector<144x64xf32>,
    return
  }
  func.func @transform_0(%arg0: i32) -> (i32, i32) {
    %c0_i32 = arith.constant 0 : i32
    %c0_i32_0 = arith.constant 0 : i32
    return %arg0, %c0_i32 : i32, i32
  }
  func.func @transform_1(%arg0: i32) -> (i32, i32) {
    %c0_i32 = arith.constant 0 : i32
    %c0_i32_0 = arith.constant 0 : i32
    %c0_i32_1 = arith.constant 0 : i32
    return %c0_i32, %c0_i32_0 : i32, i32
  }
  func.func @transform_2(%arg0: i32) -> (i32, i32) {
    %c0_i32 = arith.constant 0 : i32
    %c0_i32_0 = arith.constant 0 : i32
    %c0_i32_1 = arith.constant 0 : i32
    return %c0_i32, %c0_i32_0 : i32, i32
  }
  func.func @transform_3(%arg0: i32) -> (i32, i32) {
    %c0_i32 = arith.constant 0 : i32
    %c0_i32_0 = arith.constant 0 : i32
    %c0_i32_1 = arith.constant 0 : i32
    return %c0_i32, %c0_i32_0 : i32, i32
  }
  func.func @transform_4(%arg0: i32) -> (i32, i32) {
    %c0_i32 = arith.constant 0 : i32
    %c0_i32_0 = arith.constant 0 : i32
    %c0_i32_1 = arith.constant 0 : i32
    return %c0_i32, %c0_i32_0 : i32, i32
  }
  func.func @transform_5(%arg0: i32) -> (i32, i32) {
    %c0_i32 = arith.constant 0 : i32
    %c0_i32_0 = arith.constant 0 : i32
    return %arg0, %c0_i32 : i32, i32
  }
}

module attributes {stable_mosaic.version = 11 : i64} {
  func.func @_fc_head_kernel(%arg0: i32, %arg1: memref<8x9216xf32, #tpu.memory_space<vmem>>, %arg2: memref<9216x128xf32, #tpu.memory_space<vmem>>, %arg3: memref<1x128xf32, #tpu.memory_space<vmem>>, %arg4: memref<128x10xf32, #tpu.memory_space<vmem>>, %arg5: memref<1x10xf32, #tpu.memory_space<vmem>>, %arg6: memref<8x10xf32, #tpu.memory_space<vmem>>) attributes {dimension_semantics = [#tpu.dimension_semantics<arbitrary>], iteration_bounds = array<i64: 1>, scalar_prefetch = 0 : i64, scratch_operands = 0 : i64, tpu.core_type = #tpu.core_type<tc>, window_params = [{pipeline_mode = #tpu.pipeline_mode<synchronous>, transform_indices = @transform_0, window_bounds = array<i64: 8, 9216>}, {pipeline_mode = #tpu.pipeline_mode<synchronous>, transform_indices = @transform_1, window_bounds = array<i64: 9216, 128>}, {pipeline_mode = #tpu.pipeline_mode<synchronous>, transform_indices = @transform_2, window_bounds = array<i64: 1, 128>}, {pipeline_mode = #tpu.pipeline_mode<synchronous>, transform_indices = @transform_3, window_bounds = array<i64: 128, 10>}, {pipeline_mode = #tpu.pipeline_mode<synchronous>, transform_indices = @transform_4, window_bounds = array<i64: 1, 10>}, {pipeline_mode = #tpu.pipeline_mode<synchronous>, transform_indices = @transform_5, window_bounds = array<i64: 8, 10>}]} {
    %c0 = arith.constant 0 : index
    %c0_0 = arith.constant 0 : index
    %0 = vector.load %arg1[%c0, %c0_0] : memref<8x9216xf32, #tpu.memory_space<vmem>>, vector<8x9216xf32>
    %c0_1 = arith.constant 0 : index
    %c0_2 = arith.constant 0 : index
    %1 = vector.load %arg2[%c0_1, %c0_2] : memref<9216x128xf32, #tpu.memory_space<vmem>>, vector<9216x128xf32>
    %cst = arith.constant dense<0.000000e+00> : vector<8x128xf32>
    %2 = tpu.matmul %0, %1, %cst {dimension_numbers = #tpu.dot_dimension_numbers<[1], [0], [0], [1], [0, 0, 1, 1], [], []>} : vector<8x9216xf32>, vector<9216x128xf32>, vector<8x128xf32> -> vector<8x128xf32>
    %c0_3 = arith.constant 0 : index
    %c0_4 = arith.constant 0 : index
    %3 = vector.load %arg3[%c0_3, %c0_4] : memref<1x128xf32, #tpu.memory_space<vmem>>, vector<1x128xf32>
    %4 = vector.broadcast %3 : vector<1x128xf32> to vector<8x128xf32>
    %5 = arith.addf %2, %4 : vector<8x128xf32>
    %cst_5 = arith.constant 0.000000e+00 : f32
    %6 = vector.broadcast %cst_5 : f32 to vector<8x128xf32>
    %7 = arith.maximumf %5, %6 : vector<8x128xf32>
    %c0_6 = arith.constant 0 : index
    %c0_7 = arith.constant 0 : index
    %8 = vector.load %arg4[%c0_6, %c0_7] : memref<128x10xf32, #tpu.memory_space<vmem>>, vector<128x10xf32>
    %cst_8 = arith.constant dense<0.000000e+00> : vector<8x10xf32>
    %9 = tpu.matmul %7, %8, %cst_8 {dimension_numbers = #tpu.dot_dimension_numbers<[1], [0], [0], [1], [0, 0, 1, 1], [], []>} : vector<8x128xf32>, vector<128x10xf32>, vector<8x10xf32> -> vector<8x10xf32>
    %c0_9 = arith.constant 0 : index
    %c0_10 = arith.constant 0 : index
    %10 = vector.load %arg5[%c0_9, %c0_10] : memref<1x10xf32, #tpu.memory_space<vmem>>, vector<1x10xf32>
    %11 = vector.broadcast %10 : vector<1x10xf32> to vector<8x10xf32>
    %12 = arith.addf %9, %11 : vector<8x10xf32>
    %cst_11 = arith.constant dense<0xFF800000> : vector<8xf32>
    %13 = vector.multi_reduction <maximumf>, %12, %cst_11 [1] : vector<8x10xf32> to vector<8xf32>
    %14 = vector.shape_cast %13 : vector<8xf32> to vector<8x1xf32>
    %15 = vector.broadcast %14 : vector<8x1xf32> to vector<8x10xf32>
    %16 = arith.subf %12, %15 : vector<8x10xf32>
    %17 = math.exp %16 : vector<8x10xf32>
    %cst_12 = arith.constant dense<0.000000e+00> : vector<8xf32>
    %18 = vector.multi_reduction <add>, %17, %cst_12 [1] : vector<8x10xf32> to vector<8xf32>
    %19 = vector.shape_cast %18 : vector<8xf32> to vector<8x1xf32>
    %20 = math.log %19 : vector<8x1xf32>
    %21 = vector.broadcast %20 : vector<8x1xf32> to vector<8x10xf32>
    %22 = arith.subf %16, %21 : vector<8x10xf32>
    %c0_13 = arith.constant 0 : index
    %c0_14 = arith.constant 0 : index
    %23 = vector.load %arg6[%c0_13, %c0_14] : memref<8x10xf32, #tpu.memory_space<vmem>>, vector<8x10xf32>
    tpu.vector_store %arg6[%c0_13, %c0_14], %22 {strides = array<i32>} : memref<8x10xf32, #tpu.memory_space<vmem>>, vector<8x10xf32>,
    return
  }
  func.func @transform_0(%arg0: i32) -> (i32, i32) {
    %c0_i32 = arith.constant 0 : i32
    %c0_i32_0 = arith.constant 0 : i32
    %c0_i32_1 = arith.constant 0 : i32
    return %c0_i32, %c0_i32_0 : i32, i32
  }
  func.func @transform_1(%arg0: i32) -> (i32, i32) {
    %c0_i32 = arith.constant 0 : i32
    %c0_i32_0 = arith.constant 0 : i32
    %c0_i32_1 = arith.constant 0 : i32
    return %c0_i32, %c0_i32_0 : i32, i32
  }
  func.func @transform_2(%arg0: i32) -> (i32, i32) {
    %c0_i32 = arith.constant 0 : i32
    %c0_i32_0 = arith.constant 0 : i32
    %c0_i32_1 = arith.constant 0 : i32
    return %c0_i32, %c0_i32_0 : i32, i32
  }
  func.func @transform_3(%arg0: i32) -> (i32, i32) {
    %c0_i32 = arith.constant 0 : i32
    %c0_i32_0 = arith.constant 0 : i32
    %c0_i32_1 = arith.constant 0 : i32
    return %c0_i32, %c0_i32_0 : i32, i32
  }
  func.func @transform_4(%arg0: i32) -> (i32, i32) {
    %c0_i32 = arith.constant 0 : i32
    %c0_i32_0 = arith.constant 0 : i32
    %c0_i32_1 = arith.constant 0 : i32
    return %c0_i32, %c0_i32_0 : i32, i32
  }
  func.func @transform_5(%arg0: i32) -> (i32, i32) {
    %c0_i32 = arith.constant 0 : i32
    %c0_i32_0 = arith.constant 0 : i32
    %c0_i32_1 = arith.constant 0 : i32
    return %c0_i32, %c0_i32_0 : i32, i32
  }
}

</mosaic_0001>

<llo_original>
// kernel: net_forward.2
$region0: #{net_forward.2}
  #allocation0 [shape = 'u32[]', space=smem, size = 0x4, offset = 0x4, fixed_abs, tag = 'smem constant byte address 0x4 - core index']
  #allocation1 [shape = 'u32[72,128]{1,0:T(1,128)}', space=vmem, size = 0x9000, scoped, tag = 'internal scratch']
  %s0 = inlined_call_operand.vmem [shape: f32[1152,25], index: 0, kind: input, shape index: {}]
  %s1 = inlined_call_operand.vmem [shape: f32[25,288], index: 1, kind: input, shape index: {}]
  %s2 = inlined_call_operand.vmem [shape: f32[1,288], index: 2, kind: input, shape index: {}]
  %s3 = inlined_call_operand.vmem [shape: f32[288,64], index: 3, kind: input, shape index: {}]
  %s4 = inlined_call_operand.vmem [shape: f32[1,64], index: 4, kind: input, shape index: {}]
  %s5 = inlined_call_operand.vmem [shape: f32[288,64], index: 5, kind: output, shape index: {}]
  %s6 = sld [smem:[#allocation0]]
  $region53: #{net_forward.2} parent=0
    _
  %s8 = ssub.s32 1, %s6
  %s9 = scalar_select 0, %s8, %s6
  loop: start=0, step=1, limit=4
  $region2: #{net_forward.2} parent=0 // loop_pre_header
    _
  $region3: #{net_forward.2} parent=0 // loop_header
    %s11 = sphi 0, %s15
    %p12 = scmp.ge.s32.totalorder %s11, 4
    %s21 = sphi 0, %s23
    %s24 = sphi 0, %s21
    %s25 = sphi 0, %s24
    %s41 = sphi 0, %s25
    %s45 = sphi 0, %s45
    %s47 = sphi 0, %s45
    %s48 = sphi 0, %s47
    %s62 = sphi 0, %s48
    %s66 = sphi 0, %s66
    %s68 = sphi 0, %s66
    %s69 = sphi 0, %s68
    %s83 = sphi 0, %s69
    %s87 = sphi 0, %s87
    %s89 = sphi 0, %s87
    %s90 = sphi 0, %s89
    %s104 = sphi 0, %s90
    %s108 = sphi 0, %s108
    %s110 = sphi 0, %s108
    %s111 = sphi 0, %s110
    %s125 = sphi 0, %s111
    %s131 = sphi 0, %s133
    %s134 = sphi 0, %s131
    %s135 = sphi 0, %s134
    %s151 = sphi 0, %s135
  $region4: #{net_forward.2} parent=0 // loop_header_branch
    %14 = sbr.rel (%p12) target = $region8
  $region5: #{net_forward.2} parent=0 // loop_body
    %s16 = ssub.s32 %s11, 1
    %s17 = ssub.s32 %s11, 2
    %s18 = sadd.s32 %s11, 1
    %s19 = ssub.s32 %s11, %s18
    %p20 = scmp.eq.s32.totalorder %s19, 0
    %s22 = sadd.s32 %s21, 1
    %s23 = scalar_select %p20, %s21, %s22
    %p26 = pneg %p20
    %p27 = scmp.eq.s32.totalorder %s11, 1
    %p28 = por %p26, %p27
    %p29 = scmp.ne.s32.totalorder %s21, %s24
    %p30 = scmp.eq.s32.totalorder %s11, 0
    %p31 = por %p29, %p30
    %p32 = scmp.ne.s32.totalorder %s21, %s24
    %p33 = scmp.eq.s32.totalorder %s16, 1
    %p34 = por %p32, %p33
    %p35 = scmp.ne.s32.totalorder %s24, %s25
    %p36 = scmp.eq.s32.totalorder %s16, 0
    %p37 = por %p35, %p36
    %p38 = scmp.ne.s32.totalorder %s24, %s25
    %p39 = scmp.eq.s32.totalorder %s17, 1
    %p40 = por %p38, %p39
    %p42 = scmp.ne.s32.totalorder %s25, %s41
    %p43 = scmp.eq.s32.totalorder %s17, 0
    %p44 = por %p42, %p43
    %s46 = sadd.s32 %s45, 1
    %p49 = scmp.eq.s32.totalorder %s11, 1
    %p50 = scmp.ne.s32.totalorder %s45, %s47
    %p51 = scmp.eq.s32.totalorder %s11, 0
    %p52 = por %p50, %p51
    %p53 = scmp.ne.s32.totalorder %s45, %s47
    %p54 = scmp.eq.s32.totalorder %s16, 1
    %p55 = por %p53, %p54
    %p56 = scmp.ne.s32.totalorder %s47, %s48
    %p57 = scmp.eq.s32.totalorder %s16, 0
    %p58 = por %p56, %p57
    %p59 = scmp.ne.s32.totalorder %s47, %s48
    %p60 = scmp.eq.s32.totalorder %s17, 1
    %p61 = por %p59, %p60
    %p63 = scmp.ne.s32.totalorder %s48, %s62
    %p64 = scmp.eq.s32.totalorder %s17, 0
    %p65 = por %p63, %p64
    %s67 = sadd.s32 %s66, 1
    %p70 = scmp.eq.s32.totalorder %s11, 1
    %p71 = scmp.ne.s32.totalorder %s66, %s68
    %p72 = scmp.eq.s32.totalorder %s11, 0
    %p73 = por %p71, %p72
    %p74 = scmp.ne.s32.totalorder %s66, %s68
    %p75 = scmp.eq.s32.totalorder %s16, 1
    %p76 = por %p74, %p75
    %p77 = scmp.ne.s32.totalorder %s68, %s69
    %p78 = scmp.eq.s32.totalorder %s16, 0
    %p79 = por %p77, %p78
    %p80 = scmp.ne.s32.totalorder %s68, %s69
    %p81 = scmp.eq.s32.totalorder %s17, 1
    %p82 = por %p80, %p81
    %p84 = scmp.ne.s32.totalorder %s69, %s83
    %p85 = scmp.eq.s32.totalorder %s17, 0
    %p86 = por %p84, %p85
    %s88 = sadd.s32 %s87, 1
    %p91 = scmp.eq.s32.totalorder %s11, 1
    %p92 = scmp.ne.s32.totalorder %s87, %s89
    %p93 = scmp.eq.s32.totalorder %s11, 0
    %p94 = por %p92, %p93
    %p95 = scmp.ne.s32.totalorder %s87, %s89
    %p96 = scmp.eq.s32.totalorder %s16, 1
    %p97 = por %p95, %p96
    %p98 = scmp.ne.s32.totalorder %s89, %s90
    %p99 = scmp.eq.s32.totalorder %s16, 0
    %p100 = por %p98, %p99
    %p101 = scmp.ne.s32.totalorder %s89, %s90
    %p102 = scmp.eq.s32.totalorder %s17, 1
    %p103 = por %p101, %p102
    %p105 = scmp.ne.s32.totalorder %s90, %s104
    %p106 = scmp.eq.s32.totalorder %s17, 0
    %p107 = por %p105, %p106
    %s109 = sadd.s32 %s108, 1
    %p112 = scmp.eq.s32.totalorder %s11, 1
    %p113 = scmp.ne.s32.totalorder %s108, %s110
    %p114 = scmp.eq.s32.totalorder %s11, 0
    %p115 = por %p113, %p114
    %p116 = scmp.ne.s32.totalorder %s108, %s110
    %p117 = scmp.eq.s32.totalorder %s16, 1
    %p118 = por %p116, %p117
    %p119 = scmp.ne.s32.totalorder %s110, %s111
    %p120 = scmp.eq.s32.totalorder %s16, 0
    %p121 = por %p119, %p120
    %p122 = scmp.ne.s32.totalorder %s110, %s111
    %p123 = scmp.eq.s32.totalorder %s17, 1
    %p124 = por %p122, %p123
    %p126 = scmp.ne.s32.totalorder %s111, %s125
    %p127 = scmp.eq.s32.totalorder %s17, 0
    %p128 = por %p126, %p127
    %s129 = ssub.s32 %s11, %s18
    %p130 = scmp.eq.s32.totalorder %s129, 0
    %s132 = sadd.s32 %s131, 1
    %s133 = scalar_select %p130, %s131, %s132
    %p136 = pneg %p130
    %p137 = scmp.eq.s32.totalorder %s11, 1
    %p138 = por %p136, %p137
    %p139 = scmp.ne.s32.totalorder %s131, %s134
    %p140 = scmp.eq.s32.totalorder %s11, 0
    %p141 = por %p139, %p140
    %p142 = scmp.ne.s32.totalorder %s131, %s134
    %p143 = scmp.eq.s32.totalorder %s16, 1
    %p144 = por %p142, %p143
    %p145 = scmp.ne.s32.totalorder %s134, %s135
    %p146 = scmp.eq.s32.totalorder %s16, 0
    %p147 = por %p145, %p146
    %p148 = scmp.ne.s32.totalorder %s134, %s135
    %p149 = scmp.eq.s32.totalorder %s17, 1
    %p150 = por %p148, %p149
    %p152 = scmp.ne.s32.totalorder %s135, %s151
    %p153 = scmp.eq.s32.totalorder %s17, 0
    %p154 = por %p152, %p153
    %p155 = scmp.le.s32.totalorder 1, %s11
    %p156 = scmp.lt.s32.totalorder %s11, 3
    %p157 = pnand %p155, %p156
    %p158 = pneg %p157
    // Predicated region
    $region9: #{net_forward.2} parent=5 // pred_check
      _
    $region10: #{net_forward.2} parent=5 // pred_check_branch
      %160 = sbr.rel (%p157) target = $region12
    $region11: #{net_forward.2} parent=5 // pred_region
      %s161 = ssub.s32 %s11, 1
      // Predicated region
      $region13: #{net_forward.2} parent=11 // pred_check
        %p162 = pneg %p58
      $region14: #{net_forward.2} parent=11 // pred_check_branch
        %164 = sbr.rel (%p162) target = $region16
      $region15: #{net_forward.2} parent=11 // pred_region
        _
      $region16: #{net_forward.2} parent=11 // pred_fallthru
        _
      // Predicated region
      $region17: #{net_forward.2} parent=11 // pred_check
        %p165 = pneg %p79
      $region18: #{net_forward.2} parent=11 // pred_check_branch
        %167 = sbr.rel (%p165) target = $region20
      $region19: #{net_forward.2} parent=11 // pred_region
        _
      $region20: #{net_forward.2} parent=11 // pred_fallthru
        _
      // Predicated region
      $region21: #{net_forward.2} parent=11 // pred_check
        %p168 = pneg %p100
      $region22: #{net_forward.2} parent=11 // pred_check_branch
        %170 = sbr.rel (%p168) target = $region24
      $region23: #{net_forward.2} parent=11 // pred_region
        _
      $region24: #{net_forward.2} parent=11 // pred_fallthru
        _
      // Predicated region
      $region25: #{net_forward.2} parent=11 // pred_check
        %p171 = pneg %p121
      $region26: #{net_forward.2} parent=11 // pred_check_branch
        %173 = sbr.rel (%p171) target = $region28
      $region27: #{net_forward.2} parent=11 // pred_region
        _
      $region28: #{net_forward.2} parent=11 // pred_fallthru
        _
    $region12: #{net_forward.2} parent=5 // pred_fallthru
      _
    %p174 = scmp.lt.s32.totalorder %s11, 2
    // Predicated region
    $region29: #{net_forward.2} parent=5 // pred_check
      %p175 = pneg %p174
    $region30: #{net_forward.2} parent=5 // pred_check_branch
      %177 = sbr.rel (%p175) target = $region32
    $region31: #{net_forward.2} parent=5 // pred_region
      // Predicated region
      $region33: #{net_forward.2} parent=31 // pred_check
        %p178 = pneg %p31
      $region34: #{net_forward.2} parent=31 // pred_check_branch
        %180 = sbr.rel (%p178) target = $region36
      $region35: #{net_forward.2} parent=31 // pred_region
        %s181 = smul.u32 72, %s11
        %p182 = scmp.lt.s32.totalorder %s181, 143
        %s183 = scalar_select %p182, %s181, 143
        %s184 = smul.addr %s183, 8
        %s185 = scalar_lea.vmem %s0, %s184
        %s186 = smul.u32 72, %s11
      $region36: #{net_forward.2} parent=31 // pred_fallthru
        _
    $region32: #{net_forward.2} parent=5 // pred_fallthru
      _
    %p187 = scmp.le.s32.totalorder 1, %s11
    %p188 = scmp.lt.s32.totalorder %s11, 3
    %p189 = pnand %p187, %p188
    %p190 = pneg %p189
    // Predicated region
    $region37: #{net_forward.2} parent=5 // pred_check
      _
    $region38: #{net_forward.2} parent=5 // pred_check_branch
      %192 = sbr.rel (%p189) target = $region40
    $region39: #{net_forward.2} parent=5 // pred_region
      %s193 = ssub.s32 %s11, 1
      %s194 = smul.u32 72, %s16
      %p195 = scmp.lt.s32.totalorder %s194, 143
      %s196 = scalar_select %p195, %s194, 143
      %s197 = smul.addr %s196, 8
      %s198 = scalar_lea.vmem %s0, %s197
      %p199 = pneg %p37
      %p200 = pneg %p34
      %p201 = pneg %p58
      %p202 = pneg %p55
      %p203 = pneg %p79
      %p204 = pneg %p76
      %p205 = pneg %p100
      %p206 = pneg %p97
      %p207 = pneg %p121
      %p208 = pneg %p118
      %p209 = pneg %p147
      %p210 = pneg %p144
      %s211 = smul.u32 18, %s16
      %p212 = scmp.lt.s32.totalorder %s211, 35
      %s213 = scalar_select %p212, %s211, 35
      %s214 = smul.addr %s213, 8
      %s215 = scalar_lea.vmem %s5, %s214
      %s216 = smul.u32 72, %s16
      %p217 = scmp.lt.s32.totalorder %s216, 143
      %s218 = scalar_select %p217, %s216, 143
      %s219 = smul.addr %s218, 8
      %s220 = scalar_lea.vmem %s0, %s219
      %s221 = smul.u32 72, %s16
      %s222 = smul.u32 18, %s16
      %p223 = scmp.lt.s32.totalorder %s222, 35
      %s224 = scalar_select %p223, %s222, 35
      %s225 = smul.addr %s224, 8
      %s226 = scalar_lea.vmem %s5, %s225
      %s227 = smul.u32 18, %s16
      %v228 = vld [vmem:[%s220] sm:$0xff]
      %v229 = vld [vmem:[%s220 + $0x8] sm:$0xff]
      %v230 = vld [vmem:[%s220 + $0x10] sm:$0xff]
      %v231 = vld [vmem:[%s220 + $0x18] sm:$0xff]
      %v232 = vld [vmem:[%s220 + $0x20] sm:$0xff]
      %v233 = vld [vmem:[%s220 + $0x28] sm:$0xff]
      %v234 = vld [vmem:[%s220 + $0x30] sm:$0xff]
      %v235 = vld [vmem:[%s220 + $0x38] sm:$0xff]
      %v236 = vld [vmem:[%s220 + $0x40] sm:$0xff]
      %v237 = vld [vmem:[%s220 + $0x48] sm:$0xff]
      %v238 = vld [vmem:[%s220 + $0x50] sm:$0xff]
      %v239 = vld [vmem:[%s220 + $0x58] sm:$0xff]
      %v240 = vld [vmem:[%s220 + $0x60] sm:$0xff]
      %v241 = vld [vmem:[%s220 + $0x68] sm:$0xff]
      %v242 = vld [vmem:[%s220 + $0x70] sm:$0xff]
      %v243 = vld [vmem:[%s220 + $0x78] sm:$0xff]
      %v244 = vld [vmem:[%s220 + $0x80] sm:$0xff]
      %v245 = vld [vmem:[%s220 + $0x88] sm:$0xff]
      %v246 = vld [vmem:[%s220 + $0x90] sm:$0xff]
      %v247 = vld [vmem:[%s220 + $0x98] sm:$0xff]
      %v248 = vld [vmem:[%s220 + $0xa0] sm:$0xff]
      %v249 = vld [vmem:[%s220 + $0xa8] sm:$0xff]
      %v250 = vld [vmem:[%s220 + $0xb0] sm:$0xff]
      %v251 = vld [vmem:[%s220 + $0xb8] sm:$0xff]
      %v252 = vld [vmem:[%s220 + $0xc0] sm:$0xff]
      %v253 = vld [vmem:[%s220 + $0xc8] sm:$0xff]
      %v254 = vld [vmem:[%s220 + $0xd0] sm:$0xff]
      %v255 = vld [vmem:[%s220 + $0xd8] sm:$0xff]
      %v256 = vld [vmem:[%s220 + $0xe0] sm:$0xff]
      %v257 = vld [vmem:[%s220 + $0xe8] sm:$0xff]
      %v258 = vld [vmem:[%s220 + $0xf0] sm:$0xff]
      %v259 = vld [vmem:[%s220 + $0xf8] sm:$0xff]
      %v260 = vld [vmem:[%s220 + $0x100] sm:$0xff]
      %v261 = vld [vmem:[%s220 + $0x108] sm:$0xff]
      %v262 = vld [vmem:[%s220 + $0x110] sm:$0xff]
      %v263 = vld [vmem:[%s220 + $0x118] sm:$0xff]
      %v264 = vld [vmem:[%s220 + $0x120] sm:$0xff]
      %v265 = vld [vmem:[%s220 + $0x128] sm:$0xff]
      %v266 = vld [vmem:[%s220 + $0x130] sm:$0xff]
      %v267 = vld [vmem:[%s220 + $0x138] sm:$0xff]
      %v268 = vld [vmem:[%s220 + $0x140] sm:$0xff]
      %v269 = vld [vmem:[%s220 + $0x148] sm:$0xff]
      %v270 = vld [vmem:[%s220 + $0x150] sm:$0xff]
      %v271 = vld [vmem:[%s220 + $0x158] sm:$0xff]
      %v272 = vld [vmem:[%s220 + $0x160] sm:$0xff]
      %v273 = vld [vmem:[%s220 + $0x168] sm:$0xff]
      %v274 = vld [vmem:[%s220 + $0x170] sm:$0xff]
      %v275 = vld [vmem:[%s220 + $0x178] sm:$0xff]
      %v276 = vld [vmem:[%s220 + $0x180] sm:$0xff]
      %v277 = vld [vmem:[%s220 + $0x188] sm:$0xff]
      %v278 = vld [vmem:[%s220 + $0x190] sm:$0xff]
      %v279 = vld [vmem:[%s220 + $0x198] sm:$0xff]
      %v280 = vld [vmem:[%s220 + $0x1a0] sm:$0xff]
      %v281 = vld [vmem:[%s220 + $0x1a8] sm:$0xff]
      %v282 = vld [vmem:[%s220 + $0x1b0] sm:$0xff]
      %v283 = vld [vmem:[%s220 + $0x1b8] sm:$0xff]
      %v284 = vld [vmem:[%s220 + $0x1c0] sm:$0xff]
      %v285 = vld [vmem:[%s220 + $0x1c8] sm:$0xff]
      %v286 = vld [vmem:[%s220 + $0x1d0] sm:$0xff]
      %v287 = vld [vmem:[%s220 + $0x1d8] sm:$0xff]
      %v288 = vld [vmem:[%s220 + $0x1e0] sm:$0xff]
      %v289 = vld [vmem:[%s220 + $0x1e8] sm:$0xff]
      %v290 = vld [vmem:[%s220 + $0x1f0] sm:$0xff]
      %v291 = vld [vmem:[%s220 + $0x1f8] sm:$0xff]
      %v292 = vld [vmem:[%s220 + $0x200] sm:$0xff]
      %v293 = vld [vmem:[%s220 + $0x208] sm:$0xff]
      %v294 = vld [vmem:[%s220 + $0x210] sm:$0xff]
      %v295 = vld [vmem:[%s220 + $0x218] sm:$0xff]
      %v296 = vld [vmem:[%s220 + $0x220] sm:$0xff]
      %v297 = vld [vmem:[%s220 + $0x228] sm:$0xff]
      %v298 = vld [vmem:[%s220 + $0x230] sm:$0xff]
      %v299 = vld [vmem:[%s220 + $0x238] sm:$0xff]
      %v300 = vld [vmem:[%s1] sm:$0xff]
      %v301 = vld [vmem:[%s1 + $0x8] sm:$0xff]
      %v302 = vld [vmem:[%s1 + $0x10] sm:$0xff]
      %v303 = vld [vmem:[%s1 + $0x18] sm:$0xff]
      %v304 = vld [vmem:[%s1 + $0x20] sm:$0xff]
      %v305 = vld [vmem:[%s1 + $0x28] sm:$0xff]
      %v306 = vld [vmem:[%s1 + $0x30] sm:$0xff]
      %v307 = vld [vmem:[%s1 + $0x38] sm:$0xff]
      %v308 = vld [vmem:[%s1 + $0x40] sm:$0xff]
      %v309 = vld [vmem:[%s1 + $0x48] sm:$0x1]
      %v310 = vld [vmem:[%s1 + $0x50] sm:$0x1]
      %v311 = vld [vmem:[%s1 + $0x58] sm:$0x1]
      %v312 = vld [vmem:[%s2] sm:$0x7]
      %v314 = vperm.slane %v312, 0
      %v315 = vperm.slane %v312, 1
      %v316 = vperm.slane %v312, 2
      %vm320 = vcmask 203776
      %v322 = vsel %vm320, %v228, 0
      %v325 = vsel %vm320, %v229, 0
      %v328 = vsel %vm320, %v230, 0
      %v331 = vsel %vm320, %v231, 0
      %v334 = vsel %vm320, %v232, 0
      %v337 = vsel %vm320, %v233, 0
      %v340 = vsel %vm320, %v234, 0
      %v343 = vsel %vm320, %v235, 0
      %v346 = vsel %vm320, %v236, 0
      %v349 = vsel %vm320, %v237, 0
      %v352 = vsel %vm320, %v238, 0
      %v355 = vsel %vm320, %v239, 0
      %v358 = vsel %vm320, %v240, 0
      %v361 = vsel %vm320, %v241, 0
      %v364 = vsel %vm320, %v242, 0
      %v367 = vsel %vm320, %v243, 0
      %v370 = vsel %vm320, %v244, 0
      %v373 = vsel %vm320, %v245, 0
      %v376 = vsel %vm320, %v246, 0
      %v379 = vsel %vm320, %v247, 0
      %v382 = vsel %vm320, %v248, 0
      %v385 = vsel %vm320, %v249, 0
      %v388 = vsel %vm320, %v250, 0
      %v391 = vsel %vm320, %v251, 0
      %v394 = vsel %vm320, %v252, 0
      %v397 = vsel %vm320, %v253, 0
      %v400 = vsel %vm320, %v254, 0
      %v403 = vsel %vm320, %v255, 0
      %v406 = vsel %vm320, %v256, 0
      %v409 = vsel %vm320, %v257, 0
      %v412 = vsel %vm320, %v258, 0
      %v415 = vsel %vm320, %v259, 0
      %v418 = vsel %vm320, %v260, 0
      %v421 = vsel %vm320, %v261, 0
      %v424 = vsel %vm320, %v262, 0
      %v427 = vsel %vm320, %v263, 0
      %v430 = vsel %vm320, %v264, 0
      %v433 = vsel %vm320, %v265, 0
      %v436 = vsel %vm320, %v266, 0
      %v439 = vsel %vm320, %v267, 0
      %v442 = vsel %vm320, %v268, 0
      %v445 = vsel %vm320, %v269, 0
      %v448 = vsel %vm320, %v270, 0
      %v451 = vsel %vm320, %v271, 0
      %v454 = vsel %vm320, %v272, 0
      %v457 = vsel %vm320, %v273, 0
      %v460 = vsel %vm320, %v274, 0
      %v463 = vsel %vm320, %v275, 0
      %v466 = vsel %vm320, %v276, 0
      %v469 = vsel %vm320, %v277, 0
      %v472 = vsel %vm320, %v278, 0
      %v475 = vsel %vm320, %v279, 0
      %v478 = vsel %vm320, %v280, 0
      %v481 = vsel %vm320, %v281, 0
      %v484 = vsel %vm320, %v282, 0
      %v487 = vsel %vm320, %v283, 0
      %v490 = vsel %vm320, %v284, 0
      %v493 = vsel %vm320, %v285, 0
      %v496 = vsel %vm320, %v286, 0
      %v499 = vsel %vm320, %v287, 0
      %v502 = vsel %vm320, %v288, 0
      %v505 = vsel %vm320, %v289, 0
      %v508 = vsel %vm320, %v290, 0
      %v511 = vsel %vm320, %v291, 0
      %v514 = vsel %vm320, %v292, 0
      %v517 = vsel %vm320, %v293, 0
      %v520 = vsel %vm320, %v294, 0
      %v523 = vsel %vm320, %v295, 0
      %v526 = vsel %vm320, %v296, 0
      %v529 = vsel %vm320, %v297, 0
      %v532 = vsel %vm320, %v298, 0
      %v535 = vsel %vm320, %v299, 0
      %vm537 = vcmask 1040384
      %v539 = vsel %vm537, %v309, 0
      %v542 = vsel %vm537, %v310, 0
      %v545 = vsel %vm537, %v311, 0
      %547 = vmatpush.msra.mxu0 0.0
      %548 = vmatpush.msra.mxu0 0.0
      %549 = vmatpush.msra.mxu0 0.0
      %550 = vmatpush.msra.mxu0 0.0
      %551 = vmatpush.msra.mxu0 0.0
      %552 = vmatpush.msra.mxu0 0.0
      %553 = vmatpush.msra.mxu0 0.0
      %554 = vmatpush.msra.mxu0 0.0
      %555 = vmatpush.msra.mxu0 0.0
      %556 = vmatpush.msra.mxu0 0.0
      %557 = vmatpush.msra.mxu0 0.0
      %558 = vmatpush.msra.mxu0 0.0
      %559 = vmatpush.msra.mxu0 %v539
      %560 = vmatpush.msra.mxu0 %v306
      %561 = vmatpush.msra.mxu0 %v303
      %562 = vmatpush.msra.mxu0 %v300
      %563 = vmatmul.f32.gmra.mxu0 %v322
      %v564 = vpop.f32.mrf.mxu0
      %v565 = vadd.f32 %v314, %v564
      %566 = vmatmul.f32.gmra.mxu0 %v325
      %v567 = vpop.f32.mrf.mxu0
      %v568 = vadd.f32 %v314, %v567
      %569 = vmatmul.f32.gmra.mxu0 %v328
      %v570 = vpop.f32.mrf.mxu0
      %v571 = vadd.f32 %v314, %v570
      %572 = vmatmul.f32.gmra.mxu0 %v331
      %v573 = vpop.f32.mrf.mxu0
      %v574 = vadd.f32 %v314, %v573
      %575 = vmatmul.f32.gmra.mxu0 %v334
      %v576 = vpop.f32.mrf.mxu0
      %v577 = vadd.f32 %v314, %v576
      %578 = vmatmul.f32.gmra.mxu0 %v337
      %v579 = vpop.f32.mrf.mxu0
      %v580 = vadd.f32 %v314, %v579
      %581 = vmatmul.f32.gmra.mxu0 %v340
      %v582 = vpop.f32.mrf.mxu0
      %v583 = vadd.f32 %v314, %v582
      %584 = vmatmul.f32.gmra.mxu0 %v343
      %v585 = vpop.f32.mrf.mxu0
      %v586 = vadd.f32 %v314, %v585
      %587 = vmatmul.f32.gmra.mxu0 %v346
      %v588 = vpop.f32.mrf.mxu0
      %v589 = vadd.f32 %v314, %v588
      %590 = vmatmul.f32.gmra.mxu0 %v349
      %v591 = vpop.f32.mrf.mxu0
      %v592 = vadd.f32 %v314, %v591
      %593 = vmatmul.f32.gmra.mxu0 %v352
      %v594 = vpop.f32.mrf.mxu0
      %v595 = vadd.f32 %v314, %v594
      %596 = vmatmul.f32.gmra.mxu0 %v355
      %v597 = vpop.f32.mrf.mxu0
      %v598 = vadd.f32 %v314, %v597
      %599 = vmatmul.f32.gmra.mxu0 %v358
      %v600 = vpop.f32.mrf.mxu0
      %v601 = vadd.f32 %v314, %v600
      %602 = vmatmul.f32.gmra.mxu0 %v361
      %v603 = vpop.f32.mrf.mxu0
      %v604 = vadd.f32 %v314, %v603
      %605 = vmatmul.f32.gmra.mxu0 %v364
      %v606 = vpop.f32.mrf.mxu0
      %v607 = vadd.f32 %v314, %v606
      %608 = vmatmul.f32.gmra.mxu0 %v367
      %v609 = vpop.f32.mrf.mxu0
      %v610 = vadd.f32 %v314, %v609
      %611 = vmatmul.f32.gmra.mxu0 %v370
      %v612 = vpop.f32.mrf.mxu0
      %v613 = vadd.f32 %v314, %v612
      %614 = vmatmul.f32.gmra.mxu0 %v373
      %v615 = vpop.f32.mrf.mxu0
      %v616 = vadd.f32 %v314, %v615
      %617 = vmatmul.f32.gmra.mxu0 %v376
      %v618 = vpop.f32.mrf.mxu0
      %v619 = vadd.f32 %v314, %v618
      %620 = vmatmul.f32.gmra.mxu0 %v379
      %v621 = vpop.f32.mrf.mxu0
      %v622 = vadd.f32 %v314, %v621
      %623 = vmatmul.f32.gmra.mxu0 %v382
      %v624 = vpop.f32.mrf.mxu0
      %v625 = vadd.f32 %v314, %v624
      %626 = vmatmul.f32.gmra.mxu0 %v385
      %v627 = vpop.f32.mrf.mxu0
      %v628 = vadd.f32 %v314, %v627
      %629 = vmatmul.f32.gmra.mxu0 %v388
      %v630 = vpop.f32.mrf.mxu0
      %v631 = vadd.f32 %v314, %v630
      %632 = vmatmul.f32.gmra.mxu0 %v391
      %v633 = vpop.f32.mrf.mxu0
      %v634 = vadd.f32 %v314, %v633
      %635 = vmatmul.f32.gmra.mxu0 %v394
      %v636 = vpop.f32.mrf.mxu0
      %v637 = vadd.f32 %v314, %v636
      %638 = vmatmul.f32.gmra.mxu0 %v397
      %v639 = vpop.f32.mrf.mxu0
      %v640 = vadd.f32 %v314, %v639
      %641 = vmatmul.f32.gmra.mxu0 %v400
      %v642 = vpop.f32.mrf.mxu0
      %v643 = vadd.f32 %v314, %v642
      %644 = vmatmul.f32.gmra.mxu0 %v403
      %v645 = vpop.f32.mrf.mxu0
      %v646 = vadd.f32 %v314, %v645
      %647 = vmatmul.f32.gmra.mxu0 %v406
      %v648 = vpop.f32.mrf.mxu0
      %v649 = vadd.f32 %v314, %v648
      %650 = vmatmul.f32.gmra.mxu0 %v409
      %v651 = vpop.f32.mrf.mxu0
      %v652 = vadd.f32 %v314, %v651
      %653 = vmatmul.f32.gmra.mxu0 %v412
      %v654 = vpop.f32.mrf.mxu0
      %v655 = vadd.f32 %v314, %v654
      %656 = vmatmul.f32.gmra.mxu0 %v415
      %v657 = vpop.f32.mrf.mxu0
      %v658 = vadd.f32 %v314, %v657
      %659 = vmatmul.f32.gmra.mxu0 %v418
      %v660 = vpop.f32.mrf.mxu0
      %v661 = vadd.f32 %v314, %v660
      %662 = vmatmul.f32.gmra.mxu0 %v421
      %v663 = vpop.f32.mrf.mxu0
      %v664 = vadd.f32 %v314, %v663
      %665 = vmatmul.f32.gmra.mxu0 %v424
      %v666 = vpop.f32.mrf.mxu0
      %v667 = vadd.f32 %v314, %v666
      %668 = vmatmul.f32.gmra.mxu0 %v427
      %v669 = vpop.f32.mrf.mxu0
      %v670 = vadd.f32 %v314, %v669
      %671 = vmatmul.f32.gmra.mxu0 %v430
      %v672 = vpop.f32.mrf.mxu0
      %v673 = vadd.f32 %v314, %v672
      %674 = vmatmul.f32.gmra.mxu0 %v433
      %v675 = vpop.f32.mrf.mxu0
      %v676 = vadd.f32 %v314, %v675
      %677 = vmatmul.f32.gmra.mxu0 %v436
      %v678 = vpop.f32.mrf.mxu0
      %v679 = vadd.f32 %v314, %v678
      %680 = vmatmul.f32.gmra.mxu0 %v439
      %v681 = vpop.f32.mrf.mxu0
      %v682 = vadd.f32 %v314, %v681
      %683 = vmatmul.f32.gmra.mxu0 %v442
      %v684 = vpop.f32.mrf.mxu0
      %v685 = vadd.f32 %v314, %v684
      %686 = vmatmul.f32.gmra.mxu0 %v445
      %v687 = vpop.f32.mrf.mxu0
      %v688 = vadd.f32 %v314, %v687
      %689 = vmatmul.f32.gmra.mxu0 %v448
      %v690 = vpop.f32.mrf.mxu0
      %v691 = vadd.f32 %v314, %v690
      %692 = vmatmul.f32.gmra.mxu0 %v451
      %v693 = vpop.f32.mrf.mxu0
      %v694 = vadd.f32 %v314, %v693
      %695 = vmatmul.f32.gmra.mxu0 %v454
      %v696 = vpop.f32.mrf.mxu0
      %v697 = vadd.f32 %v314, %v696
      %698 = vmatmul.f32.gmra.mxu0 %v457
      %v699 = vpop.f32.mrf.mxu0
      %v700 = vadd.f32 %v314, %v699
      %701 = vmatmul.f32.gmra.mxu0 %v460
      %v702 = vpop.f32.mrf.mxu0
      %v703 = vadd.f32 %v314, %v702
      %704 = vmatmul.f32.gmra.mxu0 %v463
      %v705 = vpop.f32.mrf.mxu0
      %v706 = vadd.f32 %v314, %v705
      %707 = vmatmul.f32.gmra.mxu0 %v466
      %v708 = vpop.f32.mrf.mxu0
      %v709 = vadd.f32 %v314, %v708
      %710 = vmatmul.f32.gmra.mxu0 %v469
      %v711 = vpop.f32.mrf.mxu0
      %v712 = vadd.f32 %v314, %v711
      %713 = vmatmul.f32.gmra.mxu0 %v472
      %v714 = vpop.f32.mrf.mxu0
      %v715 = vadd.f32 %v314, %v714
      %716 = vmatmul.f32.gmra.mxu0 %v475
      %v717 = vpop.f32.mrf.mxu0
      %v718 = vadd.f32 %v314, %v717
      %719 = vmatmul.f32.gmra.mxu0 %v478
      %v720 = vpop.f32.mrf.mxu0
      %v721 = vadd.f32 %v314, %v720
      %722 = vmatmul.f32.gmra.mxu0 %v481
      %v723 = vpop.f32.mrf.mxu0
      %v724 = vadd.f32 %v314, %v723
      %725 = vmatmul.f32.gmra.mxu0 %v484
      %v726 = vpop.f32.mrf.mxu0
      %v727 = vadd.f32 %v314, %v726
      %728 = vmatmul.f32.gmra.mxu0 %v487
      %v729 = vpop.f32.mrf.mxu0
      %v730 = vadd.f32 %v314, %v729
      %731 = vmatmul.f32.gmra.mxu0 %v490
      %v732 = vpop.f32.mrf.mxu0
      %v733 = vadd.f32 %v314, %v732
      %734 = vmatmul.f32.gmra.mxu0 %v493
      %v735 = vpop.f32.mrf.mxu0
      %v736 = vadd.f32 %v314, %v735
      %737 = vmatmul.f32.gmra.mxu0 %v496
      %v738 = vpop.f32.mrf.mxu0
      %v739 = vadd.f32 %v314, %v738
      %740 = vmatmul.f32.gmra.mxu0 %v499
      %v741 = vpop.f32.mrf.mxu0
      %v742 = vadd.f32 %v314, %v741
      %743 = vmatmul.f32.gmra.mxu0 %v502
      %v744 = vpop.f32.mrf.mxu0
      %v745 = vadd.f32 %v314, %v744
      %746 = vmatmul.f32.gmra.mxu0 %v505
      %v747 = vpop.f32.mrf.mxu0
      %v748 = vadd.f32 %v314, %v747
      %749 = vmatmul.f32.gmra.mxu0 %v508
      %v750 = vpop.f32.mrf.mxu0
      %v751 = vadd.f32 %v314, %v750
      %752 = vmatmul.f32.gmra.mxu0 %v511
      %v753 = vpop.f32.mrf.mxu0
      %v754 = vadd.f32 %v314, %v753
      %755 = vmatmul.f32.gmra.mxu0 %v514
      %v756 = vpop.f32.mrf.mxu0
      %v757 = vadd.f32 %v314, %v756
      %758 = vmatmul.f32.gmra.mxu0 %v517
      %v759 = vpop.f32.mrf.mxu0
      %v760 = vadd.f32 %v314, %v759
      %761 = vmatmul.f32.gmra.mxu0 %v520
      %v762 = vpop.f32.mrf.mxu0
      %v763 = vadd.f32 %v314, %v762
      %764 = vmatmul.f32.gmra.mxu0 %v523
      %v765 = vpop.f32.mrf.mxu0
      %v766 = vadd.f32 %v314, %v765
      %767 = vmatmul.f32.gmra.mxu0 %v526
      %v768 = vpop.f32.mrf.mxu0
      %v769 = vadd.f32 %v314, %v768
      %770 = vmatmul.f32.gmra.mxu0 %v529
      %v771 = vpop.f32.mrf.mxu0
      %v772 = vadd.f32 %v314, %v771
      %773 = vmatmul.f32.gmra.mxu0 %v532
      %v774 = vpop.f32.mrf.mxu0
      %v775 = vadd.f32 %v314, %v774
      %776 = vmatmul.f32.gmra.mxu0 %v535
      %v777 = vpop.f32.mrf.mxu0
      %v778 = vadd.f32 %v314, %v777
      %779 = vdwg.mxu0
      %780 = vmatpush.msra.mxu0 0.0
      %781 = vmatpush.msra.mxu0 0.0
      %782 = vmatpush.msra.mxu0 0.0
      %783 = vmatpush.msra.mxu0 0.0
      %784 = vmatpush.msra.mxu0 0.0
      %785 = vmatpush.msra.mxu0 0.0
      %786 = vmatpush.msra.mxu0 0.0
      %787 = vmatpush.msra.mxu0 0.0
      %788 = vmatpush.msra.mxu0 0.0
      %789 = vmatpush.msra.mxu0 0.0
      %790 = vmatpush.msra.mxu0 0.0
      %791 = vmatpush.msra.mxu0 0.0
      %792 = vmatpush.msra.mxu0 %v542
      %793 = vmatpush.msra.mxu0 %v307
      %794 = vmatpush.msra.mxu0 %v304
      %795 = vmatpush.msra.mxu0 %v301
      %796 = vmatmul.f32.gmra.mxu0 %v322
      %v797 = vpop.f32.mrf.mxu0
      %v798 = vadd.f32 %v315, %v797
      %799 = vmatmul.f32.gmra.mxu0 %v325
      %v800 = vpop.f32.mrf.mxu0
      %v801 = vadd.f32 %v315, %v800
      %802 = vmatmul.f32.gmra.mxu0 %v328
      %v803 = vpop.f32.mrf.mxu0
      %v804 = vadd.f32 %v315, %v803
      %805 = vmatmul.f32.gmra.mxu0 %v331
      %v806 = vpop.f32.mrf.mxu0
      %v807 = vadd.f32 %v315, %v806
      %808 = vmatmul.f32.gmra.mxu0 %v334
      %v809 = vpop.f32.mrf.mxu0
      %v810 = vadd.f32 %v315, %v809
      %811 = vmatmul.f32.gmra.mxu0 %v337
      %v812 = vpop.f32.mrf.mxu0
      %v813 = vadd.f32 %v315, %v812
      %814 = vmatmul.f32.gmra.mxu0 %v340
      %v815 = vpop.f32.mrf.mxu0
      %v816 = vadd.f32 %v315, %v815
      %817 = vmatmul.f32.gmra.mxu0 %v343
      %v818 = vpop.f32.mrf.mxu0
      %v819 = vadd.f32 %v315, %v818
      %820 = vmatmul.f32.gmra.mxu0 %v346
      %v821 = vpop.f32.mrf.mxu0
      %v822 = vadd.f32 %v315, %v821
      %823 = vmatmul.f32.gmra.mxu0 %v349
      %v824 = vpop.f32.mrf.mxu0
      %v825 = vadd.f32 %v315, %v824
      %826 = vmatmul.f32.gmra.mxu0 %v352
      %v827 = vpop.f32.mrf.mxu0
      %v828 = vadd.f32 %v315, %v827
      %829 = vmatmul.f32.gmra.mxu0 %v355
      %v830 = vpop.f32.mrf.mxu0
      %v831 = vadd.f32 %v315, %v830
      %832 = vmatmul.f32.gmra.mxu0 %v358
      %v833 = vpop.f32.mrf.mxu0
      %v834 = vadd.f32 %v315, %v833
      %835 = vmatmul.f32.gmra.mxu0 %v361
      %v836 = vpop.f32.mrf.mxu0
      %v837 = vadd.f32 %v315, %v836
      %838 = vmatmul.f32.gmra.mxu0 %v364
      %v839 = vpop.f32.mrf.mxu0
      %v840 = vadd.f32 %v315, %v839
      %841 = vmatmul.f32.gmra.mxu0 %v367
      %v842 = vpop.f32.mrf.mxu0
      %v843 = vadd.f32 %v315, %v842
      %844 = vmatmul.f32.gmra.mxu0 %v370
      %v845 = vpop.f32.mrf.mxu0
      %v846 = vadd.f32 %v315, %v845
      %847 = vmatmul.f32.gmra.mxu0 %v373
      %v848 = vpop.f32.mrf.mxu0
      %v849 = vadd.f32 %v315, %v848
      %850 = vmatmul.f32.gmra.mxu0 %v376
      %v851 = vpop.f32.mrf.mxu0
      %v852 = vadd.f32 %v315, %v851
      %853 = vmatmul.f32.gmra.mxu0 %v379
      %v854 = vpop.f32.mrf.mxu0
      %v855 = vadd.f32 %v315, %v854
      %856 = vmatmul.f32.gmra.mxu0 %v382
      %v857 = vpop.f32.mrf.mxu0
      %v858 = vadd.f32 %v315, %v857
      %859 = vmatmul.f32.gmra.mxu0 %v385
      %v860 = vpop.f32.mrf.mxu0
      %v861 = vadd.f32 %v315, %v860
      %862 = vmatmul.f32.gmra.mxu0 %v388
      %v863 = vpop.f32.mrf.mxu0
      %v864 = vadd.f32 %v315, %v863
      %865 = vmatmul.f32.gmra.mxu0 %v391
      %v866 = vpop.f32.mrf.mxu0
      %v867 = vadd.f32 %v315, %v866
      %868 = vmatmul.f32.gmra.mxu0 %v394
      %v869 = vpop.f32.mrf.mxu0
      %v870 = vadd.f32 %v315, %v869
      %871 = vmatmul.f32.gmra.mxu0 %v397
      %v872 = vpop.f32.mrf.mxu0
      %v873 = vadd.f32 %v315, %v872
      %874 = vmatmul.f32.gmra.mxu0 %v400
      %v875 = vpop.f32.mrf.mxu0
      %v876 = vadd.f32 %v315, %v875
      %877 = vmatmul.f32.gmra.mxu0 %v403
      %v878 = vpop.f32.mrf.mxu0
      %v879 = vadd.f32 %v315, %v878
      %880 = vmatmul.f32.gmra.mxu0 %v406
      %v881 = vpop.f32.mrf.mxu0
      %v882 = vadd.f32 %v315, %v881
      %883 = vmatmul.f32.gmra.mxu0 %v409
      %v884 = vpop.f32.mrf.mxu0
      %v885 = vadd.f32 %v315, %v884
      %886 = vmatmul.f32.gmra.mxu0 %v412
      %v887 = vpop.f32.mrf.mxu0
      %v888 = vadd.f32 %v315, %v887
      %889 = vmatmul.f32.gmra.mxu0 %v415
      %v890 = vpop.f32.mrf.mxu0
      %v891 = vadd.f32 %v315, %v890
      %892 = vmatmul.f32.gmra.mxu0 %v418
      %v893 = vpop.f32.mrf.mxu0
      %v894 = vadd.f32 %v315, %v893
      %895 = vmatmul.f32.gmra.mxu0 %v421
      %v896 = vpop.f32.mrf.mxu0
      %v897 = vadd.f32 %v315, %v896
      %898 = vmatmul.f32.gmra.mxu0 %v424
      %v899 = vpop.f32.mrf.mxu0
      %v900 = vadd.f32 %v315, %v899
      %901 = vmatmul.f32.gmra.mxu0 %v427
      %v902 = vpop.f32.mrf.mxu0
      %v903 = vadd.f32 %v315, %v902
      %904 = vmatmul.f32.gmra.mxu0 %v430
      %v905 = vpop.f32.mrf.mxu0
      %v906 = vadd.f32 %v315, %v905
      %907 = vmatmul.f32.gmra.mxu0 %v433
      %v908 = vpop.f32.mrf.mxu0
      %v909 = vadd.f32 %v315, %v908
      %910 = vmatmul.f32.gmra.mxu0 %v436
      %v911 = vpop.f32.mrf.mxu0
      %v912 = vadd.f32 %v315, %v911
      %913 = vmatmul.f32.gmra.mxu0 %v439
      %v914 = vpop.f32.mrf.mxu0
      %v915 = vadd.f32 %v315, %v914
      %916 = vmatmul.f32.gmra.mxu0 %v442
      %v917 = vpop.f32.mrf.mxu0
      %v918 = vadd.f32 %v315, %v917
      %919 = vmatmul.f32.gmra.mxu0 %v445
      %v920 = vpop.f32.mrf.mxu0
      %v921 = vadd.f32 %v315, %v920
      %922 = vmatmul.f32.gmra.mxu0 %v448
      %v923 = vpop.f32.mrf.mxu0
      %v924 = vadd.f32 %v315, %v923
      %925 = vmatmul.f32.gmra.mxu0 %v451
      %v926 = vpop.f32.mrf.mxu0
      %v927 = vadd.f32 %v315, %v926
      %928 = vmatmul.f32.gmra.mxu0 %v454
      %v929 = vpop.f32.mrf.mxu0
      %v930 = vadd.f32 %v315, %v929
      %931 = vmatmul.f32.gmra.mxu0 %v457
      %v932 = vpop.f32.mrf.mxu0
      %v933 = vadd.f32 %v315, %v932
      %934 = vmatmul.f32.gmra.mxu0 %v460
      %v935 = vpop.f32.mrf.mxu0
      %v936 = vadd.f32 %v315, %v935
      %937 = vmatmul.f32.gmra.mxu0 %v463
      %v938 = vpop.f32.mrf.mxu0
      %v939 = vadd.f32 %v315, %v938
      %940 = vmatmul.f32.gmra.mxu0 %v466
      %v941 = vpop.f32.mrf.mxu0
      %v942 = vadd.f32 %v315, %v941
      %943 = vmatmul.f32.gmra.mxu0 %v469
      %v944 = vpop.f32.mrf.mxu0
      %v945 = vadd.f32 %v315, %v944
      %946 = vmatmul.f32.gmra.mxu0 %v472
      %v947 = vpop.f32.mrf.mxu0
      %v948 = vadd.f32 %v315, %v947
      %949 = vmatmul.f32.gmra.mxu0 %v475
      %v950 = vpop.f32.mrf.mxu0
      %v951 = vadd.f32 %v315, %v950
      %952 = vmatmul.f32.gmra.mxu0 %v478
      %v953 = vpop.f32.mrf.mxu0
      %v954 = vadd.f32 %v315, %v953
      %955 = vmatmul.f32.gmra.mxu0 %v481
      %v956 = vpop.f32.mrf.mxu0
      %v957 = vadd.f32 %v315, %v956
      %958 = vmatmul.f32.gmra.mxu0 %v484
      %v959 = vpop.f32.mrf.mxu0
      %v960 = vadd.f32 %v315, %v959
      %961 = vmatmul.f32.gmra.mxu0 %v487
      %v962 = vpop.f32.mrf.mxu0
      %v963 = vadd.f32 %v315, %v962
      %964 = vmatmul.f32.gmra.mxu0 %v490
      %v965 = vpop.f32.mrf.mxu0
      %v966 = vadd.f32 %v315, %v965
      %967 = vmatmul.f32.gmra.mxu0 %v493
      %v968 = vpop.f32.mrf.mxu0
      %v969 = vadd.f32 %v315, %v968
      %970 = vmatmul.f32.gmra.mxu0 %v496
      %v971 = vpop.f32.mrf.mxu0
      %v972 = vadd.f32 %v315, %v971
      %973 = vmatmul.f32.gmra.mxu0 %v499
      %v974 = vpop.f32.mrf.mxu0
      %v975 = vadd.f32 %v315, %v974
      %976 = vmatmul.f32.gmra.mxu0 %v502
      %v977 = vpop.f32.mrf.mxu0
      %v978 = vadd.f32 %v315, %v977
      %979 = vmatmul.f32.gmra.mxu0 %v505
      %v980 = vpop.f32.mrf.mxu0
      %v981 = vadd.f32 %v315, %v980
      %982 = vmatmul.f32.gmra.mxu0 %v508
      %v983 = vpop.f32.mrf.mxu0
      %v984 = vadd.f32 %v315, %v983
      %985 = vmatmul.f32.gmra.mxu0 %v511
      %v986 = vpop.f32.mrf.mxu0
      %v987 = vadd.f32 %v315, %v986
      %988 = vmatmul.f32.gmra.mxu0 %v514
      %v989 = vpop.f32.mrf.mxu0
      %v990 = vadd.f32 %v315, %v989
      %991 = vmatmul.f32.gmra.mxu0 %v517
      %v992 = vpop.f32.mrf.mxu0
      %v993 = vadd.f32 %v315, %v992
      %994 = vmatmul.f32.gmra.mxu0 %v520
      %v995 = vpop.f32.mrf.mxu0
      %v996 = vadd.f32 %v315, %v995
      %997 = vmatmul.f32.gmra.mxu0 %v523
      %v998 = vpop.f32.mrf.mxu0
      %v999 = vadd.f32 %v315, %v998
      %1000 = vmatmul.f32.gmra.mxu0 %v526
      %v1001 = vpop.f32.mrf.mxu0
      %v1002 = vadd.f32 %v315, %v1001
      %1003 = vmatmul.f32.gmra.mxu0 %v529
      %v1004 = vpop.f32.mrf.mxu0
      %v1005 = vadd.f32 %v315, %v1004
      %1006 = vmatmul.f32.gmra.mxu0 %v532
      %v1007 = vpop.f32.mrf.mxu0
      %v1008 = vadd.f32 %v315, %v1007
      %1009 = vmatmul.f32.gmra.mxu0 %v535
      %v1010 = vpop.f32.mrf.mxu0
      %v1011 = vadd.f32 %v315, %v1010
      %1012 = vdwg.mxu0
      %1013 = vmatpush.msra.mxu0 0.0
      %1014 = vmatpush.msra.mxu0 0.0
      %1015 = vmatpush.msra.mxu0 0.0
      %1016 = vmatpush.msra.mxu0 0.0
      %1017 = vmatpush.msra.mxu0 0.0
      %1018 = vmatpush.msra.mxu0 0.0
      %1019 = vmatpush.msra.mxu0 0.0
      %1020 = vmatpush.msra.mxu0 0.0
      %1021 = vmatpush.msra.mxu0 0.0
      %1022 = vmatpush.msra.mxu0 0.0
      %1023 = vmatpush.msra.mxu0 0.0
      %1024 = vmatpush.msra.mxu0 0.0
      %1025 = vmatpush.msra.mxu0 %v545
      %1026 = vmatpush.msra.mxu0 %v308
      %1027 = vmatpush.msra.mxu0 %v305
      %1028 = vmatpush.msra.mxu0 %v302
      %1029 = vmatmul.f32.gmra.mxu0 %v322
      %v1030 = vpop.f32.mrf.mxu0
      %v1031 = vadd.f32 %v316, %v1030
      %1032 = vmatmul.f32.gmra.mxu0 %v325
      %v1033 = vpop.f32.mrf.mxu0
      %v1034 = vadd.f32 %v316, %v1033
      %1035 = vmatmul.f32.gmra.mxu0 %v328
      %v1036 = vpop.f32.mrf.mxu0
      %v1037 = vadd.f32 %v316, %v1036
      %1038 = vmatmul.f32.gmra.mxu0 %v331
      %v1039 = vpop.f32.mrf.mxu0
      %v1040 = vadd.f32 %v316, %v1039
      %1041 = vmatmul.f32.gmra.mxu0 %v334
      %v1042 = vpop.f32.mrf.mxu0
      %v1043 = vadd.f32 %v316, %v1042
      %1044 = vmatmul.f32.gmra.mxu0 %v337
      %v1045 = vpop.f32.mrf.mxu0
      %v1046 = vadd.f32 %v316, %v1045
      %1047 = vmatmul.f32.gmra.mxu0 %v340
      %v1048 = vpop.f32.mrf.mxu0
      %v1049 = vadd.f32 %v316, %v1048
      %1050 = vmatmul.f32.gmra.mxu0 %v343
      %v1051 = vpop.f32.mrf.mxu0
      %v1052 = vadd.f32 %v316, %v1051
      %1053 = vmatmul.f32.gmra.mxu0 %v346
      %v1054 = vpop.f32.mrf.mxu0
      %v1055 = vadd.f32 %v316, %v1054
      %1056 = vmatmul.f32.gmra.mxu0 %v349
      %v1057 = vpop.f32.mrf.mxu0
      %v1058 = vadd.f32 %v316, %v1057
      %1059 = vmatmul.f32.gmra.mxu0 %v352
      %v1060 = vpop.f32.mrf.mxu0
      %v1061 = vadd.f32 %v316, %v1060
      %1062 = vmatmul.f32.gmra.mxu0 %v355
      %v1063 = vpop.f32.mrf.mxu0
      %v1064 = vadd.f32 %v316, %v1063
      %1065 = vmatmul.f32.gmra.mxu0 %v358
      %v1066 = vpop.f32.mrf.mxu0
      %v1067 = vadd.f32 %v316, %v1066
      %1068 = vmatmul.f32.gmra.mxu0 %v361
      %v1069 = vpop.f32.mrf.mxu0
      %v1070 = vadd.f32 %v316, %v1069
      %1071 = vmatmul.f32.gmra.mxu0 %v364
      %v1072 = vpop.f32.mrf.mxu0
      %v1073 = vadd.f32 %v316, %v1072
      %1074 = vmatmul.f32.gmra.mxu0 %v367
      %v1075 = vpop.f32.mrf.mxu0
      %v1076 = vadd.f32 %v316, %v1075
      %1077 = vmatmul.f32.gmra.mxu0 %v370
      %v1078 = vpop.f32.mrf.mxu0
      %v1079 = vadd.f32 %v316, %v1078
      %1080 = vmatmul.f32.gmra.mxu0 %v373
      %v1081 = vpop.f32.mrf.mxu0
      %v1082 = vadd.f32 %v316, %v1081
      %1083 = vmatmul.f32.gmra.mxu0 %v376
      %v1084 = vpop.f32.mrf.mxu0
      %v1085 = vadd.f32 %v316, %v1084
      %1086 = vmatmul.f32.gmra.mxu0 %v379
      %v1087 = vpop.f32.mrf.mxu0
      %v1088 = vadd.f32 %v316, %v1087
      %1089 = vmatmul.f32.gmra.mxu0 %v382
      %v1090 = vpop.f32.mrf.mxu0
      %v1091 = vadd.f32 %v316, %v1090
      %1092 = vmatmul.f32.gmra.mxu0 %v385
      %v1093 = vpop.f32.mrf.mxu0
      %v1094 = vadd.f32 %v316, %v1093
      %1095 = vmatmul.f32.gmra.mxu0 %v388
      %v1096 = vpop.f32.mrf.mxu0
      %v1097 = vadd.f32 %v316, %v1096
      %1098 = vmatmul.f32.gmra.mxu0 %v391
      %v1099 = vpop.f32.mrf.mxu0
      %v1100 = vadd.f32 %v316, %v1099
      %1101 = vmatmul.f32.gmra.mxu0 %v394
      %v1102 = vpop.f32.mrf.mxu0
      %v1103 = vadd.f32 %v316, %v1102
      %1104 = vmatmul.f32.gmra.mxu0 %v397
      %v1105 = vpop.f32.mrf.mxu0
      %v1106 = vadd.f32 %v316, %v1105
      %1107 = vmatmul.f32.gmra.mxu0 %v400
      %v1108 = vpop.f32.mrf.mxu0
      %v1109 = vadd.f32 %v316, %v1108
      %1110 = vmatmul.f32.gmra.mxu0 %v403
      %v1111 = vpop.f32.mrf.mxu0
      %v1112 = vadd.f32 %v316, %v1111
      %1113 = vmatmul.f32.gmra.mxu0 %v406
      %v1114 = vpop.f32.mrf.mxu0
      %v1115 = vadd.f32 %v316, %v1114
      %1116 = vmatmul.f32.gmra.mxu0 %v409
      %v1117 = vpop.f32.mrf.mxu0
      %v1118 = vadd.f32 %v316, %v1117
      %1119 = vmatmul.f32.gmra.mxu0 %v412
      %v1120 = vpop.f32.mrf.mxu0
      %v1121 = vadd.f32 %v316, %v1120
      %1122 = vmatmul.f32.gmra.mxu0 %v415
      %v1123 = vpop.f32.mrf.mxu0
      %v1124 = vadd.f32 %v316, %v1123
      %1125 = vmatmul.f32.gmra.mxu0 %v418
      %v1126 = vpop.f32.mrf.mxu0
      %v1127 = vadd.f32 %v316, %v1126
      %1128 = vmatmul.f32.gmra.mxu0 %v421
      %v1129 = vpop.f32.mrf.mxu0
      %v1130 = vadd.f32 %v316, %v1129
      %1131 = vmatmul.f32.gmra.mxu0 %v424
      %v1132 = vpop.f32.mrf.mxu0
      %v1133 = vadd.f32 %v316, %v1132
      %1134 = vmatmul.f32.gmra.mxu0 %v427
      %v1135 = vpop.f32.mrf.mxu0
      %v1136 = vadd.f32 %v316, %v1135
      %1137 = vmatmul.f32.gmra.mxu0 %v430
      %v1138 = vpop.f32.mrf.mxu0
      %v1139 = vadd.f32 %v316, %v1138
      %1140 = vmatmul.f32.gmra.mxu0 %v433
      %v1141 = vpop.f32.mrf.mxu0
      %v1142 = vadd.f32 %v316, %v1141
      %1143 = vmatmul.f32.gmra.mxu0 %v436
      %v1144 = vpop.f32.mrf.mxu0
      %v1145 = vadd.f32 %v316, %v1144
      %1146 = vmatmul.f32.gmra.mxu0 %v439
      %v1147 = vpop.f32.mrf.mxu0
      %v1148 = vadd.f32 %v316, %v1147
      %1149 = vmatmul.f32.gmra.mxu0 %v442
      %v1150 = vpop.f32.mrf.mxu0
      %v1151 = vadd.f32 %v316, %v1150
      %1152 = vmatmul.f32.gmra.mxu0 %v445
      %v1153 = vpop.f32.mrf.mxu0
      %v1154 = vadd.f32 %v316, %v1153
      %1155 = vmatmul.f32.gmra.mxu0 %v448
      %v1156 = vpop.f32.mrf.mxu0
      %v1157 = vadd.f32 %v316, %v1156
      %1158 = vmatmul.f32.gmra.mxu0 %v451
      %v1159 = vpop.f32.mrf.mxu0
      %v1160 = vadd.f32 %v316, %v1159
      %1161 = vmatmul.f32.gmra.mxu0 %v454
      %v1162 = vpop.f32.mrf.mxu0
      %v1163 = vadd.f32 %v316, %v1162
      %1164 = vmatmul.f32.gmra.mxu0 %v457
      %v1165 = vpop.f32.mrf.mxu0
      %v1166 = vadd.f32 %v316, %v1165
      %1167 = vmatmul.f32.gmra.mxu0 %v460
      %v1168 = vpop.f32.mrf.mxu0
      %v1169 = vadd.f32 %v316, %v1168
      %1170 = vmatmul.f32.gmra.mxu0 %v463
      %v1171 = vpop.f32.mrf.mxu0
      %v1172 = vadd.f32 %v316, %v1171
      %1173 = vmatmul.f32.gmra.mxu0 %v466
      %v1174 = vpop.f32.mrf.mxu0
      %v1175 = vadd.f32 %v316, %v1174
      %1176 = vmatmul.f32.gmra.mxu0 %v469
      %v1177 = vpop.f32.mrf.mxu0
      %v1178 = vadd.f32 %v316, %v1177
      %1179 = vmatmul.f32.gmra.mxu0 %v472
      %v1180 = vpop.f32.mrf.mxu0
      %v1181 = vadd.f32 %v316, %v1180
      %1182 = vmatmul.f32.gmra.mxu0 %v475
      %v1183 = vpop.f32.mrf.mxu0
      %v1184 = vadd.f32 %v316, %v1183
      %1185 = vmatmul.f32.gmra.mxu0 %v478
      %v1186 = vpop.f32.mrf.mxu0
      %v1187 = vadd.f32 %v316, %v1186
      %1188 = vmatmul.f32.gmra.mxu0 %v481
      %v1189 = vpop.f32.mrf.mxu0
      %v1190 = vadd.f32 %v316, %v1189
      %1191 = vmatmul.f32.gmra.mxu0 %v484
      %v1192 = vpop.f32.mrf.mxu0
      %v1193 = vadd.f32 %v316, %v1192
      %1194 = vmatmul.f32.gmra.mxu0 %v487
      %v1195 = vpop.f32.mrf.mxu0
      %v1196 = vadd.f32 %v316, %v1195
      %1197 = vmatmul.f32.gmra.mxu0 %v490
      %v1198 = vpop.f32.mrf.mxu0
      %v1199 = vadd.f32 %v316, %v1198
      %1200 = vmatmul.f32.gmra.mxu0 %v493
      %v1201 = vpop.f32.mrf.mxu0
      %v1202 = vadd.f32 %v316, %v1201
      %1203 = vmatmul.f32.gmra.mxu0 %v496
      %v1204 = vpop.f32.mrf.mxu0
      %v1205 = vadd.f32 %v316, %v1204
      %1206 = vmatmul.f32.gmra.mxu0 %v499
      %v1207 = vpop.f32.mrf.mxu0
      %v1208 = vadd.f32 %v316, %v1207
      %1209 = vmatmul.f32.gmra.mxu0 %v502
      %v1210 = vpop.f32.mrf.mxu0
      %v1211 = vadd.f32 %v316, %v1210
      %1212 = vmatmul.f32.gmra.mxu0 %v505
      %v1213 = vpop.f32.mrf.mxu0
      %v1214 = vadd.f32 %v316, %v1213
      %1215 = vmatmul.f32.gmra.mxu0 %v508
      %v1216 = vpop.f32.mrf.mxu0
      %v1217 = vadd.f32 %v316, %v1216
      %1218 = vmatmul.f32.gmra.mxu0 %v511
      %v1219 = vpop.f32.mrf.mxu0
      %v1220 = vadd.f32 %v316, %v1219
      %1221 = vmatmul.f32.gmra.mxu0 %v514
      %v1222 = vpop.f32.mrf.mxu0
      %v1223 = vadd.f32 %v316, %v1222
      %1224 = vmatmul.f32.gmra.mxu0 %v517
      %v1225 = vpop.f32.mrf.mxu0
      %v1226 = vadd.f32 %v316, %v1225
      %1227 = vmatmul.f32.gmra.mxu0 %v520
      %v1228 = vpop.f32.mrf.mxu0
      %v1229 = vadd.f32 %v316, %v1228
      %1230 = vmatmul.f32.gmra.mxu0 %v523
      %v1231 = vpop.f32.mrf.mxu0
      %v1232 = vadd.f32 %v316, %v1231
      %1233 = vmatmul.f32.gmra.mxu0 %v526
      %v1234 = vpop.f32.mrf.mxu0
      %v1235 = vadd.f32 %v316, %v1234
      %1236 = vmatmul.f32.gmra.mxu0 %v529
      %v1237 = vpop.f32.mrf.mxu0
      %v1238 = vadd.f32 %v316, %v1237
      %1239 = vmatmul.f32.gmra.mxu0 %v532
      %v1240 = vpop.f32.mrf.mxu0
      %v1241 = vadd.f32 %v316, %v1240
      %1242 = vmatmul.f32.gmra.mxu0 %v535
      %v1243 = vpop.f32.mrf.mxu0
      %v1244 = vadd.f32 %v316, %v1243
      %1245 = vdwg.mxu0
      %v1246 = vmax.f32 %v565, 0.0
      %v1247 = vmax.f32 %v798, 0.0
      %v1248 = vmax.f32 %v1031, 0.0
      %v1249 = vmax.f32 %v568, 0.0
      %v1250 = vmax.f32 %v801, 0.0
      %v1251 = vmax.f32 %v1034, 0.0
      %v1252 = vmax.f32 %v571, 0.0
      %v1253 = vmax.f32 %v804, 0.0
      %v1254 = vmax.f32 %v1037, 0.0
      %v1255 = vmax.f32 %v574, 0.0
      %v1256 = vmax.f32 %v807, 0.0
      %v1257 = vmax.f32 %v1040, 0.0
      %v1258 = vmax.f32 %v577, 0.0
      %v1259 = vmax.f32 %v810, 0.0
      %v1260 = vmax.f32 %v1043, 0.0
      %v1261 = vmax.f32 %v580, 0.0
      %v1262 = vmax.f32 %v813, 0.0
      %v1263 = vmax.f32 %v1046, 0.0
      %v1264 = vmax.f32 %v583, 0.0
      %v1265 = vmax.f32 %v816, 0.0
      %v1266 = vmax.f32 %v1049, 0.0
      %v1267 = vmax.f32 %v586, 0.0
      %v1268 = vmax.f32 %v819, 0.0
      %v1269 = vmax.f32 %v1052, 0.0
      %v1270 = vmax.f32 %v589, 0.0
      %v1271 = vmax.f32 %v822, 0.0
      %v1272 = vmax.f32 %v1055, 0.0
      %v1273 = vmax.f32 %v592, 0.0
      %v1274 = vmax.f32 %v825, 0.0
      %v1275 = vmax.f32 %v1058, 0.0
      %v1276 = vmax.f32 %v595, 0.0
      %v1277 = vmax.f32 %v828, 0.0
      %v1278 = vmax.f32 %v1061, 0.0
      %v1279 = vmax.f32 %v598, 0.0
      %v1280 = vmax.f32 %v831, 0.0
      %v1281 = vmax.f32 %v1064, 0.0
      %v1282 = vmax.f32 %v601, 0.0
      %v1283 = vmax.f32 %v834, 0.0
      %v1284 = vmax.f32 %v1067, 0.0
      %v1285 = vmax.f32 %v604, 0.0
      %v1286 = vmax.f32 %v837, 0.0
      %v1287 = vmax.f32 %v1070, 0.0
      %v1288 = vmax.f32 %v607, 0.0
      %v1289 = vmax.f32 %v840, 0.0
      %v1290 = vmax.f32 %v1073, 0.0
      %v1291 = vmax.f32 %v610, 0.0
      %v1292 = vmax.f32 %v843, 0.0
      %v1293 = vmax.f32 %v1076, 0.0
      %v1294 = vmax.f32 %v613, 0.0
      %v1295 = vmax.f32 %v846, 0.0
      %v1296 = vmax.f32 %v1079, 0.0
      %v1297 = vmax.f32 %v616, 0.0
      %v1298 = vmax.f32 %v849, 0.0
      %v1299 = vmax.f32 %v1082, 0.0
      %v1300 = vmax.f32 %v619, 0.0
      %v1301 = vmax.f32 %v852, 0.0
      %v1302 = vmax.f32 %v1085, 0.0
      %v1303 = vmax.f32 %v622, 0.0
      %v1304 = vmax.f32 %v855, 0.0
      %v1305 = vmax.f32 %v1088, 0.0
      %v1306 = vmax.f32 %v625, 0.0
      %v1307 = vmax.f32 %v858, 0.0
      %v1308 = vmax.f32 %v1091, 0.0
      %v1309 = vmax.f32 %v628, 0.0
      %v1310 = vmax.f32 %v861, 0.0
      %v1311 = vmax.f32 %v1094, 0.0
      %v1312 = vmax.f32 %v631, 0.0
      %v1313 = vmax.f32 %v864, 0.0
      %v1314 = vmax.f32 %v1097, 0.0
      %v1315 = vmax.f32 %v634, 0.0
      %v1316 = vmax.f32 %v867, 0.0
      %v1317 = vmax.f32 %v1100, 0.0
      %v1318 = vmax.f32 %v637, 0.0
      %v1319 = vmax.f32 %v870, 0.0
      %v1320 = vmax.f32 %v1103, 0.0
      %v1321 = vmax.f32 %v640, 0.0
      %v1322 = vmax.f32 %v873, 0.0
      %v1323 = vmax.f32 %v1106, 0.0
      %v1324 = vmax.f32 %v643, 0.0
      %v1325 = vmax.f32 %v876, 0.0
      %v1326 = vmax.f32 %v1109, 0.0
      %v1327 = vmax.f32 %v646, 0.0
      %v1328 = vmax.f32 %v879, 0.0
      %v1329 = vmax.f32 %v1112, 0.0
      %v1330 = vmax.f32 %v649, 0.0
      %v1331 = vmax.f32 %v882, 0.0
      %v1332 = vmax.f32 %v1115, 0.0
      %v1333 = vmax.f32 %v652, 0.0
      %v1334 = vmax.f32 %v885, 0.0
      %v1335 = vmax.f32 %v1118, 0.0
      %v1336 = vmax.f32 %v655, 0.0
      %v1337 = vmax.f32 %v888, 0.0
      %v1338 = vmax.f32 %v1121, 0.0
      %v1339 = vmax.f32 %v658, 0.0
      %v1340 = vmax.f32 %v891, 0.0
      %v1341 = vmax.f32 %v1124, 0.0
      %v1342 = vmax.f32 %v661, 0.0
      %v1343 = vmax.f32 %v894, 0.0
      %v1344 = vmax.f32 %v1127, 0.0
      %v1345 = vmax.f32 %v664, 0.0
      %v1346 = vmax.f32 %v897, 0.0
      %v1347 = vmax.f32 %v1130, 0.0
      %v1348 = vmax.f32 %v667, 0.0
      %v1349 = vmax.f32 %v900, 0.0
      %v1350 = vmax.f32 %v1133, 0.0
      %v1351 = vmax.f32 %v670, 0.0
      %v1352 = vmax.f32 %v903, 0.0
      %v1353 = vmax.f32 %v1136, 0.0
      %v1354 = vmax.f32 %v673, 0.0
      %v1355 = vmax.f32 %v906, 0.0
      %v1356 = vmax.f32 %v1139, 0.0
      %v1357 = vmax.f32 %v676, 0.0
      %v1358 = vmax.f32 %v909, 0.0
      %v1359 = vmax.f32 %v1142, 0.0
      %v1360 = vmax.f32 %v679, 0.0
      %v1361 = vmax.f32 %v912, 0.0
      %v1362 = vmax.f32 %v1145, 0.0
      %v1363 = vmax.f32 %v682, 0.0
      %v1364 = vmax.f32 %v915, 0.0
      %v1365 = vmax.f32 %v1148, 0.0
      %v1366 = vmax.f32 %v685, 0.0
      %v1367 = vmax.f32 %v918, 0.0
      %v1368 = vmax.f32 %v1151, 0.0
      %v1369 = vmax.f32 %v688, 0.0
      %v1370 = vmax.f32 %v921, 0.0
      %v1371 = vmax.f32 %v1154, 0.0
      %v1372 = vmax.f32 %v691, 0.0
      %v1373 = vmax.f32 %v924, 0.0
      %v1374 = vmax.f32 %v1157, 0.0
      %v1375 = vmax.f32 %v694, 0.0
      %v1376 = vmax.f32 %v927, 0.0
      %v1377 = vmax.f32 %v1160, 0.0
      %v1378 = vmax.f32 %v697, 0.0
      %v1379 = vmax.f32 %v930, 0.0
      %v1380 = vmax.f32 %v1163, 0.0
      %v1381 = vmax.f32 %v700, 0.0
      %v1382 = vmax.f32 %v933, 0.0
      %v1383 = vmax.f32 %v1166, 0.0
      %v1384 = vmax.f32 %v703, 0.0
      %v1385 = vmax.f32 %v936, 0.0
      %v1386 = vmax.f32 %v1169, 0.0
      %v1387 = vmax.f32 %v706, 0.0
      %v1388 = vmax.f32 %v939, 0.0
      %v1389 = vmax.f32 %v1172, 0.0
      %v1390 = vmax.f32 %v709, 0.0
      %v1391 = vmax.f32 %v942, 0.0
      %v1392 = vmax.f32 %v1175, 0.0
      %v1393 = vmax.f32 %v712, 0.0
      %v1394 = vmax.f32 %v945, 0.0
      %v1395 = vmax.f32 %v1178, 0.0
      %v1396 = vmax.f32 %v715, 0.0
      %v1397 = vmax.f32 %v948, 0.0
      %v1398 = vmax.f32 %v1181, 0.0
      %v1399 = vmax.f32 %v718, 0.0
      %v1400 = vmax.f32 %v951, 0.0
      %v1401 = vmax.f32 %v1184, 0.0
      %v1402 = vmax.f32 %v721, 0.0
      %v1403 = vmax.f32 %v954, 0.0
      %v1404 = vmax.f32 %v1187, 0.0
      %v1405 = vmax.f32 %v724, 0.0
      %v1406 = vmax.f32 %v957, 0.0
      %v1407 = vmax.f32 %v1190, 0.0
      %v1408 = vmax.f32 %v727, 0.0
      %v1409 = vmax.f32 %v960, 0.0
      %v1410 = vmax.f32 %v1193, 0.0
      %v1411 = vmax.f32 %v730, 0.0
      %v1412 = vmax.f32 %v963, 0.0
      %v1413 = vmax.f32 %v1196, 0.0
      %v1414 = vmax.f32 %v733, 0.0
      %v1415 = vmax.f32 %v966, 0.0
      %v1416 = vmax.f32 %v1199, 0.0
      %v1417 = vmax.f32 %v736, 0.0
      %v1418 = vmax.f32 %v969, 0.0
      %v1419 = vmax.f32 %v1202, 0.0
      %v1420 = vmax.f32 %v739, 0.0
      %v1421 = vmax.f32 %v972, 0.0
      %v1422 = vmax.f32 %v1205, 0.0
      %v1423 = vmax.f32 %v742, 0.0
      %v1424 = vmax.f32 %v975, 0.0
      %v1425 = vmax.f32 %v1208, 0.0
      %v1426 = vmax.f32 %v745, 0.0
      %v1427 = vmax.f32 %v978, 0.0
      %v1428 = vmax.f32 %v1211, 0.0
      %v1429 = vmax.f32 %v748, 0.0
      %v1430 = vmax.f32 %v981, 0.0
      %v1431 = vmax.f32 %v1214, 0.0
      %v1432 = vmax.f32 %v751, 0.0
      %v1433 = vmax.f32 %v984, 0.0
      %v1434 = vmax.f32 %v1217, 0.0
      %v1435 = vmax.f32 %v754, 0.0
      %v1436 = vmax.f32 %v987, 0.0
      %v1437 = vmax.f32 %v1220, 0.0
      %v1438 = vmax.f32 %v757, 0.0
      %v1439 = vmax.f32 %v990, 0.0
      %v1440 = vmax.f32 %v1223, 0.0
      %v1441 = vmax.f32 %v760, 0.0
      %v1442 = vmax.f32 %v993, 0.0
      %v1443 = vmax.f32 %v1226, 0.0
      %v1444 = vmax.f32 %v763, 0.0
      %v1445 = vmax.f32 %v996, 0.0
      %v1446 = vmax.f32 %v1229, 0.0
      %v1447 = vmax.f32 %v766, 0.0
      %v1448 = vmax.f32 %v999, 0.0
      %v1449 = vmax.f32 %v1232, 0.0
      %v1450 = vmax.f32 %v769, 0.0
      %v1451 = vmax.f32 %v1002, 0.0
      %v1452 = vmax.f32 %v1235, 0.0
      %v1453 = vmax.f32 %v772, 0.0
      %v1454 = vmax.f32 %v1005, 0.0
      %v1455 = vmax.f32 %v1238, 0.0
      %v1456 = vmax.f32 %v775, 0.0
      %v1457 = vmax.f32 %v1008, 0.0
      %v1458 = vmax.f32 %v1241, 0.0
      %v1459 = vmax.f32 %v778, 0.0
      %v1460 = vmax.f32 %v1011, 0.0
      %v1461 = vmax.f32 %v1244, 0.0
      %v1462 = vld [vmem:[%s3] sm:$0xff]
      %v1463 = vld [vmem:[%s3 + $0x8] sm:$0xff]
      %v1464 = vld [vmem:[%s3 + $0x10] sm:$0xff]
      %v1465 = vld [vmem:[%s3 + $0x18] sm:$0xff]
      %v1466 = vld [vmem:[%s3 + $0x20] sm:$0xff]
      %v1467 = vld [vmem:[%s3 + $0x28] sm:$0xff]
      %v1468 = vld [vmem:[%s3 + $0x30] sm:$0xff]
      %v1469 = vld [vmem:[%s3 + $0x38] sm:$0xff]
      %v1470 = vld [vmem:[%s3 + $0x40] sm:$0xff]
      %v1471 = vld [vmem:[%s3 + $0x48] sm:$0xff]
      %v1472 = vld [vmem:[%s3 + $0x50] sm:$0xff]
      %v1473 = vld [vmem:[%s3 + $0x58] sm:$0xff]
      %v1474 = vld [vmem:[%s3 + $0x60] sm:$0xff]
      %v1475 = vld [vmem:[%s3 + $0x68] sm:$0xff]
      %v1476 = vld [vmem:[%s3 + $0x70] sm:$0xff]
      %v1477 = vld [vmem:[%s3 + $0x78] sm:$0xff]
      %v1478 = vld [vmem:[%s3 + $0x80] sm:$0xff]
      %v1479 = vld [vmem:[%s3 + $0x88] sm:$0xff]
      %v1480 = vld [vmem:[%s3 + $0x90] sm:$0xff]
      %v1481 = vld [vmem:[%s3 + $0x98] sm:$0xff]
      %v1482 = vld [vmem:[%s3 + $0xa0] sm:$0xff]
      %v1483 = vld [vmem:[%s3 + $0xa8] sm:$0xff]
      %v1484 = vld [vmem:[%s3 + $0xb0] sm:$0xff]
      %v1485 = vld [vmem:[%s3 + $0xb8] sm:$0xff]
      %v1486 = vld [vmem:[%s3 + $0xc0] sm:$0xff]
      %v1487 = vld [vmem:[%s3 + $0xc8] sm:$0xff]
      %v1488 = vld [vmem:[%s3 + $0xd0] sm:$0xff]
      %v1489 = vld [vmem:[%s3 + $0xd8] sm:$0xff]
      %v1490 = vld [vmem:[%s3 + $0xe0] sm:$0xff]
      %v1491 = vld [vmem:[%s3 + $0xe8] sm:$0xff]
      %v1492 = vld [vmem:[%s3 + $0xf0] sm:$0xff]
      %v1493 = vld [vmem:[%s3 + $0xf8] sm:$0xff]
      %v1494 = vld [vmem:[%s3 + $0x100] sm:$0xff]
      %v1495 = vld [vmem:[%s3 + $0x108] sm:$0xff]
      %v1496 = vld [vmem:[%s3 + $0x110] sm:$0xff]
      %v1497 = vld [vmem:[%s3 + $0x118] sm:$0xff]
      %v1498 = vld [vmem:[%s4] sm:$0x1]
      %v1500 = vperm.slane %v1498, 0
      %vm1502 = vcmask 261120
      %v1504 = vsel %vm1502, %v1248, 0
      %v1507 = vsel %vm1502, %v1251, 0
      %v1510 = vsel %vm1502, %v1254, 0
      %v1513 = vsel %vm1502, %v1257, 0
      %v1516 = vsel %vm1502, %v1260, 0
      %v1519 = vsel %vm1502, %v1263, 0
      %v1522 = vsel %vm1502, %v1266, 0
      %v1525 = vsel %vm1502, %v1269, 0
      %v1528 = vsel %vm1502, %v1272, 0
      %v1531 = vsel %vm1502, %v1275, 0
      %v1534 = vsel %vm1502, %v1278, 0
      %v1537 = vsel %vm1502, %v1281, 0
      %v1540 = vsel %vm1502, %v1284, 0
      %v1543 = vsel %vm1502, %v1287, 0
      %v1546 = vsel %vm1502, %v1290, 0
      %v1549 = vsel %vm1502, %v1293, 0
      %v1552 = vsel %vm1502, %v1296, 0
      %v1555 = vsel %vm1502, %v1299, 0
      %v1558 = vsel %vm1502, %v1302, 0
      %v1561 = vsel %vm1502, %v1305, 0
      %v1564 = vsel %vm1502, %v1308, 0
      %v1567 = vsel %vm1502, %v1311, 0
      %v1570 = vsel %vm1502, %v1314, 0
      %v1573 = vsel %vm1502, %v1317, 0
      %v1576 = vsel %vm1502, %v1320, 0
      %v1579 = vsel %vm1502, %v1323, 0
      %v1582 = vsel %vm1502, %v1326, 0
      %v1585 = vsel %vm1502, %v1329, 0
      %v1588 = vsel %vm1502, %v1332, 0
      %v1591 = vsel %vm1502, %v1335, 0
      %v1594 = vsel %vm1502, %v1338, 0
      %v1597 = vsel %vm1502, %v1341, 0
      %v1600 = vsel %vm1502, %v1344, 0
      %v1603 = vsel %vm1502, %v1347, 0
      %v1606 = vsel %vm1502, %v1350, 0
      %v1609 = vsel %vm1502, %v1353, 0
      %v1612 = vsel %vm1502, %v1356, 0
      %v1615 = vsel %vm1502, %v1359, 0
      %v1618 = vsel %vm1502, %v1362, 0
      %v1621 = vsel %vm1502, %v1365, 0
      %v1624 = vsel %vm1502, %v1368, 0
      %v1627 = vsel %vm1502, %v1371, 0
      %v1630 = vsel %vm1502, %v1374, 0
      %v1633 = vsel %vm1502, %v1377, 0
      %v1636 = vsel %vm1502, %v1380, 0
      %v1639 = vsel %vm1502, %v1383, 0
      %v1642 = vsel %vm1502, %v1386, 0
      %v1645 = vsel %vm1502, %v1389, 0
      %v1648 = vsel %vm1502, %v1392, 0
      %v1651 = vsel %vm1502, %v1395, 0
      %v1654 = vsel %vm1502, %v1398, 0
      %v1657 = vsel %vm1502, %v1401, 0
      %v1660 = vsel %vm1502, %v1404, 0
      %v1663 = vsel %vm1502, %v1407, 0
      %v1666 = vsel %vm1502, %v1410, 0
      %v1669 = vsel %vm1502, %v1413, 0
      %v1672 = vsel %vm1502, %v1416, 0
      %v1675 = vsel %vm1502, %v1419, 0
      %v1678 = vsel %vm1502, %v1422, 0
      %v1681 = vsel %vm1502, %v1425, 0
      %v1684 = vsel %vm1502, %v1428, 0
      %v1687 = vsel %vm1502, %v1431, 0
      %v1690 = vsel %vm1502, %v1434, 0
      %v1693 = vsel %vm1502, %v1437, 0
      %v1696 = vsel %vm1502, %v1440, 0
      %v1699 = vsel %vm1502, %v1443, 0
      %v1702 = vsel %vm1502, %v1446, 0
      %v1705 = vsel %vm1502, %v1449, 0
      %v1708 = vsel %vm1502, %v1452, 0
      %v1711 = vsel %vm1502, %v1455, 0
      %v1714 = vsel %vm1502, %v1458, 0
      %v1717 = vsel %vm1502, %v1461, 0
      %1719 = vmatpush.msra.mxu0 %v1477
      %1720 = vmatpush.msra.mxu0 %v1476
      %1721 = vmatpush.msra.mxu0 %v1475
      %1722 = vmatpush.msra.mxu0 %v1474
      %1723 = vmatpush.msra.mxu0 %v1473
      %1724 = vmatpush.msra.mxu0 %v1472
      %1725 = vmatpush.msra.mxu0 %v1471
      %1726 = vmatpush.msra.mxu0 %v1470
      %1727 = vmatpush.msra.mxu0 %v1469
      %1728 = vmatpush.msra.mxu0 %v1468
      %1729 = vmatpush.msra.mxu0 %v1467
      %1730 = vmatpush.msra.mxu0 %v1466
      %1731 = vmatpush.msra.mxu0 %v1465
      %1732 = vmatpush.msra.mxu0 %v1464
      %1733 = vmatpush.msra.mxu0 %v1463
      %1734 = vmatpush.msra.mxu0 %v1462
      %1735 = vmatmul.f32.gmra.mxu0 %v1246
      %v1736 = vpop.f32.mrf.mxu0
      %v1737 = vadd.f32 %v1500, %v1736
      %1738 = vmatmul.f32.gmra.mxu0 %v1249
      %v1739 = vpop.f32.mrf.mxu0
      %v1740 = vadd.f32 %v1500, %v1739
      %1741 = vmatmul.f32.gmra.mxu0 %v1252
      %v1742 = vpop.f32.mrf.mxu0
      %v1743 = vadd.f32 %v1500, %v1742
      %1744 = vmatmul.f32.gmra.mxu0 %v1255
      %v1745 = vpop.f32.mrf.mxu0
      %v1746 = vadd.f32 %v1500, %v1745
      %1747 = vmatmul.f32.gmra.mxu0 %v1258
      %v1748 = vpop.f32.mrf.mxu0
      %v1749 = vadd.f32 %v1500, %v1748
      %1750 = vmatmul.f32.gmra.mxu0 %v1261
      %v1751 = vpop.f32.mrf.mxu0
      %v1752 = vadd.f32 %v1500, %v1751
      %1753 = vmatmul.f32.gmra.mxu0 %v1264
      %v1754 = vpop.f32.mrf.mxu0
      %v1755 = vadd.f32 %v1500, %v1754
      %1756 = vmatmul.f32.gmra.mxu0 %v1267
      %v1757 = vpop.f32.mrf.mxu0
      %v1758 = vadd.f32 %v1500, %v1757
      %1759 = vmatmul.f32.gmra.mxu0 %v1270
      %v1760 = vpop.f32.mrf.mxu0
      %v1761 = vadd.f32 %v1500, %v1760
      %1762 = vmatmul.f32.gmra.mxu0 %v1273
      %v1763 = vpop.f32.mrf.mxu0
      %v1764 = vadd.f32 %v1500, %v1763
      %1765 = vmatmul.f32.gmra.mxu0 %v1276
      %v1766 = vpop.f32.mrf.mxu0
      %v1767 = vadd.f32 %v1500, %v1766
      %1768 = vmatmul.f32.gmra.mxu0 %v1279
      %v1769 = vpop.f32.mrf.mxu0
      %v1770 = vadd.f32 %v1500, %v1769
      %1771 = vmatmul.f32.gmra.mxu0 %v1282
      %v1772 = vpop.f32.mrf.mxu0
      %v1773 = vadd.f32 %v1500, %v1772
      %1774 = vmatmul.f32.gmra.mxu0 %v1285
      %v1775 = vpop.f32.mrf.mxu0
      %v1776 = vadd.f32 %v1500, %v1775
      %1777 = vmatmul.f32.gmra.mxu0 %v1288
      %v1778 = vpop.f32.mrf.mxu0
      %v1779 = vadd.f32 %v1500, %v1778
      %1780 = vmatmul.f32.gmra.mxu0 %v1291
      %v1781 = vpop.f32.mrf.mxu0
      %v1782 = vadd.f32 %v1500, %v1781
      %1783 = vmatmul.f32.gmra.mxu0 %v1294
      %v1784 = vpop.f32.mrf.mxu0
      %v1785 = vadd.f32 %v1500, %v1784
      %1786 = vmatmul.f32.gmra.mxu0 %v1297
      %v1787 = vpop.f32.mrf.mxu0
      %v1788 = vadd.f32 %v1500, %v1787
      %1789 = vmatmul.f32.gmra.mxu0 %v1300
      %v1790 = vpop.f32.mrf.mxu0
      %v1791 = vadd.f32 %v1500, %v1790
      %1792 = vmatmul.f32.gmra.mxu0 %v1303
      %v1793 = vpop.f32.mrf.mxu0
      %v1794 = vadd.f32 %v1500, %v1793
      %1795 = vmatmul.f32.gmra.mxu0 %v1306
      %v1796 = vpop.f32.mrf.mxu0
      %v1797 = vadd.f32 %v1500, %v1796
      %1798 = vmatmul.f32.gmra.mxu0 %v1309
      %v1799 = vpop.f32.mrf.mxu0
      %v1800 = vadd.f32 %v1500, %v1799
      %1801 = vmatmul.f32.gmra.mxu0 %v1312
      %v1802 = vpop.f32.mrf.mxu0
      %v1803 = vadd.f32 %v1500, %v1802
      %1804 = vmatmul.f32.gmra.mxu0 %v1315
      %v1805 = vpop.f32.mrf.mxu0
      %v1806 = vadd.f32 %v1500, %v1805
      %1807 = vmatmul.f32.gmra.mxu0 %v1318
      %v1808 = vpop.f32.mrf.mxu0
      %v1809 = vadd.f32 %v1500, %v1808
      %1810 = vmatmul.f32.gmra.mxu0 %v1321
      %v1811 = vpop.f32.mrf.mxu0
      %v1812 = vadd.f32 %v1500, %v1811
      %1813 = vmatmul.f32.gmra.mxu0 %v1324
      %v1814 = vpop.f32.mrf.mxu0
      %v1815 = vadd.f32 %v1500, %v1814
      %1816 = vmatmul.f32.gmra.mxu0 %v1327
      %v1817 = vpop.f32.mrf.mxu0
      %v1818 = vadd.f32 %v1500, %v1817
      %1819 = vmatmul.f32.gmra.mxu0 %v1330
      %v1820 = vpop.f32.mrf.mxu0
      %v1821 = vadd.f32 %v1500, %v1820
      %1822 = vmatmul.f32.gmra.mxu0 %v1333
      %v1823 = vpop.f32.mrf.mxu0
      %v1824 = vadd.f32 %v1500, %v1823
      %1825 = vmatmul.f32.gmra.mxu0 %v1336
      %v1826 = vpop.f32.mrf.mxu0
      %v1827 = vadd.f32 %v1500, %v1826
      %1828 = vmatmul.f32.gmra.mxu0 %v1339
      %v1829 = vpop.f32.mrf.mxu0
      %v1830 = vadd.f32 %v1500, %v1829
      %1831 = vmatmul.f32.gmra.mxu0 %v1342
      %v1832 = vpop.f32.mrf.mxu0
      %v1833 = vadd.f32 %v1500, %v1832
      %1834 = vmatmul.f32.gmra.mxu0 %v1345
      %v1835 = vpop.f32.mrf.mxu0
      %v1836 = vadd.f32 %v1500, %v1835
      %1837 = vmatmul.f32.gmra.mxu0 %v1348
      %v1838 = vpop.f32.mrf.mxu0
      %v1839 = vadd.f32 %v1500, %v1838
      %1840 = vmatmul.f32.gmra.mxu0 %v1351
      %v1841 = vpop.f32.mrf.mxu0
      %v1842 = vadd.f32 %v1500, %v1841
      %1843 = vmatmul.f32.gmra.mxu0 %v1354
      %v1844 = vpop.f32.mrf.mxu0
      %v1845 = vadd.f32 %v1500, %v1844
      %1846 = vmatmul.f32.gmra.mxu0 %v1357
      %v1847 = vpop.f32.mrf.mxu0
      %v1848 = vadd.f32 %v1500, %v1847
      %1849 = vmatmul.f32.gmra.mxu0 %v1360
      %v1850 = vpop.f32.mrf.mxu0
      %v1851 = vadd.f32 %v1500, %v1850
      %1852 = vmatmul.f32.gmra.mxu0 %v1363
      %v1853 = vpop.f32.mrf.mxu0
      %v1854 = vadd.f32 %v1500, %v1853
      %1855 = vmatmul.f32.gmra.mxu0 %v1366
      %v1856 = vpop.f32.mrf.mxu0
      %v1857 = vadd.f32 %v1500, %v1856
      %1858 = vmatmul.f32.gmra.mxu0 %v1369
      %v1859 = vpop.f32.mrf.mxu0
      %v1860 = vadd.f32 %v1500, %v1859
      %1861 = vmatmul.f32.gmra.mxu0 %v1372
      %v1862 = vpop.f32.mrf.mxu0
      %v1863 = vadd.f32 %v1500, %v1862
      %1864 = vmatmul.f32.gmra.mxu0 %v1375
      %v1865 = vpop.f32.mrf.mxu0
      %v1866 = vadd.f32 %v1500, %v1865
      %1867 = vmatmul.f32.gmra.mxu0 %v1378
      %v1868 = vpop.f32.mrf.mxu0
      %v1869 = vadd.f32 %v1500, %v1868
      %1870 = vmatmul.f32.gmra.mxu0 %v1381
      %v1871 = vpop.f32.mrf.mxu0
      %v1872 = vadd.f32 %v1500, %v1871
      %1873 = vmatmul.f32.gmra.mxu0 %v1384
      %v1874 = vpop.f32.mrf.mxu0
      %v1875 = vadd.f32 %v1500, %v1874
      %1876 = vmatmul.f32.gmra.mxu0 %v1387
      %v1877 = vpop.f32.mrf.mxu0
      %v1878 = vadd.f32 %v1500, %v1877
      %1879 = vmatmul.f32.gmra.mxu0 %v1390
      %v1880 = vpop.f32.mrf.mxu0
      %v1881 = vadd.f32 %v1500, %v1880
      %1882 = vmatmul.f32.gmra.mxu0 %v1393
      %v1883 = vpop.f32.mrf.mxu0
      %v1884 = vadd.f32 %v1500, %v1883
      %1885 = vmatmul.f32.gmra.mxu0 %v1396
      %v1886 = vpop.f32.mrf.mxu0
      %v1887 = vadd.f32 %v1500, %v1886
      %1888 = vmatmul.f32.gmra.mxu0 %v1399
      %v1889 = vpop.f32.mrf.mxu0
      %v1890 = vadd.f32 %v1500, %v1889
      %1891 = vmatmul.f32.gmra.mxu0 %v1402
      %v1892 = vpop.f32.mrf.mxu0
      %v1893 = vadd.f32 %v1500, %v1892
      %1894 = vmatmul.f32.gmra.mxu0 %v1405
      %v1895 = vpop.f32.mrf.mxu0
      %v1896 = vadd.f32 %v1500, %v1895
      %1897 = vmatmul.f32.gmra.mxu0 %v1408
      %v1898 = vpop.f32.mrf.mxu0
      %v1899 = vadd.f32 %v1500, %v1898
      %1900 = vmatmul.f32.gmra.mxu0 %v1411
      %v1901 = vpop.f32.mrf.mxu0
      %v1902 = vadd.f32 %v1500, %v1901
      %1903 = vmatmul.f32.gmra.mxu0 %v1414
      %v1904 = vpop.f32.mrf.mxu0
      %v1905 = vadd.f32 %v1500, %v1904
      %1906 = vmatmul.f32.gmra.mxu0 %v1417
      %v1907 = vpop.f32.mrf.mxu0
      %v1908 = vadd.f32 %v1500, %v1907
      %1909 = vmatmul.f32.gmra.mxu0 %v1420
      %v1910 = vpop.f32.mrf.mxu0
      %v1911 = vadd.f32 %v1500, %v1910
      %1912 = vmatmul.f32.gmra.mxu0 %v1423
      %v1913 = vpop.f32.mrf.mxu0
      %v1914 = vadd.f32 %v1500, %v1913
      %1915 = vmatmul.f32.gmra.mxu0 %v1426
      %v1916 = vpop.f32.mrf.mxu0
      %v1917 = vadd.f32 %v1500, %v1916
      %1918 = vmatmul.f32.gmra.mxu0 %v1429
      %v1919 = vpop.f32.mrf.mxu0
      %v1920 = vadd.f32 %v1500, %v1919
      %1921 = vmatmul.f32.gmra.mxu0 %v1432
      %v1922 = vpop.f32.mrf.mxu0
      %v1923 = vadd.f32 %v1500, %v1922
      %1924 = vmatmul.f32.gmra.mxu0 %v1435
      %v1925 = vpop.f32.mrf.mxu0
      %v1926 = vadd.f32 %v1500, %v1925
      %1927 = vmatmul.f32.gmra.mxu0 %v1438
      %v1928 = vpop.f32.mrf.mxu0
      %v1929 = vadd.f32 %v1500, %v1928
      %1930 = vmatmul.f32.gmra.mxu0 %v1441
      %v1931 = vpop.f32.mrf.mxu0
      %v1932 = vadd.f32 %v1500, %v1931
      %1933 = vmatmul.f32.gmra.mxu0 %v1444
      %v1934 = vpop.f32.mrf.mxu0
      %v1935 = vadd.f32 %v1500, %v1934
      %1936 = vmatmul.f32.gmra.mxu0 %v1447
      %v1937 = vpop.f32.mrf.mxu0
      %v1938 = vadd.f32 %v1500, %v1937
      %1939 = vmatmul.f32.gmra.mxu0 %v1450
      %v1940 = vpop.f32.mrf.mxu0
      %v1941 = vadd.f32 %v1500, %v1940
      %1942 = vmatmul.f32.gmra.mxu0 %v1453
      %v1943 = vpop.f32.mrf.mxu0
      %v1944 = vadd.f32 %v1500, %v1943
      %1945 = vmatmul.f32.gmra.mxu0 %v1456
      %v1946 = vpop.f32.mrf.mxu0
      %v1947 = vadd.f32 %v1500, %v1946
      %1948 = vmatmul.f32.gmra.mxu0 %v1459
      %v1949 = vpop.f32.mrf.mxu0
      %v1950 = vadd.f32 %v1500, %v1949
      %1951 = vdwg.mxu0
      %1952 = vmatpush.msra.mxu0 %v1493
      %1953 = vmatpush.msra.mxu0 %v1492
      %1954 = vmatpush.msra.mxu0 %v1491
      %1955 = vmatpush.msra.mxu0 %v1490
      %1956 = vmatpush.msra.mxu0 %v1489
      %1957 = vmatpush.msra.mxu0 %v1488
      %1958 = vmatpush.msra.mxu0 %v1487
      %1959 = vmatpush.msra.mxu0 %v1486
      %1960 = vmatpush.msra.mxu0 %v1485
      %1961 = vmatpush.msra.mxu0 %v1484
      %1962 = vmatpush.msra.mxu0 %v1483
      %1963 = vmatpush.msra.mxu0 %v1482
      %1964 = vmatpush.msra.mxu0 %v1481
      %1965 = vmatpush.msra.mxu0 %v1480
      %1966 = vmatpush.msra.mxu0 %v1479
      %1967 = vmatpush.msra.mxu0 %v1478
      %1968 = vmatmul.f32.gmra.mxu0 %v1247
      %v1969 = vpop.f32.mrf.mxu0
      %v1970 = vadd.f32 %v1737, %v1969
      %1971 = vmatmul.f32.gmra.mxu0 %v1250
      %v1972 = vpop.f32.mrf.mxu0
      %v1973 = vadd.f32 %v1740, %v1972
      %1974 = vmatmul.f32.gmra.mxu0 %v1253
      %v1975 = vpop.f32.mrf.mxu0
      %v1976 = vadd.f32 %v1743, %v1975
      %1977 = vmatmul.f32.gmra.mxu0 %v1256
      %v1978 = vpop.f32.mrf.mxu0
      %v1979 = vadd.f32 %v1746, %v1978
      %1980 = vmatmul.f32.gmra.mxu0 %v1259
      %v1981 = vpop.f32.mrf.mxu0
      %v1982 = vadd.f32 %v1749, %v1981
      %1983 = vmatmul.f32.gmra.mxu0 %v1262
      %v1984 = vpop.f32.mrf.mxu0
      %v1985 = vadd.f32 %v1752, %v1984
      %1986 = vmatmul.f32.gmra.mxu0 %v1265
      %v1987 = vpop.f32.mrf.mxu0
      %v1988 = vadd.f32 %v1755, %v1987
      %1989 = vmatmul.f32.gmra.mxu0 %v1268
      %v1990 = vpop.f32.mrf.mxu0
      %v1991 = vadd.f32 %v1758, %v1990
      %1992 = vmatmul.f32.gmra.mxu0 %v1271
      %v1993 = vpop.f32.mrf.mxu0
      %v1994 = vadd.f32 %v1761, %v1993
      %1995 = vmatmul.f32.gmra.mxu0 %v1274
      %v1996 = vpop.f32.mrf.mxu0
      %v1997 = vadd.f32 %v1764, %v1996
      %1998 = vmatmul.f32.gmra.mxu0 %v1277
      %v1999 = vpop.f32.mrf.mxu0
      %v2000 = vadd.f32 %v1767, %v1999
      %2001 = vmatmul.f32.gmra.mxu0 %v1280
      %v2002 = vpop.f32.mrf.mxu0
      %v2003 = vadd.f32 %v1770, %v2002
      %2004 = vmatmul.f32.gmra.mxu0 %v1283
      %v2005 = vpop.f32.mrf.mxu0
      %v2006 = vadd.f32 %v1773, %v2005
      %2007 = vmatmul.f32.gmra.mxu0 %v1286
      %v2008 = vpop.f32.mrf.mxu0
      %v2009 = vadd.f32 %v1776, %v2008
      %2010 = vmatmul.f32.gmra.mxu0 %v1289
      %v2011 = vpop.f32.mrf.mxu0
      %v2012 = vadd.f32 %v1779, %v2011
      %2013 = vmatmul.f32.gmra.mxu0 %v1292
      %v2014 = vpop.f32.mrf.mxu0
      %v2015 = vadd.f32 %v1782, %v2014
      %2016 = vmatmul.f32.gmra.mxu0 %v1295
      %v2017 = vpop.f32.mrf.mxu0
      %v2018 = vadd.f32 %v1785, %v2017
      %2019 = vmatmul.f32.gmra.mxu0 %v1298
      %v2020 = vpop.f32.mrf.mxu0
      %v2021 = vadd.f32 %v1788, %v2020
      %2022 = vmatmul.f32.gmra.mxu0 %v1301
      %v2023 = vpop.f32.mrf.mxu0
      %v2024 = vadd.f32 %v1791, %v2023
      %2025 = vmatmul.f32.gmra.mxu0 %v1304
      %v2026 = vpop.f32.mrf.mxu0
      %v2027 = vadd.f32 %v1794, %v2026
      %2028 = vmatmul.f32.gmra.mxu0 %v1307
      %v2029 = vpop.f32.mrf.mxu0
      %v2030 = vadd.f32 %v1797, %v2029
      %2031 = vmatmul.f32.gmra.mxu0 %v1310
      %v2032 = vpop.f32.mrf.mxu0
      %v2033 = vadd.f32 %v1800, %v2032
      %2034 = vmatmul.f32.gmra.mxu0 %v1313
      %v2035 = vpop.f32.mrf.mxu0
      %v2036 = vadd.f32 %v1803, %v2035
      %2037 = vmatmul.f32.gmra.mxu0 %v1316
      %v2038 = vpop.f32.mrf.mxu0
      %v2039 = vadd.f32 %v1806, %v2038
      %2040 = vmatmul.f32.gmra.mxu0 %v1319
      %v2041 = vpop.f32.mrf.mxu0
      %v2042 = vadd.f32 %v1809, %v2041
      %2043 = vmatmul.f32.gmra.mxu0 %v1322
      %v2044 = vpop.f32.mrf.mxu0
      %v2045 = vadd.f32 %v1812, %v2044
      %2046 = vmatmul.f32.gmra.mxu0 %v1325
      %v2047 = vpop.f32.mrf.mxu0
      %v2048 = vadd.f32 %v1815, %v2047
      %2049 = vmatmul.f32.gmra.mxu0 %v1328
      %v2050 = vpop.f32.mrf.mxu0
      %v2051 = vadd.f32 %v1818, %v2050
      %2052 = vmatmul.f32.gmra.mxu0 %v1331
      %v2053 = vpop.f32.mrf.mxu0
      %v2054 = vadd.f32 %v1821, %v2053
      %2055 = vmatmul.f32.gmra.mxu0 %v1334
      %v2056 = vpop.f32.mrf.mxu0
      %v2057 = vadd.f32 %v1824, %v2056
      %2058 = vmatmul.f32.gmra.mxu0 %v1337
      %v2059 = vpop.f32.mrf.mxu0
      %v2060 = vadd.f32 %v1827, %v2059
      %2061 = vmatmul.f32.gmra.mxu0 %v1340
      %v2062 = vpop.f32.mrf.mxu0
      %v2063 = vadd.f32 %v1830, %v2062
      %2064 = vmatmul.f32.gmra.mxu0 %v1343
      %v2065 = vpop.f32.mrf.mxu0
      %v2066 = vadd.f32 %v1833, %v2065
      %2067 = vmatmul.f32.gmra.mxu0 %v1346
      %v2068 = vpop.f32.mrf.mxu0
      %v2069 = vadd.f32 %v1836, %v2068
      %2070 = vmatmul.f32.gmra.mxu0 %v1349
      %v2071 = vpop.f32.mrf.mxu0
      %v2072 = vadd.f32 %v1839, %v2071
      %2073 = vmatmul.f32.gmra.mxu0 %v1352
      %v2074 = vpop.f32.mrf.mxu0
      %v2075 = vadd.f32 %v1842, %v2074
      %2076 = vmatmul.f32.gmra.mxu0 %v1355
      %v2077 = vpop.f32.mrf.mxu0
      %v2078 = vadd.f32 %v1845, %v2077
      %2079 = vmatmul.f32.gmra.mxu0 %v1358
      %v2080 = vpop.f32.mrf.mxu0
      %v2081 = vadd.f32 %v1848, %v2080
      %2082 = vmatmul.f32.gmra.mxu0 %v1361
      %v2083 = vpop.f32.mrf.mxu0
      %v2084 = vadd.f32 %v1851, %v2083
      %2085 = vmatmul.f32.gmra.mxu0 %v1364
      %v2086 = vpop.f32.mrf.mxu0
      %v2087 = vadd.f32 %v1854, %v2086
      %2088 = vmatmul.f32.gmra.mxu0 %v1367
      %v2089 = vpop.f32.mrf.mxu0
      %v2090 = vadd.f32 %v1857, %v2089
      %2091 = vmatmul.f32.gmra.mxu0 %v1370
      %v2092 = vpop.f32.mrf.mxu0
      %v2093 = vadd.f32 %v1860, %v2092
      %2094 = vmatmul.f32.gmra.mxu0 %v1373
      %v2095 = vpop.f32.mrf.mxu0
      %v2096 = vadd.f32 %v1863, %v2095
      %2097 = vmatmul.f32.gmra.mxu0 %v1376
      %v2098 = vpop.f32.mrf.mxu0
      %v2099 = vadd.f32 %v1866, %v2098
      %2100 = vmatmul.f32.gmra.mxu0 %v1379
      %v2101 = vpop.f32.mrf.mxu0
      %v2102 = vadd.f32 %v1869, %v2101
      %2103 = vmatmul.f32.gmra.mxu0 %v1382
      %v2104 = vpop.f32.mrf.mxu0
      %v2105 = vadd.f32 %v1872, %v2104
      %2106 = vmatmul.f32.gmra.mxu0 %v1385
      %v2107 = vpop.f32.mrf.mxu0
      %v2108 = vadd.f32 %v1875, %v2107
      %2109 = vmatmul.f32.gmra.mxu0 %v1388
      %v2110 = vpop.f32.mrf.mxu0
      %v2111 = vadd.f32 %v1878, %v2110
      %2112 = vmatmul.f32.gmra.mxu0 %v1391
      %v2113 = vpop.f32.mrf.mxu0
      %v2114 = vadd.f32 %v1881, %v2113
      %2115 = vmatmul.f32.gmra.mxu0 %v1394
      %v2116 = vpop.f32.mrf.mxu0
      %v2117 = vadd.f32 %v1884, %v2116
      %2118 = vmatmul.f32.gmra.mxu0 %v1397
      %v2119 = vpop.f32.mrf.mxu0
      %v2120 = vadd.f32 %v1887, %v2119
      %2121 = vmatmul.f32.gmra.mxu0 %v1400
      %v2122 = vpop.f32.mrf.mxu0
      %v2123 = vadd.f32 %v1890, %v2122
      %2124 = vmatmul.f32.gmra.mxu0 %v1403
      %v2125 = vpop.f32.mrf.mxu0
      %v2126 = vadd.f32 %v1893, %v2125
      %2127 = vmatmul.f32.gmra.mxu0 %v1406
      %v2128 = vpop.f32.mrf.mxu0
      %v2129 = vadd.f32 %v1896, %v2128
      %2130 = vmatmul.f32.gmra.mxu0 %v1409
      %v2131 = vpop.f32.mrf.mxu0
      %v2132 = vadd.f32 %v1899, %v2131
      %2133 = vmatmul.f32.gmra.mxu0 %v1412
      %v2134 = vpop.f32.mrf.mxu0
      %v2135 = vadd.f32 %v1902, %v2134
      %2136 = vmatmul.f32.gmra.mxu0 %v1415
      %v2137 = vpop.f32.mrf.mxu0
      %v2138 = vadd.f32 %v1905, %v2137
      %2139 = vmatmul.f32.gmra.mxu0 %v1418
      %v2140 = vpop.f32.mrf.mxu0
      %v2141 = vadd.f32 %v1908, %v2140
      %2142 = vmatmul.f32.gmra.mxu0 %v1421
      %v2143 = vpop.f32.mrf.mxu0
      %v2144 = vadd.f32 %v1911, %v2143
      %2145 = vmatmul.f32.gmra.mxu0 %v1424
      %v2146 = vpop.f32.mrf.mxu0
      %v2147 = vadd.f32 %v1914, %v2146
      %2148 = vmatmul.f32.gmra.mxu0 %v1427
      %v2149 = vpop.f32.mrf.mxu0
      %v2150 = vadd.f32 %v1917, %v2149
      %2151 = vmatmul.f32.gmra.mxu0 %v1430
      %v2152 = vpop.f32.mrf.mxu0
      %v2153 = vadd.f32 %v1920, %v2152
      %2154 = vmatmul.f32.gmra.mxu0 %v1433
      %v2155 = vpop.f32.mrf.mxu0
      %v2156 = vadd.f32 %v1923, %v2155
      %2157 = vmatmul.f32.gmra.mxu0 %v1436
      %v2158 = vpop.f32.mrf.mxu0
      %v2159 = vadd.f32 %v1926, %v2158
      %2160 = vmatmul.f32.gmra.mxu0 %v1439
      %v2161 = vpop.f32.mrf.mxu0
      %v2162 = vadd.f32 %v1929, %v2161
      %2163 = vmatmul.f32.gmra.mxu0 %v1442
      %v2164 = vpop.f32.mrf.mxu0
      %v2165 = vadd.f32 %v1932, %v2164
      %2166 = vmatmul.f32.gmra.mxu0 %v1445
      %v2167 = vpop.f32.mrf.mxu0
      %v2168 = vadd.f32 %v1935, %v2167
      %2169 = vmatmul.f32.gmra.mxu0 %v1448
      %v2170 = vpop.f32.mrf.mxu0
      %v2171 = vadd.f32 %v1938, %v2170
      %2172 = vmatmul.f32.gmra.mxu0 %v1451
      %v2173 = vpop.f32.mrf.mxu0
      %v2174 = vadd.f32 %v1941, %v2173
      %2175 = vmatmul.f32.gmra.mxu0 %v1454
      %v2176 = vpop.f32.mrf.mxu0
      %v2177 = vadd.f32 %v1944, %v2176
      %2178 = vmatmul.f32.gmra.mxu0 %v1457
      %v2179 = vpop.f32.mrf.mxu0
      %v2180 = vadd.f32 %v1947, %v2179
      %2181 = vmatmul.f32.gmra.mxu0 %v1460
      %v2182 = vpop.f32.mrf.mxu0
      %v2183 = vadd.f32 %v1950, %v2182
      %2184 = vdwg.mxu0
      %2185 = vmatpush.msra.mxu0 0.0
      %2186 = vmatpush.msra.mxu0 0.0
      %2187 = vmatpush.msra.mxu0 0.0
      %2188 = vmatpush.msra.mxu0 0.0
      %2189 = vmatpush.msra.mxu0 0.0
      %2190 = vmatpush.msra.mxu0 0.0
      %2191 = vmatpush.msra.mxu0 0.0
      %2192 = vmatpush.msra.mxu0 0.0
      %2193 = vmatpush.msra.mxu0 0.0
      %2194 = vmatpush.msra.mxu0 0.0
      %2195 = vmatpush.msra.mxu0 0.0
      %2196 = vmatpush.msra.mxu0 0.0
      %2197 = vmatpush.msra.mxu0 %v1497
      %2198 = vmatpush.msra.mxu0 %v1496
      %2199 = vmatpush.msra.mxu0 %v1495
      %2200 = vmatpush.msra.mxu0 %v1494
      %2201 = vmatmul.f32.gmra.mxu0 %v1504
      %v2202 = vpop.f32.mrf.mxu0
      %v2203 = vadd.f32 %v1970, %v2202
      %2204 = vmatmul.f32.gmra.mxu0 %v1507
      %v2205 = vpop.f32.mrf.mxu0
      %v2206 = vadd.f32 %v1973, %v2205
      %2207 = vmatmul.f32.gmra.mxu0 %v1510
      %v2208 = vpop.f32.mrf.mxu0
      %v2209 = vadd.f32 %v1976, %v2208
      %2210 = vmatmul.f32.gmra.mxu0 %v1513
      %v2211 = vpop.f32.mrf.mxu0
      %v2212 = vadd.f32 %v1979, %v2211
      %2213 = vmatmul.f32.gmra.mxu0 %v1516
      %v2214 = vpop.f32.mrf.mxu0
      %v2215 = vadd.f32 %v1982, %v2214
      %2216 = vmatmul.f32.gmra.mxu0 %v1519
      %v2217 = vpop.f32.mrf.mxu0
      %v2218 = vadd.f32 %v1985, %v2217
      %2219 = vmatmul.f32.gmra.mxu0 %v1522
      %v2220 = vpop.f32.mrf.mxu0
      %v2221 = vadd.f32 %v1988, %v2220
      %2222 = vmatmul.f32.gmra.mxu0 %v1525
      %v2223 = vpop.f32.mrf.mxu0
      %v2224 = vadd.f32 %v1991, %v2223
      %2225 = vmatmul.f32.gmra.mxu0 %v1528
      %v2226 = vpop.f32.mrf.mxu0
      %v2227 = vadd.f32 %v1994, %v2226
      %2228 = vmatmul.f32.gmra.mxu0 %v1531
      %v2229 = vpop.f32.mrf.mxu0
      %v2230 = vadd.f32 %v1997, %v2229
      %2231 = vmatmul.f32.gmra.mxu0 %v1534
      %v2232 = vpop.f32.mrf.mxu0
      %v2233 = vadd.f32 %v2000, %v2232
      %2234 = vmatmul.f32.gmra.mxu0 %v1537
      %v2235 = vpop.f32.mrf.mxu0
      %v2236 = vadd.f32 %v2003, %v2235
      %2237 = vmatmul.f32.gmra.mxu0 %v1540
      %v2238 = vpop.f32.mrf.mxu0
      %v2239 = vadd.f32 %v2006, %v2238
      %2240 = vmatmul.f32.gmra.mxu0 %v1543
      %v2241 = vpop.f32.mrf.mxu0
      %v2242 = vadd.f32 %v2009, %v2241
      %2243 = vmatmul.f32.gmra.mxu0 %v1546
      %v2244 = vpop.f32.mrf.mxu0
      %v2245 = vadd.f32 %v2012, %v2244
      %2246 = vmatmul.f32.gmra.mxu0 %v1549
      %v2247 = vpop.f32.mrf.mxu0
      %v2248 = vadd.f32 %v2015, %v2247
      %2249 = vmatmul.f32.gmra.mxu0 %v1552
      %v2250 = vpop.f32.mrf.mxu0
      %v2251 = vadd.f32 %v2018, %v2250
      %2252 = vmatmul.f32.gmra.mxu0 %v1555
      %v2253 = vpop.f32.mrf.mxu0
      %v2254 = vadd.f32 %v2021, %v2253
      %2255 = vmatmul.f32.gmra.mxu0 %v1558
      %v2256 = vpop.f32.mrf.mxu0
      %v2257 = vadd.f32 %v2024, %v2256
      %2258 = vmatmul.f32.gmra.mxu0 %v1561
      %v2259 = vpop.f32.mrf.mxu0
      %v2260 = vadd.f32 %v2027, %v2259
      %2261 = vmatmul.f32.gmra.mxu0 %v1564
      %v2262 = vpop.f32.mrf.mxu0
      %v2263 = vadd.f32 %v2030, %v2262
      %2264 = vmatmul.f32.gmra.mxu0 %v1567
      %v2265 = vpop.f32.mrf.mxu0
      %v2266 = vadd.f32 %v2033, %v2265
      %2267 = vmatmul.f32.gmra.mxu0 %v1570
      %v2268 = vpop.f32.mrf.mxu0
      %v2269 = vadd.f32 %v2036, %v2268
      %2270 = vmatmul.f32.gmra.mxu0 %v1573
      %v2271 = vpop.f32.mrf.mxu0
      %v2272 = vadd.f32 %v2039, %v2271
      %2273 = vmatmul.f32.gmra.mxu0 %v1576
      %v2274 = vpop.f32.mrf.mxu0
      %v2275 = vadd.f32 %v2042, %v2274
      %2276 = vmatmul.f32.gmra.mxu0 %v1579
      %v2277 = vpop.f32.mrf.mxu0
      %v2278 = vadd.f32 %v2045, %v2277
      %2279 = vmatmul.f32.gmra.mxu0 %v1582
      %v2280 = vpop.f32.mrf.mxu0
      %v2281 = vadd.f32 %v2048, %v2280
      %2282 = vmatmul.f32.gmra.mxu0 %v1585
      %v2283 = vpop.f32.mrf.mxu0
      %v2284 = vadd.f32 %v2051, %v2283
      %2285 = vmatmul.f32.gmra.mxu0 %v1588
      %v2286 = vpop.f32.mrf.mxu0
      %v2287 = vadd.f32 %v2054, %v2286
      %2288 = vmatmul.f32.gmra.mxu0 %v1591
      %v2289 = vpop.f32.mrf.mxu0
      %v2290 = vadd.f32 %v2057, %v2289
      %2291 = vmatmul.f32.gmra.mxu0 %v1594
      %v2292 = vpop.f32.mrf.mxu0
      %v2293 = vadd.f32 %v2060, %v2292
      %2294 = vmatmul.f32.gmra.mxu0 %v1597
      %v2295 = vpop.f32.mrf.mxu0
      %v2296 = vadd.f32 %v2063, %v2295
      %2297 = vmatmul.f32.gmra.mxu0 %v1600
      %v2298 = vpop.f32.mrf.mxu0
      %v2299 = vadd.f32 %v2066, %v2298
      %2300 = vmatmul.f32.gmra.mxu0 %v1603
      %v2301 = vpop.f32.mrf.mxu0
      %v2302 = vadd.f32 %v2069, %v2301
      %2303 = vmatmul.f32.gmra.mxu0 %v1606
      %v2304 = vpop.f32.mrf.mxu0
      %v2305 = vadd.f32 %v2072, %v2304
      %2306 = vmatmul.f32.gmra.mxu0 %v1609
      %v2307 = vpop.f32.mrf.mxu0
      %v2308 = vadd.f32 %v2075, %v2307
      %2309 = vmatmul.f32.gmra.mxu0 %v1612
      %v2310 = vpop.f32.mrf.mxu0
      %v2311 = vadd.f32 %v2078, %v2310
      %2312 = vmatmul.f32.gmra.mxu0 %v1615
      %v2313 = vpop.f32.mrf.mxu0
      %v2314 = vadd.f32 %v2081, %v2313
      %2315 = vmatmul.f32.gmra.mxu0 %v1618
      %v2316 = vpop.f32.mrf.mxu0
      %v2317 = vadd.f32 %v2084, %v2316
      %2318 = vmatmul.f32.gmra.mxu0 %v1621
      %v2319 = vpop.f32.mrf.mxu0
      %v2320 = vadd.f32 %v2087, %v2319
      %2321 = vmatmul.f32.gmra.mxu0 %v1624
      %v2322 = vpop.f32.mrf.mxu0
      %v2323 = vadd.f32 %v2090, %v2322
      %2324 = vmatmul.f32.gmra.mxu0 %v1627
      %v2325 = vpop.f32.mrf.mxu0
      %v2326 = vadd.f32 %v2093, %v2325
      %2327 = vmatmul.f32.gmra.mxu0 %v1630
      %v2328 = vpop.f32.mrf.mxu0
      %v2329 = vadd.f32 %v2096, %v2328
      %2330 = vmatmul.f32.gmra.mxu0 %v1633
      %v2331 = vpop.f32.mrf.mxu0
      %v2332 = vadd.f32 %v2099, %v2331
      %2333 = vmatmul.f32.gmra.mxu0 %v1636
      %v2334 = vpop.f32.mrf.mxu0
      %v2335 = vadd.f32 %v2102, %v2334
      %2336 = vmatmul.f32.gmra.mxu0 %v1639
      %v2337 = vpop.f32.mrf.mxu0
      %v2338 = vadd.f32 %v2105, %v2337
      %2339 = vmatmul.f32.gmra.mxu0 %v1642
      %v2340 = vpop.f32.mrf.mxu0
      %v2341 = vadd.f32 %v2108, %v2340
      %2342 = vmatmul.f32.gmra.mxu0 %v1645
      %v2343 = vpop.f32.mrf.mxu0
      %v2344 = vadd.f32 %v2111, %v2343
      %2345 = vmatmul.f32.gmra.mxu0 %v1648
      %v2346 = vpop.f32.mrf.mxu0
      %v2347 = vadd.f32 %v2114, %v2346
      %2348 = vmatmul.f32.gmra.mxu0 %v1651
      %v2349 = vpop.f32.mrf.mxu0
      %v2350 = vadd.f32 %v2117, %v2349
      %2351 = vmatmul.f32.gmra.mxu0 %v1654
      %v2352 = vpop.f32.mrf.mxu0
      %v2353 = vadd.f32 %v2120, %v2352
      %2354 = vmatmul.f32.gmra.mxu0 %v1657
      %v2355 = vpop.f32.mrf.mxu0
      %v2356 = vadd.f32 %v2123, %v2355
      %2357 = vmatmul.f32.gmra.mxu0 %v1660
      %v2358 = vpop.f32.mrf.mxu0
      %v2359 = vadd.f32 %v2126, %v2358
      %2360 = vmatmul.f32.gmra.mxu0 %v1663
      %v2361 = vpop.f32.mrf.mxu0
      %v2362 = vadd.f32 %v2129, %v2361
      %2363 = vmatmul.f32.gmra.mxu0 %v1666
      %v2364 = vpop.f32.mrf.mxu0
      %v2365 = vadd.f32 %v2132, %v2364
      %2366 = vmatmul.f32.gmra.mxu0 %v1669
      %v2367 = vpop.f32.mrf.mxu0
      %v2368 = vadd.f32 %v2135, %v2367
      %2369 = vmatmul.f32.gmra.mxu0 %v1672
      %v2370 = vpop.f32.mrf.mxu0
      %v2371 = vadd.f32 %v2138, %v2370
      %2372 = vmatmul.f32.gmra.mxu0 %v1675
      %v2373 = vpop.f32.mrf.mxu0
      %v2374 = vadd.f32 %v2141, %v2373
      %2375 = vmatmul.f32.gmra.mxu0 %v1678
      %v2376 = vpop.f32.mrf.mxu0
      %v2377 = vadd.f32 %v2144, %v2376
      %2378 = vmatmul.f32.gmra.mxu0 %v1681
      %v2379 = vpop.f32.mrf.mxu0
      %v2380 = vadd.f32 %v2147, %v2379
      %2381 = vmatmul.f32.gmra.mxu0 %v1684
      %v2382 = vpop.f32.mrf.mxu0
      %v2383 = vadd.f32 %v2150, %v2382
      %2384 = vmatmul.f32.gmra.mxu0 %v1687
      %v2385 = vpop.f32.mrf.mxu0
      %v2386 = vadd.f32 %v2153, %v2385
      %2387 = vmatmul.f32.gmra.mxu0 %v1690
      %v2388 = vpop.f32.mrf.mxu0
      %v2389 = vadd.f32 %v2156, %v2388
      %2390 = vmatmul.f32.gmra.mxu0 %v1693
      %v2391 = vpop.f32.mrf.mxu0
      %v2392 = vadd.f32 %v2159, %v2391
      %2393 = vmatmul.f32.gmra.mxu0 %v1696
      %v2394 = vpop.f32.mrf.mxu0
      %v2395 = vadd.f32 %v2162, %v2394
      %2396 = vmatmul.f32.gmra.mxu0 %v1699
      %v2397 = vpop.f32.mrf.mxu0
      %v2398 = vadd.f32 %v2165, %v2397
      %2399 = vmatmul.f32.gmra.mxu0 %v1702
      %v2400 = vpop.f32.mrf.mxu0
      %v2401 = vadd.f32 %v2168, %v2400
      %2402 = vmatmul.f32.gmra.mxu0 %v1705
      %v2403 = vpop.f32.mrf.mxu0
      %v2404 = vadd.f32 %v2171, %v2403
      %2405 = vmatmul.f32.gmra.mxu0 %v1708
      %v2406 = vpop.f32.mrf.mxu0
      %v2407 = vadd.f32 %v2174, %v2406
      %2408 = vmatmul.f32.gmra.mxu0 %v1711
      %v2409 = vpop.f32.mrf.mxu0
      %v2410 = vadd.f32 %v2177, %v2409
      %2411 = vmatmul.f32.gmra.mxu0 %v1714
      %v2412 = vpop.f32.mrf.mxu0
      %v2413 = vadd.f32 %v2180, %v2412
      %2414 = vmatmul.f32.gmra.mxu0 %v1717
      %v2415 = vpop.f32.mrf.mxu0
      %v2416 = vadd.f32 %v2183, %v2415
      %2417 = vdwg.mxu0
      %v2418 = vmax.f32 %v2203, 0.0
      %v2419 = vmax.f32 %v2206, 0.0
      %v2420 = vmax.f32 %v2209, 0.0
      %v2421 = vmax.f32 %v2212, 0.0
      %v2422 = vmax.f32 %v2215, 0.0
      %v2423 = vmax.f32 %v2218, 0.0
      %v2424 = vmax.f32 %v2221, 0.0
      %v2425 = vmax.f32 %v2224, 0.0
      %v2426 = vmax.f32 %v2227, 0.0
      %v2427 = vmax.f32 %v2230, 0.0
      %v2428 = vmax.f32 %v2233, 0.0
      %v2429 = vmax.f32 %v2236, 0.0
      %v2430 = vmax.f32 %v2239, 0.0
      %v2431 = vmax.f32 %v2242, 0.0
      %v2432 = vmax.f32 %v2245, 0.0
      %v2433 = vmax.f32 %v2248, 0.0
      %v2434 = vmax.f32 %v2251, 0.0
      %v2435 = vmax.f32 %v2254, 0.0
      %v2436 = vmax.f32 %v2257, 0.0
      %v2437 = vmax.f32 %v2260, 0.0
      %v2438 = vmax.f32 %v2263, 0.0
      %v2439 = vmax.f32 %v2266, 0.0
      %v2440 = vmax.f32 %v2269, 0.0
      %v2441 = vmax.f32 %v2272, 0.0
      %v2442 = vmax.f32 %v2275, 0.0
      %v2443 = vmax.f32 %v2278, 0.0
      %v2444 = vmax.f32 %v2281, 0.0
      %v2445 = vmax.f32 %v2284, 0.0
      %v2446 = vmax.f32 %v2287, 0.0
      %v2447 = vmax.f32 %v2290, 0.0
      %v2448 = vmax.f32 %v2293, 0.0
      %v2449 = vmax.f32 %v2296, 0.0
      %v2450 = vmax.f32 %v2299, 0.0
      %v2451 = vmax.f32 %v2302, 0.0
      %v2452 = vmax.f32 %v2305, 0.0
      %v2453 = vmax.f32 %v2308, 0.0
      %v2454 = vmax.f32 %v2311, 0.0
      %v2455 = vmax.f32 %v2314, 0.0
      %v2456 = vmax.f32 %v2317, 0.0
      %v2457 = vmax.f32 %v2320, 0.0
      %v2458 = vmax.f32 %v2323, 0.0
      %v2459 = vmax.f32 %v2326, 0.0
      %v2460 = vmax.f32 %v2329, 0.0
      %v2461 = vmax.f32 %v2332, 0.0
      %v2462 = vmax.f32 %v2335, 0.0
      %v2463 = vmax.f32 %v2338, 0.0
      %v2464 = vmax.f32 %v2341, 0.0
      %v2465 = vmax.f32 %v2344, 0.0
      %v2466 = vmax.f32 %v2347, 0.0
      %v2467 = vmax.f32 %v2350, 0.0
      %v2468 = vmax.f32 %v2353, 0.0
      %v2469 = vmax.f32 %v2356, 0.0
      %v2470 = vmax.f32 %v2359, 0.0
      %v2471 = vmax.f32 %v2362, 0.0
      %v2472 = vmax.f32 %v2365, 0.0
      %v2473 = vmax.f32 %v2368, 0.0
      %v2474 = vmax.f32 %v2371, 0.0
      %v2475 = vmax.f32 %v2374, 0.0
      %v2476 = vmax.f32 %v2377, 0.0
      %v2477 = vmax.f32 %v2380, 0.0
      %v2478 = vmax.f32 %v2383, 0.0
      %v2479 = vmax.f32 %v2386, 0.0
      %v2480 = vmax.f32 %v2389, 0.0
      %v2481 = vmax.f32 %v2392, 0.0
      %v2482 = vmax.f32 %v2395, 0.0
      %v2483 = vmax.f32 %v2398, 0.0
      %v2484 = vmax.f32 %v2401, 0.0
      %v2485 = vmax.f32 %v2404, 0.0
      %v2486 = vmax.f32 %v2407, 0.0
      %v2487 = vmax.f32 %v2410, 0.0
      %v2488 = vmax.f32 %v2413, 0.0
      %v2489 = vmax.f32 %v2416, 0.0
      %v2490 = vmax.f32 %v2418, %v2436
      %v2491 = vmax.f32 %v2419, %v2437
      %v2492 = vmax.f32 %v2420, %v2438
      %v2493 = vmax.f32 %v2421, %v2439
      %v2494 = vmax.f32 %v2422, %v2440
      %v2495 = vmax.f32 %v2423, %v2441
      %v2496 = vmax.f32 %v2424, %v2442
      %v2497 = vmax.f32 %v2425, %v2443
      %v2498 = vmax.f32 %v2426, %v2444
      %v2499 = vmax.f32 %v2427, %v2445
      %v2500 = vmax.f32 %v2428, %v2446
      %v2501 = vmax.f32 %v2429, %v2447
      %v2502 = vmax.f32 %v2430, %v2448
      %v2503 = vmax.f32 %v2431, %v2449
      %v2504 = vmax.f32 %v2432, %v2450
      %v2505 = vmax.f32 %v2433, %v2451
      %v2506 = vmax.f32 %v2434, %v2452
      %v2507 = vmax.f32 %v2435, %v2453
      %v2508 = vmax.f32 %v2454, %v2472
      %v2509 = vmax.f32 %v2455, %v2473
      %v2510 = vmax.f32 %v2456, %v2474
      %v2511 = vmax.f32 %v2457, %v2475
      %v2512 = vmax.f32 %v2458, %v2476
      %v2513 = vmax.f32 %v2459, %v2477
      %v2514 = vmax.f32 %v2460, %v2478
      %v2515 = vmax.f32 %v2461, %v2479
      %v2516 = vmax.f32 %v2462, %v2480
      %v2517 = vmax.f32 %v2463, %v2481
      %v2518 = vmax.f32 %v2464, %v2482
      %v2519 = vmax.f32 %v2465, %v2483
      %v2520 = vmax.f32 %v2466, %v2484
      %v2521 = vmax.f32 %v2467, %v2485
      %v2522 = vmax.f32 %v2468, %v2486
      %v2523 = vmax.f32 %v2469, %v2487
      %v2524 = vmax.f32 %v2470, %v2488
      %v2525 = vmax.f32 %v2471, %v2489
      %v2526 = vmax.f32 %v2490, %v2508
      %v2527 = vmax.f32 %v2491, %v2509
      %v2528 = vmax.f32 %v2492, %v2510
      %v2529 = vmax.f32 %v2493, %v2511
      %v2530 = vmax.f32 %v2494, %v2512
      %v2531 = vmax.f32 %v2495, %v2513
      %v2532 = vmax.f32 %v2496, %v2514
      %v2533 = vmax.f32 %v2497, %v2515
      %v2534 = vmax.f32 %v2498, %v2516
      %v2535 = vmax.f32 %v2499, %v2517
      %v2536 = vmax.f32 %v2500, %v2518
      %v2537 = vmax.f32 %v2501, %v2519
      %v2538 = vmax.f32 %v2502, %v2520
      %v2539 = vmax.f32 %v2503, %v2521
      %v2540 = vmax.f32 %v2504, %v2522
      %v2541 = vmax.f32 %v2505, %v2523
      %v2542 = vmax.f32 %v2506, %v2524
      %v2543 = vmax.f32 %v2507, %v2525
      %vm2544 = vcmask 523264
      %2545 = vst.msk [vmem:[%s226] sm:$0xff] %vm2544, %v2526
      %2546 = vst.msk [vmem:[%s226 + $0x8] sm:$0xff] %vm2544, %v2527
      %2547 = vst.msk [vmem:[%s226 + $0x10] sm:$0xff] %vm2544, %v2528
      %2548 = vst.msk [vmem:[%s226 + $0x18] sm:$0xff] %vm2544, %v2529
      %2549 = vst.msk [vmem:[%s226 + $0x20] sm:$0xff] %vm2544, %v2530
      %2550 = vst.msk [vmem:[%s226 + $0x28] sm:$0xff] %vm2544, %v2531
      %2551 = vst.msk [vmem:[%s226 + $0x30] sm:$0xff] %vm2544, %v2532
      %2552 = vst.msk [vmem:[%s226 + $0x38] sm:$0xff] %vm2544, %v2533
      %2553 = vst.msk [vmem:[%s226 + $0x40] sm:$0xff] %vm2544, %v2534
      %2554 = vst.msk [vmem:[%s226 + $0x48] sm:$0xff] %vm2544, %v2535
      %2555 = vst.msk [vmem:[%s226 + $0x50] sm:$0xff] %vm2544, %v2536
      %2556 = vst.msk [vmem:[%s226 + $0x58] sm:$0xff] %vm2544, %v2537
      %2557 = vst.msk [vmem:[%s226 + $0x60] sm:$0xff] %vm2544, %v2538
      %2558 = vst.msk [vmem:[%s226 + $0x68] sm:$0xff] %vm2544, %v2539
      %2559 = vst.msk [vmem:[%s226 + $0x70] sm:$0xff] %vm2544, %v2540
      %2560 = vst.msk [vmem:[%s226 + $0x78] sm:$0xff] %vm2544, %v2541
      %2561 = vst.msk [vmem:[%s226 + $0x80] sm:$0xff] %vm2544, %v2542
      %2562 = vst.msk [vmem:[%s226 + $0x88] sm:$0xff] %vm2544, %v2543
      %s2563 = smul.u32 18, %s16
      %p2564 = scmp.lt.s32.totalorder %s2563, 35
      %s2565 = scalar_select %p2564, %s2563, 35
      %s2566 = smul.addr %s2565, 8
      %s2567 = scalar_lea.vmem %s5, %s2566
      // Predicated region
      $region41: #{net_forward.2} parent=39 // pred_check
        %p2568 = pneg %p144
      $region42: #{net_forward.2} parent=39 // pred_check_branch
        %2570 = sbr.rel (%p2568) target = $region44
      $region43: #{net_forward.2} parent=39 // pred_region
        %s2571 = smul.u32 18, %s16
      $region44: #{net_forward.2} parent=39 // pred_fallthru
        _
    $region40: #{net_forward.2} parent=5 // pred_fallthru
      _
    %p2572 = scmp.le.s32.totalorder 2, %s11
    // Predicated region
    $region45: #{net_forward.2} parent=5 // pred_check
      %p2573 = pneg %p2572
    $region46: #{net_forward.2} parent=5 // pred_check_branch
      %2575 = sbr.rel (%p2573) target = $region48
    $region47: #{net_forward.2} parent=5 // pred_region
      %s2576 = ssub.s32 %s11, 2
      // Predicated region
      $region49: #{net_forward.2} parent=47 // pred_check
        %p2577 = pneg %p150
      $region50: #{net_forward.2} parent=47 // pred_check_branch
        %2579 = sbr.rel (%p2577) target = $region52
      $region51: #{net_forward.2} parent=47 // pred_region
        %s2580 = smul.u32 18, %s17
        %p2581 = scmp.lt.s32.totalorder %s2580, 35
        %s2582 = scalar_select %p2581, %s2580, 35
        %s2583 = smul.addr %s2582, 8
        %s2584 = scalar_lea.vmem %s5, %s2583
      $region52: #{net_forward.2} parent=47 // pred_fallthru
        _
    $region48: #{net_forward.2} parent=5 // pred_fallthru
      _
  $region6: #{net_forward.2} parent=0 // loop_footer
    %s15 = sadd.s32 1, %s11
  $region7: #{net_forward.2} parent=0 // loop_footer_branch
    %10 = sbr.rel target = $region3
  $region8: #{net_forward.2} parent=0 // loop_exit
    _

// kernel: net_forward.3
$region0: #{net_forward.3}
  #allocation0 [shape = 'u32[]', space=smem, size = 0x4, offset = 0x4, fixed_abs, tag = 'smem constant byte address 0x4 - core index']
  #allocation1 [shape = 'u32[72,128]{1,0:T(1,128)}', space=vmem, size = 0x9000, scoped, tag = 'internal scratch']
  %s0 = inlined_call_operand.vmem [shape: f32[8,9216], index: 0, kind: input, shape index: {}]
  %s1 = inlined_call_operand.vmem [shape: f32[9216,128], index: 1, kind: input, shape index: {}]
  %s2 = inlined_call_operand.vmem [shape: f32[1,128], index: 2, kind: input, shape index: {}]
  %s3 = inlined_call_operand.vmem [shape: f32[128,10], index: 3, kind: input, shape index: {}]
  %s4 = inlined_call_operand.vmem [shape: f32[1,10], index: 4, kind: input, shape index: {}]
  %s5 = inlined_call_operand.vmem [shape: f32[8,10], index: 5, kind: output, shape index: {}]
  %s6 = sld [smem:[#allocation0]]
  $region30: #{net_forward.3} parent=0
    _
  %s8 = ssub.s32 1, %s6
  %s9 = scalar_select 0, %s8, %s6
  // Predicated region
  $region2: #{net_forward.3} parent=0 // pred_check
    _
  $region3: #{net_forward.3} parent=0 // pred_check_branch
    %11 = sbr.rel (0) target = $region5
  $region4: #{net_forward.3} parent=0 // pred_region
    _
  $region5: #{net_forward.3} parent=0 // pred_fallthru
    _
  // Predicated region
  $region6: #{net_forward.3} parent=0 // pred_check
    _
  $region7: #{net_forward.3} parent=0 // pred_check_branch
    %13 = sbr.rel (0) target = $region9
  $region8: #{net_forward.3} parent=0 // pred_region
    _
  $region9: #{net_forward.3} parent=0 // pred_fallthru
    _
  // Predicated region
  $region10: #{net_forward.3} parent=0 // pred_check
    _
  $region11: #{net_forward.3} parent=0 // pred_check_branch
    %15 = sbr.rel (0) target = $region13
  $region12: #{net_forward.3} parent=0 // pred_region
    _
  $region13: #{net_forward.3} parent=0 // pred_fallthru
    _
  // Predicated region
  $region14: #{net_forward.3} parent=0 // pred_check
    _
  $region15: #{net_forward.3} parent=0 // pred_check_branch
    %17 = sbr.rel (0) target = $region17
  $region16: #{net_forward.3} parent=0 // pred_region
    _
  $region17: #{net_forward.3} parent=0 // pred_fallthru
    _
  // Predicated region
  $region18: #{net_forward.3} parent=0 // pred_check
    _
  $region19: #{net_forward.3} parent=0 // pred_check_branch
    %19 = sbr.rel (0) target = $region21
  $region20: #{net_forward.3} parent=0 // pred_region
    _
  $region21: #{net_forward.3} parent=0 // pred_fallthru
    _
  %v20 = vld [vmem:[%s0] sm:$0xff]
  %v21 = vld [vmem:[%s0 + $0x8] sm:$0xff]
  %v22 = vld [vmem:[%s0 + $0x10] sm:$0xff]
  %v23 = vld [vmem:[%s0 + $0x18] sm:$0xff]
  %v24 = vld [vmem:[%s0 + $0x20] sm:$0xff]
  %v25 = vld [vmem:[%s0 + $0x28] sm:$0xff]
  %v26 = vld [vmem:[%s0 + $0x30] sm:$0xff]
  %v27 = vld [vmem:[%s0 + $0x38] sm:$0xff]
  %v28 = vld [vmem:[%s0 + $0x40] sm:$0xff]
  %v29 = vld [vmem:[%s0 + $0x48] sm:$0xff]
  %v30 = vld [vmem:[%s0 + $0x50] sm:$0xff]
  %v31 = vld [vmem:[%s0 + $0x58] sm:$0xff]
  %v32 = vld [vmem:[%s0 + $0x60] sm:$0xff]
  %v33 = vld [vmem:[%s0 + $0x68] sm:$0xff]
  %v34 = vld [vmem:[%s0 + $0x70] sm:$0xff]
  %v35 = vld [vmem:[%s0 + $0x78] sm:$0xff]
  %v36 = vld [vmem:[%s0 + $0x80] sm:$0xff]
  %v37 = vld [vmem:[%s0 + $0x88] sm:$0xff]
  %v38 = vld [vmem:[%s0 + $0x90] sm:$0xff]
  %v39 = vld [vmem:[%s0 + $0x98] sm:$0xff]
  %v40 = vld [vmem:[%s0 + $0xa0] sm:$0xff]
  %v41 = vld [vmem:[%s0 + $0xa8] sm:$0xff]
  %v42 = vld [vmem:[%s0 + $0xb0] sm:$0xff]
  %v43 = vld [vmem:[%s0 + $0xb8] sm:$0xff]
  %v44 = vld [vmem:[%s0 + $0xc0] sm:$0xff]
  %v45 = vld [vmem:[%s0 + $0xc8] sm:$0xff]
  %v46 = vld [vmem:[%s0 + $0xd0] sm:$0xff]
  %v47 = vld [vmem:[%s0 + $0xd8] sm:$0xff]
  %v48 = vld [vmem:[%s0 + $0xe0] sm:$0xff]
  %v49 = vld [vmem:[%s0 + $0xe8] sm:$0xff]
  %v50 = vld [vmem:[%s0 + $0xf0] sm:$0xff]
  %v51 = vld [vmem:[%s0 + $0xf8] sm:$0xff]
  %v52 = vld [vmem:[%s0 + $0x100] sm:$0xff]
  %v53 = vld [vmem:[%s0 + $0x108] sm:$0xff]
  %v54 = vld [vmem:[%s0 + $0x110] sm:$0xff]
  %v55 = vld [vmem:[%s0 + $0x118] sm:$0xff]
  %v56 = vld [vmem:[%s0 + $0x120] sm:$0xff]
  %v57 = vld [vmem:[%s0 + $0x128] sm:$0xff]
  %v58 = vld [vmem:[%s0 + $0x130] sm:$0xff]
  %v59 = vld [vmem:[%s0 + $0x138] sm:$0xff]
  %v60 = vld [vmem:[%s0 + $0x140] sm:$0xff]
  %v61 = vld [vmem:[%s0 + $0x148] sm:$0xff]
  %v62 = vld [vmem:[%s0 + $0x150] sm:$0xff]
  %v63 = vld [vmem:[%s0 + $0x158] sm:$0xff]
  %v64 = vld [vmem:[%s0 + $0x160] sm:$0xff]
  %v65 = vld [vmem:[%s0 + $0x168] sm:$0xff]
  %v66 = vld [vmem:[%s0 + $0x170] sm:$0xff]
  %v67 = vld [vmem:[%s0 + $0x178] sm:$0xff]
  %v68 = vld [vmem:[%s0 + $0x180] sm:$0xff]
  %v69 = vld [vmem:[%s0 + $0x188] sm:$0xff]
  %v70 = vld [vmem:[%s0 + $0x190] sm:$0xff]
  %v71 = vld [vmem:[%s0 + $0x198] sm:$0xff]
  %v72 = vld [vmem:[%s0 + $0x1a0] sm:$0xff]
  %v73 = vld [vmem:[%s0 + $0x1a8] sm:$0xff]
  %v74 = vld [vmem:[%s0 + $0x1b0] sm:$0xff]
  %v75 = vld [vmem:[%s0 + $0x1b8] sm:$0xff]
  %v76 = vld [vmem:[%s0 + $0x1c0] sm:$0xff]
  %v77 = vld [vmem:[%s0 + $0x1c8] sm:$0xff]
  %v78 = vld [vmem:[%s0 + $0x1d0] sm:$0xff]
  %v79 = vld [vmem:[%s0 + $0x1d8] sm:$0xff]
  %v80 = vld [vmem:[%s0 + $0x1e0] sm:$0xff]
  %v81 = vld [vmem:[%s0 + $0x1e8] sm:$0xff]
  %v82 = vld [vmem:[%s0 + $0x1f0] sm:$0xff]
  %v83 = vld [vmem:[%s0 + $0x1f8] sm:$0xff]
  %v84 = vld [vmem:[%s0 + $0x200] sm:$0xff]
  %v85 = vld [vmem:[%s0 + $0x208] sm:$0xff]
  %v86 = vld [vmem:[%s0 + $0x210] sm:$0xff]
  %v87 = vld [vmem:[%s0 + $0x218] sm:$0xff]
  %v88 = vld [vmem:[%s0 + $0x220] sm:$0xff]
  %v89 = vld [vmem:[%s0 + $0x228] sm:$0xff]
  %v90 = vld [vmem:[%s0 + $0x230] sm:$0xff]
  %v91 = vld [vmem:[%s0 + $0x238] sm:$0xff]
  %v92 = vld [vmem:[%s1] sm:$0xff]
  %v93 = vld [vmem:[%s1 + $0x8] sm:$0xff]
  %v94 = vld [vmem:[%s1 + $0x10] sm:$0xff]
  %v95 = vld [vmem:[%s1 + $0x18] sm:$0xff]
  %v96 = vld [vmem:[%s1 + $0x20] sm:$0xff]
  %v97 = vld [vmem:[%s1 + $0x28] sm:$0xff]
  %v98 = vld [vmem:[%s1 + $0x30] sm:$0xff]
  %v99 = vld [vmem:[%s1 + $0x38] sm:$0xff]
  %v100 = vld [vmem:[%s1 + $0x40] sm:$0xff]
  %v101 = vld [vmem:[%s1 + $0x48] sm:$0xff]
  %v102 = vld [vmem:[%s1 + $0x50] sm:$0xff]
  %v103 = vld [vmem:[%s1 + $0x58] sm:$0xff]
  %v104 = vld [vmem:[%s1 + $0x60] sm:$0xff]
  %v105 = vld [vmem:[%s1 + $0x68] sm:$0xff]
  %v106 = vld [vmem:[%s1 + $0x70] sm:$0xff]
  %v107 = vld [vmem:[%s1 + $0x78] sm:$0xff]
  %v108 = vld [vmem:[%s1 + $0x80] sm:$0xff]
  %v109 = vld [vmem:[%s1 + $0x88] sm:$0xff]
  %v110 = vld [vmem:[%s1 + $0x90] sm:$0xff]
  %v111 = vld [vmem:[%s1 + $0x98] sm:$0xff]
  %v112 = vld [vmem:[%s1 + $0xa0] sm:$0xff]
  %v113 = vld [vmem:[%s1 + $0xa8] sm:$0xff]
  %v114 = vld [vmem:[%s1 + $0xb0] sm:$0xff]
  %v115 = vld [vmem:[%s1 + $0xb8] sm:$0xff]
  %v116 = vld [vmem:[%s1 + $0xc0] sm:$0xff]
  %v117 = vld [vmem:[%s1 + $0xc8] sm:$0xff]
  %v118 = vld [vmem:[%s1 + $0xd0] sm:$0xff]
  %v119 = vld [vmem:[%s1 + $0xd8] sm:$0xff]
  %v120 = vld [vmem:[%s1 + $0xe0] sm:$0xff]
  %v121 = vld [vmem:[%s1 + $0xe8] sm:$0xff]
  %v122 = vld [vmem:[%s1 + $0xf0] sm:$0xff]
  %v123 = vld [vmem:[%s1 + $0xf8] sm:$0xff]
  %v124 = vld [vmem:[%s1 + $0x100] sm:$0xff]
  %v125 = vld [vmem:[%s1 + $0x108] sm:$0xff]
  %v126 = vld [vmem:[%s1 + $0x110] sm:$0xff]
  %v127 = vld [vmem:[%s1 + $0x118] sm:$0xff]
  %v128 = vld [vmem:[%s1 + $0x120] sm:$0xff]
  %v129 = vld [vmem:[%s1 + $0x128] sm:$0xff]
  %v130 = vld [vmem:[%s1 + $0x130] sm:$0xff]
  %v131 = vld [vmem:[%s1 + $0x138] sm:$0xff]
  %v132 = vld [vmem:[%s1 + $0x140] sm:$0xff]
  %v133 = vld [vmem:[%s1 + $0x148] sm:$0xff]
  %v134 = vld [vmem:[%s1 + $0x150] sm:$0xff]
  %v135 = vld [vmem:[%s1 + $0x158] sm:$0xff]
  %v136 = vld [vmem:[%s1 + $0x160] sm:$0xff]
  %v137 = vld [vmem:[%s1 + $0x168] sm:$0xff]
  %v138 = vld [vmem:[%s1 + $0x170] sm:$0xff]
  %v139 = vld [vmem:[%s1 + $0x178] sm:$0xff]
  %v140 = vld [vmem:[%s1 + $0x180] sm:$0xff]
  %v141 = vld [vmem:[%s1 + $0x188] sm:$0xff]
  %v142 = vld [vmem:[%s1 + $0x190] sm:$0xff]
  %v143 = vld [vmem:[%s1 + $0x198] sm:$0xff]
  %v144 = vld [vmem:[%s1 + $0x1a0] sm:$0xff]
  %v145 = vld [vmem:[%s1 + $0x1a8] sm:$0xff]
  %v146 = vld [vmem:[%s1 + $0x1b0] sm:$0xff]
  %v147 = vld [vmem:[%s1 + $0x1b8] sm:$0xff]
  %v148 = vld [vmem:[%s1 + $0x1c0] sm:$0xff]
  %v149 = vld [vmem:[%s1 + $0x1c8] sm:$0xff]
  %v150 = vld [vmem:[%s1 + $0x1d0] sm:$0xff]
  %v151 = vld [vmem:[%s1 + $0x1d8] sm:$0xff]
  %v152 = vld [vmem:[%s1 + $0x1e0] sm:$0xff]
  %v153 = vld [vmem:[%s1 + $0x1e8] sm:$0xff]
  %v154 = vld [vmem:[%s1 + $0x1f0] sm:$0xff]
  %v155 = vld [vmem:[%s1 + $0x1f8] sm:$0xff]
  %v156 = vld [vmem:[%s1 + $0x200] sm:$0xff]
  %v157 = vld [vmem:[%s1 + $0x208] sm:$0xff]
  %v158 = vld [vmem:[%s1 + $0x210] sm:$0xff]
  %v159 = vld [vmem:[%s1 + $0x218] sm:$0xff]
  %v160 = vld [vmem:[%s1 + $0x220] sm:$0xff]
  %v161 = vld [vmem:[%s1 + $0x228] sm:$0xff]
  %v162 = vld [vmem:[%s1 + $0x230] sm:$0xff]
  %v163 = vld [vmem:[%s1 + $0x238] sm:$0xff]
  %v164 = vld [vmem:[%s1 + $0x240] sm:$0xff]
  %v165 = vld [vmem:[%s1 + $0x248] sm:$0xff]
  %v166 = vld [vmem:[%s1 + $0x250] sm:$0xff]
  %v167 = vld [vmem:[%s1 + $0x258] sm:$0xff]
  %v168 = vld [vmem:[%s1 + $0x260] sm:$0xff]
  %v169 = vld [vmem:[%s1 + $0x268] sm:$0xff]
  %v170 = vld [vmem:[%s1 + $0x270] sm:$0xff]
  %v171 = vld [vmem:[%s1 + $0x278] sm:$0xff]
  %v172 = vld [vmem:[%s1 + $0x280] sm:$0xff]
  %v173 = vld [vmem:[%s1 + $0x288] sm:$0xff]
  %v174 = vld [vmem:[%s1 + $0x290] sm:$0xff]
  %v175 = vld [vmem:[%s1 + $0x298] sm:$0xff]
  %v176 = vld [vmem:[%s1 + $0x2a0] sm:$0xff]
  %v177 = vld [vmem:[%s1 + $0x2a8] sm:$0xff]
  %v178 = vld [vmem:[%s1 + $0x2b0] sm:$0xff]
  %v179 = vld [vmem:[%s1 + $0x2b8] sm:$0xff]
  %v180 = vld [vmem:[%s1 + $0x2c0] sm:$0xff]
  %v181 = vld [vmem:[%s1 + $0x2c8] sm:$0xff]
  %v182 = vld [vmem:[%s1 + $0x2d0] sm:$0xff]
  %v183 = vld [vmem:[%s1 + $0x2d8] sm:$0xff]
  %v184 = vld [vmem:[%s1 + $0x2e0] sm:$0xff]
  %v185 = vld [vmem:[%s1 + $0x2e8] sm:$0xff]
  %v186 = vld [vmem:[%s1 + $0x2f0] sm:$0xff]
  %v187 = vld [vmem:[%s1 + $0x2f8] sm:$0xff]
  %v188 = vld [vmem:[%s1 + $0x300] sm:$0xff]
  %v189 = vld [vmem:[%s1 + $0x308] sm:$0xff]
  %v190 = vld [vmem:[%s1 + $0x310] sm:$0xff]
  %v191 = vld [vmem:[%s1 + $0x318] sm:$0xff]
  %v192 = vld [vmem:[%s1 + $0x320] sm:$0xff]
  %v193 = vld [vmem:[%s1 + $0x328] sm:$0xff]
  %v194 = vld [vmem:[%s1 + $0x330] sm:$0xff]
  %v195 = vld [vmem:[%s1 + $0x338] sm:$0xff]
  %v196 = vld [vmem:[%s1 + $0x340] sm:$0xff]
  %v197 = vld [vmem:[%s1 + $0x348] sm:$0xff]
  %v198 = vld [vmem:[%s1 + $0x350] sm:$0xff]
  %v199 = vld [vmem:[%s1 + $0x358] sm:$0xff]
  %v200 = vld [vmem:[%s1 + $0x360] sm:$0xff]
  %v201 = vld [vmem:[%s1 + $0x368] sm:$0xff]
  %v202 = vld [vmem:[%s1 + $0x370] sm:$0xff]
  %v203 = vld [vmem:[%s1 + $0x378] sm:$0xff]
  %v204 = vld [vmem:[%s1 + $0x380] sm:$0xff]
  %v205 = vld [vmem:[%s1 + $0x388] sm:$0xff]
  %v206 = vld [vmem:[%s1 + $0x390] sm:$0xff]
  %v207 = vld [vmem:[%s1 + $0x398] sm:$0xff]
  %v208 = vld [vmem:[%s1 + $0x3a0] sm:$0xff]
  %v209 = vld [vmem:[%s1 + $0x3a8] sm:$0xff]
  %v210 = vld [vmem:[%s1 + $0x3b0] sm:$0xff]
  %v211 = vld [vmem:[%s1 + $0x3b8] sm:$0xff]
  %v212 = vld [vmem:[%s1 + $0x3c0] sm:$0xff]
  %v213 = vld [vmem:[%s1 + $0x3c8] sm:$0xff]
  %v214 = vld [vmem:[%s1 + $0x3d0] sm:$0xff]
  %v215 = vld [vmem:[%s1 + $0x3d8] sm:$0xff]
  %v216 = vld [vmem:[%s1 + $0x3e0] sm:$0xff]
  %v217 = vld [vmem:[%s1 + $0x3e8] sm:$0xff]
  %v218 = vld [vmem:[%s1 + $0x3f0] sm:$0xff]
  %v219 = vld [vmem:[%s1 + $0x3f8] sm:$0xff]
  %v220 = vld [vmem:[%s1 + $0x400] sm:$0xff]
  %v221 = vld [vmem:[%s1 + $0x408] sm:$0xff]
  %v222 = vld [vmem:[%s1 + $0x410] sm:$0xff]
  %v223 = vld [vmem:[%s1 + $0x418] sm:$0xff]
  %v224 = vld [vmem:[%s1 + $0x420] sm:$0xff]
  %v225 = vld [vmem:[%s1 + $0x428] sm:$0xff]
  %v226 = vld [vmem:[%s1 + $0x430] sm:$0xff]
  %v227 = vld [vmem:[%s1 + $0x438] sm:$0xff]
  %v228 = vld [vmem:[%s1 + $0x440] sm:$0xff]
  %v229 = vld [vmem:[%s1 + $0x448] sm:$0xff]
  %v230 = vld [vmem:[%s1 + $0x450] sm:$0xff]
  %v231 = vld [vmem:[%s1 + $0x458] sm:$0xff]
  %v232 = vld [vmem:[%s1 + $0x460] sm:$0xff]
  %v233 = vld [vmem:[%s1 + $0x468] sm:$0xff]
  %v234 = vld [vmem:[%s1 + $0x470] sm:$0xff]
  %v235 = vld [vmem:[%s1 + $0x478] sm:$0xff]
  %v236 = vld [vmem:[%s1 + $0x480] sm:$0xff]
  %v237 = vld [vmem:[%s1 + $0x488] sm:$0xff]
  %v238 = vld [vmem:[%s1 + $0x490] sm:$0xff]
  %v239 = vld [vmem:[%s1 + $0x498] sm:$0xff]
  %v240 = vld [vmem:[%s1 + $0x4a0] sm:$0xff]
  %v241 = vld [vmem:[%s1 + $0x4a8] sm:$0xff]
  %v242 = vld [vmem:[%s1 + $0x4b0] sm:$0xff]
  %v243 = vld [vmem:[%s1 + $0x4b8] sm:$0xff]
  %v244 = vld [vmem:[%s1 + $0x4c0] sm:$0xff]
  %v245 = vld [vmem:[%s1 + $0x4c8] sm:$0xff]
  %v246 = vld [vmem:[%s1 + $0x4d0] sm:$0xff]
  %v247 = vld [vmem:[%s1 + $0x4d8] sm:$0xff]
  %v248 = vld [vmem:[%s1 + $0x4e0] sm:$0xff]
  %v249 = vld [vmem:[%s1 + $0x4e8] sm:$0xff]
  %v250 = vld [vmem:[%s1 + $0x4f0] sm:$0xff]
  %v251 = vld [vmem:[%s1 + $0x4f8] sm:$0xff]
  %v252 = vld [vmem:[%s1 + $0x500] sm:$0xff]
  %v253 = vld [vmem:[%s1 + $0x508] sm:$0xff]
  %v254 = vld [vmem:[%s1 + $0x510] sm:$0xff]
  %v255 = vld [vmem:[%s1 + $0x518] sm:$0xff]
  %v256 = vld [vmem:[%s1 + $0x520] sm:$0xff]
  %v257 = vld [vmem:[%s1 + $0x528] sm:$0xff]
  %v258 = vld [vmem:[%s1 + $0x530] sm:$0xff]
  %v259 = vld [vmem:[%s1 + $0x538] sm:$0xff]
  %v260 = vld [vmem:[%s1 + $0x540] sm:$0xff]
  %v261 = vld [vmem:[%s1 + $0x548] sm:$0xff]
  %v262 = vld [vmem:[%s1 + $0x550] sm:$0xff]
  %v263 = vld [vmem:[%s1 + $0x558] sm:$0xff]
  %v264 = vld [vmem:[%s1 + $0x560] sm:$0xff]
  %v265 = vld [vmem:[%s1 + $0x568] sm:$0xff]
  %v266 = vld [vmem:[%s1 + $0x570] sm:$0xff]
  %v267 = vld [vmem:[%s1 + $0x578] sm:$0xff]
  %v268 = vld [vmem:[%s1 + $0x580] sm:$0xff]
  %v269 = vld [vmem:[%s1 + $0x588] sm:$0xff]
  %v270 = vld [vmem:[%s1 + $0x590] sm:$0xff]
  %v271 = vld [vmem:[%s1 + $0x598] sm:$0xff]
  %v272 = vld [vmem:[%s1 + $0x5a0] sm:$0xff]
  %v273 = vld [vmem:[%s1 + $0x5a8] sm:$0xff]
  %v274 = vld [vmem:[%s1 + $0x5b0] sm:$0xff]
  %v275 = vld [vmem:[%s1 + $0x5b8] sm:$0xff]
  %v276 = vld [vmem:[%s1 + $0x5c0] sm:$0xff]
  %v277 = vld [vmem:[%s1 + $0x5c8] sm:$0xff]
  %v278 = vld [vmem:[%s1 + $0x5d0] sm:$0xff]
  %v279 = vld [vmem:[%s1 + $0x5d8] sm:$0xff]
  %v280 = vld [vmem:[%s1 + $0x5e0] sm:$0xff]
  %v281 = vld [vmem:[%s1 + $0x5e8] sm:$0xff]
  %v282 = vld [vmem:[%s1 + $0x5f0] sm:$0xff]
  %v283 = vld [vmem:[%s1 + $0x5f8] sm:$0xff]
  %v284 = vld [vmem:[%s1 + $0x600] sm:$0xff]
  %v285 = vld [vmem:[%s1 + $0x608] sm:$0xff]
  %v286 = vld [vmem:[%s1 + $0x610] sm:$0xff]
  %v287 = vld [vmem:[%s1 + $0x618] sm:$0xff]
  %v288 = vld [vmem:[%s1 + $0x620] sm:$0xff]
  %v289 = vld [vmem:[%s1 + $0x628] sm:$0xff]
  %v290 = vld [vmem:[%s1 + $0x630] sm:$0xff]
  %v291 = vld [vmem:[%s1 + $0x638] sm:$0xff]
  %v292 = vld [vmem:[%s1 + $0x640] sm:$0xff]
  %v293 = vld [vmem:[%s1 + $0x648] sm:$0xff]
  %v294 = vld [vmem:[%s1 + $0x650] sm:$0xff]
  %v295 = vld [vmem:[%s1 + $0x658] sm:$0xff]
  %v296 = vld [vmem:[%s1 + $0x660] sm:$0xff]
  %v297 = vld [vmem:[%s1 + $0x668] sm:$0xff]
  %v298 = vld [vmem:[%s1 + $0x670] sm:$0xff]
  %v299 = vld [vmem:[%s1 + $0x678] sm:$0xff]
  %v300 = vld [vmem:[%s1 + $0x680] sm:$0xff]
  %v301 = vld [vmem:[%s1 + $0x688] sm:$0xff]
  %v302 = vld [vmem:[%s1 + $0x690] sm:$0xff]
  %v303 = vld [vmem:[%s1 + $0x698] sm:$0xff]
  %v304 = vld [vmem:[%s1 + $0x6a0] sm:$0xff]
  %v305 = vld [vmem:[%s1 + $0x6a8] sm:$0xff]
  %v306 = vld [vmem:[%s1 + $0x6b0] sm:$0xff]
  %v307 = vld [vmem:[%s1 + $0x6b8] sm:$0xff]
  %v308 = vld [vmem:[%s1 + $0x6c0] sm:$0xff]
  %v309 = vld [vmem:[%s1 + $0x6c8] sm:$0xff]
  %v310 = vld [vmem:[%s1 + $0x6d0] sm:$0xff]
  %v311 = vld [vmem:[%s1 + $0x6d8] sm:$0xff]
  %v312 = vld [vmem:[%s1 + $0x6e0] sm:$0xff]
  %v313 = vld [vmem:[%s1 + $0x6e8] sm:$0xff]
  %v314 = vld [vmem:[%s1 + $0x6f0] sm:$0xff]
  %v315 = vld [vmem:[%s1 + $0x6f8] sm:$0xff]
  %v316 = vld [vmem:[%s1 + $0x700] sm:$0xff]
  %v317 = vld [vmem:[%s1 + $0x708] sm:$0xff]
  %v318 = vld [vmem:[%s1 + $0x710] sm:$0xff]
  %v319 = vld [vmem:[%s1 + $0x718] sm:$0xff]
  %v320 = vld [vmem:[%s1 + $0x720] sm:$0xff]
  %v321 = vld [vmem:[%s1 + $0x728] sm:$0xff]
  %v322 = vld [vmem:[%s1 + $0x730] sm:$0xff]
  %v323 = vld [vmem:[%s1 + $0x738] sm:$0xff]
  %v324 = vld [vmem:[%s1 + $0x740] sm:$0xff]
  %v325 = vld [vmem:[%s1 + $0x748] sm:$0xff]
  %v326 = vld [vmem:[%s1 + $0x750] sm:$0xff]
  %v327 = vld [vmem:[%s1 + $0x758] sm:$0xff]
  %v328 = vld [vmem:[%s1 + $0x760] sm:$0xff]
  %v329 = vld [vmem:[%s1 + $0x768] sm:$0xff]
  %v330 = vld [vmem:[%s1 + $0x770] sm:$0xff]
  %v331 = vld [vmem:[%s1 + $0x778] sm:$0xff]
  %v332 = vld [vmem:[%s1 + $0x780] sm:$0xff]
  %v333 = vld [vmem:[%s1 + $0x788] sm:$0xff]
  %v334 = vld [vmem:[%s1 + $0x790] sm:$0xff]
  %v335 = vld [vmem:[%s1 + $0x798] sm:$0xff]
  %v336 = vld [vmem:[%s1 + $0x7a0] sm:$0xff]
  %v337 = vld [vmem:[%s1 + $0x7a8] sm:$0xff]
  %v338 = vld [vmem:[%s1 + $0x7b0] sm:$0xff]
  %v339 = vld [vmem:[%s1 + $0x7b8] sm:$0xff]
  %v340 = vld [vmem:[%s1 + $0x7c0] sm:$0xff]
  %v341 = vld [vmem:[%s1 + $0x7c8] sm:$0xff]
  %v342 = vld [vmem:[%s1 + $0x7d0] sm:$0xff]
  %v343 = vld [vmem:[%s1 + $0x7d8] sm:$0xff]
  %v344 = vld [vmem:[%s1 + $0x7e0] sm:$0xff]
  %v345 = vld [vmem:[%s1 + $0x7e8] sm:$0xff]
  %v346 = vld [vmem:[%s1 + $0x7f0] sm:$0xff]
  %v347 = vld [vmem:[%s1 + $0x7f8] sm:$0xff]
  %v348 = vld [vmem:[%s1 + $0x800] sm:$0xff]
  %v349 = vld [vmem:[%s1 + $0x808] sm:$0xff]
  %v350 = vld [vmem:[%s1 + $0x810] sm:$0xff]
  %v351 = vld [vmem:[%s1 + $0x818] sm:$0xff]
  %v352 = vld [vmem:[%s1 + $0x820] sm:$0xff]
  %v353 = vld [vmem:[%s1 + $0x828] sm:$0xff]
  %v354 = vld [vmem:[%s1 + $0x830] sm:$0xff]
  %v355 = vld [vmem:[%s1 + $0x838] sm:$0xff]
  %v356 = vld [vmem:[%s1 + $0x840] sm:$0xff]
  %v357 = vld [vmem:[%s1 + $0x848] sm:$0xff]
  %v358 = vld [vmem:[%s1 + $0x850] sm:$0xff]
  %v359 = vld [vmem:[%s1 + $0x858] sm:$0xff]
  %v360 = vld [vmem:[%s1 + $0x860] sm:$0xff]
  %v361 = vld [vmem:[%s1 + $0x868] sm:$0xff]
  %v362 = vld [vmem:[%s1 + $0x870] sm:$0xff]
  %v363 = vld [vmem:[%s1 + $0x878] sm:$0xff]
  %v364 = vld [vmem:[%s1 + $0x880] sm:$0xff]
  %v365 = vld [vmem:[%s1 + $0x888] sm:$0xff]
  %v366 = vld [vmem:[%s1 + $0x890] sm:$0xff]
  %v367 = vld [vmem:[%s1 + $0x898] sm:$0xff]
  %v368 = vld [vmem:[%s1 + $0x8a0] sm:$0xff]
  %v369 = vld [vmem:[%s1 + $0x8a8] sm:$0xff]
  %v370 = vld [vmem:[%s1 + $0x8b0] sm:$0xff]
  %v371 = vld [vmem:[%s1 + $0x8b8] sm:$0xff]
  %v372 = vld [vmem:[%s1 + $0x8c0] sm:$0xff]
  %v373 = vld [vmem:[%s1 + $0x8c8] sm:$0xff]
  %v374 = vld [vmem:[%s1 + $0x8d0] sm:$0xff]
  %v375 = vld [vmem:[%s1 + $0x8d8] sm:$0xff]
  %v376 = vld [vmem:[%s1 + $0x8e0] sm:$0xff]
  %v377 = vld [vmem:[%s1 + $0x8e8] sm:$0xff]
  %v378 = vld [vmem:[%s1 + $0x8f0] sm:$0xff]
  %v379 = vld [vmem:[%s1 + $0x8f8] sm:$0xff]
  %v380 = vld [vmem:[%s1 + $0x900] sm:$0xff]
  %v381 = vld [vmem:[%s1 + $0x908] sm:$0xff]
  %v382 = vld [vmem:[%s1 + $0x910] sm:$0xff]
  %v383 = vld [vmem:[%s1 + $0x918] sm:$0xff]
  %v384 = vld [vmem:[%s1 + $0x920] sm:$0xff]
  %v385 = vld [vmem:[%s1 + $0x928] sm:$0xff]
  %v386 = vld [vmem:[%s1 + $0x930] sm:$0xff]
  %v387 = vld [vmem:[%s1 + $0x938] sm:$0xff]
  %v388 = vld [vmem:[%s1 + $0x940] sm:$0xff]
  %v389 = vld [vmem:[%s1 + $0x948] sm:$0xff]
  %v390 = vld [vmem:[%s1 + $0x950] sm:$0xff]
  %v391 = vld [vmem:[%s1 + $0x958] sm:$0xff]
  %v392 = vld [vmem:[%s1 + $0x960] sm:$0xff]
  %v393 = vld [vmem:[%s1 + $0x968] sm:$0xff]
  %v394 = vld [vmem:[%s1 + $0x970] sm:$0xff]
  %v395 = vld [vmem:[%s1 + $0x978] sm:$0xff]
  %v396 = vld [vmem:[%s1 + $0x980] sm:$0xff]
  %v397 = vld [vmem:[%s1 + $0x988] sm:$0xff]
  %v398 = vld [vmem:[%s1 + $0x990] sm:$0xff]
  %v399 = vld [vmem:[%s1 + $0x998] sm:$0xff]
  %v400 = vld [vmem:[%s1 + $0x9a0] sm:$0xff]
  %v401 = vld [vmem:[%s1 + $0x9a8] sm:$0xff]
  %v402 = vld [vmem:[%s1 + $0x9b0] sm:$0xff]
  %v403 = vld [vmem:[%s1 + $0x9b8] sm:$0xff]
  %v404 = vld [vmem:[%s1 + $0x9c0] sm:$0xff]
  %v405 = vld [vmem:[%s1 + $0x9c8] sm:$0xff]
  %v406 = vld [vmem:[%s1 + $0x9d0] sm:$0xff]
  %v407 = vld [vmem:[%s1 + $0x9d8] sm:$0xff]
  %v408 = vld [vmem:[%s1 + $0x9e0] sm:$0xff]
  %v409 = vld [vmem:[%s1 + $0x9e8] sm:$0xff]
  %v410 = vld [vmem:[%s1 + $0x9f0] sm:$0xff]
  %v411 = vld [vmem:[%s1 + $0x9f8] sm:$0xff]
  %v412 = vld [vmem:[%s1 + $0xa00] sm:$0xff]
  %v413 = vld [vmem:[%s1 + $0xa08] sm:$0xff]
  %v414 = vld [vmem:[%s1 + $0xa10] sm:$0xff]
  %v415 = vld [vmem:[%s1 + $0xa18] sm:$0xff]
  %v416 = vld [vmem:[%s1 + $0xa20] sm:$0xff]
  %v417 = vld [vmem:[%s1 + $0xa28] sm:$0xff]
  %v418 = vld [vmem:[%s1 + $0xa30] sm:$0xff]
  %v419 = vld [vmem:[%s1 + $0xa38] sm:$0xff]
  %v420 = vld [vmem:[%s1 + $0xa40] sm:$0xff]
  %v421 = vld [vmem:[%s1 + $0xa48] sm:$0xff]
  %v422 = vld [vmem:[%s1 + $0xa50] sm:$0xff]
  %v423 = vld [vmem:[%s1 + $0xa58] sm:$0xff]
  %v424 = vld [vmem:[%s1 + $0xa60] sm:$0xff]
  %v425 = vld [vmem:[%s1 + $0xa68] sm:$0xff]
  %v426 = vld [vmem:[%s1 + $0xa70] sm:$0xff]
  %v427 = vld [vmem:[%s1 + $0xa78] sm:$0xff]
  %v428 = vld [vmem:[%s1 + $0xa80] sm:$0xff]
  %v429 = vld [vmem:[%s1 + $0xa88] sm:$0xff]
  %v430 = vld [vmem:[%s1 + $0xa90] sm:$0xff]
  %v431 = vld [vmem:[%s1 + $0xa98] sm:$0xff]
  %v432 = vld [vmem:[%s1 + $0xaa0] sm:$0xff]
  %v433 = vld [vmem:[%s1 + $0xaa8] sm:$0xff]
  %v434 = vld [vmem:[%s1 + $0xab0] sm:$0xff]
  %v435 = vld [vmem:[%s1 + $0xab8] sm:$0xff]
  %v436 = vld [vmem:[%s1 + $0xac0] sm:$0xff]
  %v437 = vld [vmem:[%s1 + $0xac8] sm:$0xff]
  %v438 = vld [vmem:[%s1 + $0xad0] sm:$0xff]
  %v439 = vld [vmem:[%s1 + $0xad8] sm:$0xff]
  %v440 = vld [vmem:[%s1 + $0xae0] sm:$0xff]
  %v441 = vld [vmem:[%s1 + $0xae8] sm:$0xff]
  %v442 = vld [vmem:[%s1 + $0xaf0] sm:$0xff]
  %v443 = vld [vmem:[%s1 + $0xaf8] sm:$0xff]
  %v444 = vld [vmem:[%s1 + $0xb00] sm:$0xff]
  %v445 = vld [vmem:[%s1 + $0xb08] sm:$0xff]
  %v446 = vld [vmem:[%s1 + $0xb10] sm:$0xff]
  %v447 = vld [vmem:[%s1 + $0xb18] sm:$0xff]
  %v448 = vld [vmem:[%s1 + $0xb20] sm:$0xff]
  %v449 = vld [vmem:[%s1 + $0xb28] sm:$0xff]
  %v450 = vld [vmem:[%s1 + $0xb30] sm:$0xff]
  %v451 = vld [vmem:[%s1 + $0xb38] sm:$0xff]
  %v452 = vld [vmem:[%s1 + $0xb40] sm:$0xff]
  %v453 = vld [vmem:[%s1 + $0xb48] sm:$0xff]
  %v454 = vld [vmem:[%s1 + $0xb50] sm:$0xff]
  %v455 = vld [vmem:[%s1 + $0xb58] sm:$0xff]
  %v456 = vld [vmem:[%s1 + $0xb60] sm:$0xff]
  %v457 = vld [vmem:[%s1 + $0xb68] sm:$0xff]
  %v458 = vld [vmem:[%s1 + $0xb70] sm:$0xff]
  %v459 = vld [vmem:[%s1 + $0xb78] sm:$0xff]
  %v460 = vld [vmem:[%s1 + $0xb80] sm:$0xff]
  %v461 = vld [vmem:[%s1 + $0xb88] sm:$0xff]
  %v462 = vld [vmem:[%s1 + $0xb90] sm:$0xff]
  %v463 = vld [vmem:[%s1 + $0xb98] sm:$0xff]
  %v464 = vld [vmem:[%s1 + $0xba0] sm:$0xff]
  %v465 = vld [vmem:[%s1 + $0xba8] sm:$0xff]
  %v466 = vld [vmem:[%s1 + $0xbb0] sm:$0xff]
  %v467 = vld [vmem:[%s1 + $0xbb8] sm:$0xff]
  %v468 = vld [vmem:[%s1 + $0xbc0] sm:$0xff]
  %v469 = vld [vmem:[%s1 + $0xbc8] sm:$0xff]
  %v470 = vld [vmem:[%s1 + $0xbd0] sm:$0xff]
  %v471 = vld [vmem:[%s1 + $0xbd8] sm:$0xff]
  %v472 = vld [vmem:[%s1 + $0xbe0] sm:$0xff]
  %v473 = vld [vmem:[%s1 + $0xbe8] sm:$0xff]
  %v474 = vld [vmem:[%s1 + $0xbf0] sm:$0xff]
  %v475 = vld [vmem:[%s1 + $0xbf8] sm:$0xff]
  %v476 = vld [vmem:[%s1 + $0xc00] sm:$0xff]
  %v477 = vld [vmem:[%s1 + $0xc08] sm:$0xff]
  %v478 = vld [vmem:[%s1 + $0xc10] sm:$0xff]
  %v479 = vld [vmem:[%s1 + $0xc18] sm:$0xff]
  %v480 = vld [vmem:[%s1 + $0xc20] sm:$0xff]
  %v481 = vld [vmem:[%s1 + $0xc28] sm:$0xff]
  %v482 = vld [vmem:[%s1 + $0xc30] sm:$0xff]
  %v483 = vld [vmem:[%s1 + $0xc38] sm:$0xff]
  %v484 = vld [vmem:[%s1 + $0xc40] sm:$0xff]
  %v485 = vld [vmem:[%s1 + $0xc48] sm:$0xff]
  %v486 = vld [vmem:[%s1 + $0xc50] sm:$0xff]
  %v487 = vld [vmem:[%s1 + $0xc58] sm:$0xff]
  %v488 = vld [vmem:[%s1 + $0xc60] sm:$0xff]
  %v489 = vld [vmem:[%s1 + $0xc68] sm:$0xff]
  %v490 = vld [vmem:[%s1 + $0xc70] sm:$0xff]
  %v491 = vld [vmem:[%s1 + $0xc78] sm:$0xff]
  %v492 = vld [vmem:[%s1 + $0xc80] sm:$0xff]
  %v493 = vld [vmem:[%s1 + $0xc88] sm:$0xff]
  %v494 = vld [vmem:[%s1 + $0xc90] sm:$0xff]
  %v495 = vld [vmem:[%s1 + $0xc98] sm:$0xff]
  %v496 = vld [vmem:[%s1 + $0xca0] sm:$0xff]
  %v497 = vld [vmem:[%s1 + $0xca8] sm:$0xff]
  %v498 = vld [vmem:[%s1 + $0xcb0] sm:$0xff]
  %v499 = vld [vmem:[%s1 + $0xcb8] sm:$0xff]
  %v500 = vld [vmem:[%s1 + $0xcc0] sm:$0xff]
  %v501 = vld [vmem:[%s1 + $0xcc8] sm:$0xff]
  %v502 = vld [vmem:[%s1 + $0xcd0] sm:$0xff]
  %v503 = vld [vmem:[%s1 + $0xcd8] sm:$0xff]
  %v504 = vld [vmem:[%s1 + $0xce0] sm:$0xff]
  %v505 = vld [vmem:[%s1 + $0xce8] sm:$0xff]
  %v506 = vld [vmem:[%s1 + $0xcf0] sm:$0xff]
  %v507 = vld [vmem:[%s1 + $0xcf8] sm:$0xff]
  %v508 = vld [vmem:[%s1 + $0xd00] sm:$0xff]
  %v509 = vld [vmem:[%s1 + $0xd08] sm:$0xff]
  %v510 = vld [vmem:[%s1 + $0xd10] sm:$0xff]
  %v511 = vld [vmem:[%s1 + $0xd18] sm:$0xff]
  %v512 = vld [vmem:[%s1 + $0xd20] sm:$0xff]
  %v513 = vld [vmem:[%s1 + $0xd28] sm:$0xff]
  %v514 = vld [vmem:[%s1 + $0xd30] sm:$0xff]
  %v515 = vld [vmem:[%s1 + $0xd38] sm:$0xff]
  %v516 = vld [vmem:[%s1 + $0xd40] sm:$0xff]
  %v517 = vld [vmem:[%s1 + $0xd48] sm:$0xff]
  %v518 = vld [vmem:[%s1 + $0xd50] sm:$0xff]
  %v519 = vld [vmem:[%s1 + $0xd58] sm:$0xff]
  %v520 = vld [vmem:[%s1 + $0xd60] sm:$0xff]
  %v521 = vld [vmem:[%s1 + $0xd68] sm:$0xff]
  %v522 = vld [vmem:[%s1 + $0xd70] sm:$0xff]
  %v523 = vld [vmem:[%s1 + $0xd78] sm:$0xff]
  %v524 = vld [vmem:[%s1 + $0xd80] sm:$0xff]
  %v525 = vld [vmem:[%s1 + $0xd88] sm:$0xff]
  %v526 = vld [vmem:[%s1 + $0xd90] sm:$0xff]
  %v527 = vld [vmem:[%s1 + $0xd98] sm:$0xff]
  %v528 = vld [vmem:[%s1 + $0xda0] sm:$0xff]
  %v529 = vld [vmem:[%s1 + $0xda8] sm:$0xff]
  %v530 = vld [vmem:[%s1 + $0xdb0] sm:$0xff]
  %v531 = vld [vmem:[%s1 + $0xdb8] sm:$0xff]
  %v532 = vld [vmem:[%s1 + $0xdc0] sm:$0xff]
  %v533 = vld [vmem:[%s1 + $0xdc8] sm:$0xff]
  %v534 = vld [vmem:[%s1 + $0xdd0] sm:$0xff]
  %v535 = vld [vmem:[%s1 + $0xdd8] sm:$0xff]
  %v536 = vld [vmem:[%s1 + $0xde0] sm:$0xff]
  %v537 = vld [vmem:[%s1 + $0xde8] sm:$0xff]
  %v538 = vld [vmem:[%s1 + $0xdf0] sm:$0xff]
  %v539 = vld [vmem:[%s1 + $0xdf8] sm:$0xff]
  %v540 = vld [vmem:[%s1 + $0xe00] sm:$0xff]
  %v541 = vld [vmem:[%s1 + $0xe08] sm:$0xff]
  %v542 = vld [vmem:[%s1 + $0xe10] sm:$0xff]
  %v543 = vld [vmem:[%s1 + $0xe18] sm:$0xff]
  %v544 = vld [vmem:[%s1 + $0xe20] sm:$0xff]
  %v545 = vld [vmem:[%s1 + $0xe28] sm:$0xff]
  %v546 = vld [vmem:[%s1 + $0xe30] sm:$0xff]
  %v547 = vld [vmem:[%s1 + $0xe38] sm:$0xff]
  %v548 = vld [vmem:[%s1 + $0xe40] sm:$0xff]
  %v549 = vld [vmem:[%s1 + $0xe48] sm:$0xff]
  %v550 = vld [vmem:[%s1 + $0xe50] sm:$0xff]
  %v551 = vld [vmem:[%s1 + $0xe58] sm:$0xff]
  %v552 = vld [vmem:[%s1 + $0xe60] sm:$0xff]
  %v553 = vld [vmem:[%s1 + $0xe68] sm:$0xff]
  %v554 = vld [vmem:[%s1 + $0xe70] sm:$0xff]
  %v555 = vld [vmem:[%s1 + $0xe78] sm:$0xff]
  %v556 = vld [vmem:[%s1 + $0xe80] sm:$0xff]
  %v557 = vld [vmem:[%s1 + $0xe88] sm:$0xff]
  %v558 = vld [vmem:[%s1 + $0xe90] sm:$0xff]
  %v559 = vld [vmem:[%s1 + $0xe98] sm:$0xff]
  %v560 = vld [vmem:[%s1 + $0xea0] sm:$0xff]
  %v561 = vld [vmem:[%s1 + $0xea8] sm:$0xff]
  %v562 = vld [vmem:[%s1 + $0xeb0] sm:$0xff]
  %v563 = vld [vmem:[%s1 + $0xeb8] sm:$0xff]
  %v564 = vld [vmem:[%s1 + $0xec0] sm:$0xff]
  %v565 = vld [vmem:[%s1 + $0xec8] sm:$0xff]
  %v566 = vld [vmem:[%s1 + $0xed0] sm:$0xff]
  %v567 = vld [vmem:[%s1 + $0xed8] sm:$0xff]
  %v568 = vld [vmem:[%s1 + $0xee0] sm:$0xff]
  %v569 = vld [vmem:[%s1 + $0xee8] sm:$0xff]
  %v570 = vld [vmem:[%s1 + $0xef0] sm:$0xff]
  %v571 = vld [vmem:[%s1 + $0xef8] sm:$0xff]
  %v572 = vld [vmem:[%s1 + $0xf00] sm:$0xff]
  %v573 = vld [vmem:[%s1 + $0xf08] sm:$0xff]
  %v574 = vld [vmem:[%s1 + $0xf10] sm:$0xff]
  %v575 = vld [vmem:[%s1 + $0xf18] sm:$0xff]
  %v576 = vld [vmem:[%s1 + $0xf20] sm:$0xff]
  %v577 = vld [vmem:[%s1 + $0xf28] sm:$0xff]
  %v578 = vld [vmem:[%s1 + $0xf30] sm:$0xff]
  %v579 = vld [vmem:[%s1 + $0xf38] sm:$0xff]
  %v580 = vld [vmem:[%s1 + $0xf40] sm:$0xff]
  %v581 = vld [vmem:[%s1 + $0xf48] sm:$0xff]
  %v582 = vld [vmem:[%s1 + $0xf50] sm:$0xff]
  %v583 = vld [vmem:[%s1 + $0xf58] sm:$0xff]
  %v584 = vld [vmem:[%s1 + $0xf60] sm:$0xff]
  %v585 = vld [vmem:[%s1 + $0xf68] sm:$0xff]
  %v586 = vld [vmem:[%s1 + $0xf70] sm:$0xff]
  %v587 = vld [vmem:[%s1 + $0xf78] sm:$0xff]
  %v588 = vld [vmem:[%s1 + $0xf80] sm:$0xff]
  %v589 = vld [vmem:[%s1 + $0xf88] sm:$0xff]
  %v590 = vld [vmem:[%s1 + $0xf90] sm:$0xff]
  %v591 = vld [vmem:[%s1 + $0xf98] sm:$0xff]
  %v592 = vld [vmem:[%s1 + $0xfa0] sm:$0xff]
  %v593 = vld [vmem:[%s1 + $0xfa8] sm:$0xff]
  %v594 = vld [vmem:[%s1 + $0xfb0] sm:$0xff]
  %v595 = vld [vmem:[%s1 + $0xfb8] sm:$0xff]
  %v596 = vld [vmem:[%s1 + $0xfc0] sm:$0xff]
  %v597 = vld [vmem:[%s1 + $0xfc8] sm:$0xff]
  %v598 = vld [vmem:[%s1 + $0xfd0] sm:$0xff]
  %v599 = vld [vmem:[%s1 + $0xfd8] sm:$0xff]
  %v600 = vld [vmem:[%s1 + $0xfe0] sm:$0xff]
  %v601 = vld [vmem:[%s1 + $0xfe8] sm:$0xff]
  %v602 = vld [vmem:[%s1 + $0xff0] sm:$0xff]
  %v603 = vld [vmem:[%s1 + $0xff8] sm:$0xff]
  %v604 = vld [vmem:[%s1 + $0x1000] sm:$0xff]
  %v605 = vld [vmem:[%s1 + $0x1008] sm:$0xff]
  %v606 = vld [vmem:[%s1 + $0x1010] sm:$0xff]
  %v607 = vld [vmem:[%s1 + $0x1018] sm:$0xff]
  %v608 = vld [vmem:[%s1 + $0x1020] sm:$0xff]
  %v609 = vld [vmem:[%s1 + $0x1028] sm:$0xff]
  %v610 = vld [vmem:[%s1 + $0x1030] sm:$0xff]
  %v611 = vld [vmem:[%s1 + $0x1038] sm:$0xff]
  %v612 = vld [vmem:[%s1 + $0x1040] sm:$0xff]
  %v613 = vld [vmem:[%s1 + $0x1048] sm:$0xff]
  %v614 = vld [vmem:[%s1 + $0x1050] sm:$0xff]
  %v615 = vld [vmem:[%s1 + $0x1058] sm:$0xff]
  %v616 = vld [vmem:[%s1 + $0x1060] sm:$0xff]
  %v617 = vld [vmem:[%s1 + $0x1068] sm:$0xff]
  %v618 = vld [vmem:[%s1 + $0x1070] sm:$0xff]
  %v619 = vld [vmem:[%s1 + $0x1078] sm:$0xff]
  %v620 = vld [vmem:[%s1 + $0x1080] sm:$0xff]
  %v621 = vld [vmem:[%s1 + $0x1088] sm:$0xff]
  %v622 = vld [vmem:[%s1 + $0x1090] sm:$0xff]
  %v623 = vld [vmem:[%s1 + $0x1098] sm:$0xff]
  %v624 = vld [vmem:[%s1 + $0x10a0] sm:$0xff]
  %v625 = vld [vmem:[%s1 + $0x10a8] sm:$0xff]
  %v626 = vld [vmem:[%s1 + $0x10b0] sm:$0xff]
  %v627 = vld [vmem:[%s1 + $0x10b8] sm:$0xff]
  %v628 = vld [vmem:[%s1 + $0x10c0] sm:$0xff]
  %v629 = vld [vmem:[%s1 + $0x10c8] sm:$0xff]
  %v630 = vld [vmem:[%s1 + $0x10d0] sm:$0xff]
  %v631 = vld [vmem:[%s1 + $0x10d8] sm:$0xff]
  %v632 = vld [vmem:[%s1 + $0x10e0] sm:$0xff]
  %v633 = vld [vmem:[%s1 + $0x10e8] sm:$0xff]
  %v634 = vld [vmem:[%s1 + $0x10f0] sm:$0xff]
  %v635 = vld [vmem:[%s1 + $0x10f8] sm:$0xff]
  %v636 = vld [vmem:[%s1 + $0x1100] sm:$0xff]
  %v637 = vld [vmem:[%s1 + $0x1108] sm:$0xff]
  %v638 = vld [vmem:[%s1 + $0x1110] sm:$0xff]
  %v639 = vld [vmem:[%s1 + $0x1118] sm:$0xff]
  %v640 = vld [vmem:[%s1 + $0x1120] sm:$0xff]
  %v641 = vld [vmem:[%s1 + $0x1128] sm:$0xff]
  %v642 = vld [vmem:[%s1 + $0x1130] sm:$0xff]
  %v643 = vld [vmem:[%s1 + $0x1138] sm:$0xff]
  %v644 = vld [vmem:[%s1 + $0x1140] sm:$0xff]
  %v645 = vld [vmem:[%s1 + $0x1148] sm:$0xff]
  %v646 = vld [vmem:[%s1 + $0x1150] sm:$0xff]
  %v647 = vld [vmem:[%s1 + $0x1158] sm:$0xff]
  %v648 = vld [vmem:[%s1 + $0x1160] sm:$0xff]
  %v649 = vld [vmem:[%s1 + $0x1168] sm:$0xff]
  %v650 = vld [vmem:[%s1 + $0x1170] sm:$0xff]
  %v651 = vld [vmem:[%s1 + $0x1178] sm:$0xff]
  %v652 = vld [vmem:[%s1 + $0x1180] sm:$0xff]
  %v653 = vld [vmem:[%s1 + $0x1188] sm:$0xff]
  %v654 = vld [vmem:[%s1 + $0x1190] sm:$0xff]
  %v655 = vld [vmem:[%s1 + $0x1198] sm:$0xff]
  %v656 = vld [vmem:[%s1 + $0x11a0] sm:$0xff]
  %v657 = vld [vmem:[%s1 + $0x11a8] sm:$0xff]
  %v658 = vld [vmem:[%s1 + $0x11b0] sm:$0xff]
  %v659 = vld [vmem:[%s1 + $0x11b8] sm:$0xff]
  %v660 = vld [vmem:[%s1 + $0x11c0] sm:$0xff]
  %v661 = vld [vmem:[%s1 + $0x11c8] sm:$0xff]
  %v662 = vld [vmem:[%s1 + $0x11d0] sm:$0xff]
  %v663 = vld [vmem:[%s1 + $0x11d8] sm:$0xff]
  %v664 = vld [vmem:[%s1 + $0x11e0] sm:$0xff]
  %v665 = vld [vmem:[%s1 + $0x11e8] sm:$0xff]
  %v666 = vld [vmem:[%s1 + $0x11f0] sm:$0xff]
  %v667 = vld [vmem:[%s1 + $0x11f8] sm:$0xff]
  %v668 = vld [vmem:[%s1 + $0x1200] sm:$0xff]
  %v669 = vld [vmem:[%s1 + $0x1208] sm:$0xff]
  %v670 = vld [vmem:[%s1 + $0x1210] sm:$0xff]
  %v671 = vld [vmem:[%s1 + $0x1218] sm:$0xff]
  %v672 = vld [vmem:[%s1 + $0x1220] sm:$0xff]
  %v673 = vld [vmem:[%s1 + $0x1228] sm:$0xff]
  %v674 = vld [vmem:[%s1 + $0x1230] sm:$0xff]
  %v675 = vld [vmem:[%s1 + $0x1238] sm:$0xff]
  %v676 = vld [vmem:[%s1 + $0x1240] sm:$0xff]
  %v677 = vld [vmem:[%s1 + $0x1248] sm:$0xff]
  %v678 = vld [vmem:[%s1 + $0x1250] sm:$0xff]
  %v679 = vld [vmem:[%s1 + $0x1258] sm:$0xff]
  %v680 = vld [vmem:[%s1 + $0x1260] sm:$0xff]
  %v681 = vld [vmem:[%s1 + $0x1268] sm:$0xff]
  %v682 = vld [vmem:[%s1 + $0x1270] sm:$0xff]
  %v683 = vld [vmem:[%s1 + $0x1278] sm:$0xff]
  %v684 = vld [vmem:[%s1 + $0x1280] sm:$0xff]
  %v685 = vld [vmem:[%s1 + $0x1288] sm:$0xff]
  %v686 = vld [vmem:[%s1 + $0x1290] sm:$0xff]
  %v687 = vld [vmem:[%s1 + $0x1298] sm:$0xff]
  %v688 = vld [vmem:[%s1 + $0x12a0] sm:$0xff]
  %v689 = vld [vmem:[%s1 + $0x12a8] sm:$0xff]
  %v690 = vld [vmem:[%s1 + $0x12b0] sm:$0xff]
  %v691 = vld [vmem:[%s1 + $0x12b8] sm:$0xff]
  %v692 = vld [vmem:[%s1 + $0x12c0] sm:$0xff]
  %v693 = vld [vmem:[%s1 + $0x12c8] sm:$0xff]
  %v694 = vld [vmem:[%s1 + $0x12d0] sm:$0xff]
  %v695 = vld [vmem:[%s1 + $0x12d8] sm:$0xff]
  %v696 = vld [vmem:[%s1 + $0x12e0] sm:$0xff]
  %v697 = vld [vmem:[%s1 + $0x12e8] sm:$0xff]
  %v698 = vld [vmem:[%s1 + $0x12f0] sm:$0xff]
  %v699 = vld [vmem:[%s1 + $0x12f8] sm:$0xff]
  %v700 = vld [vmem:[%s1 + $0x1300] sm:$0xff]
  %v701 = vld [vmem:[%s1 + $0x1308] sm:$0xff]
  %v702 = vld [vmem:[%s1 + $0x1310] sm:$0xff]
  %v703 = vld [vmem:[%s1 + $0x1318] sm:$0xff]
  %v704 = vld [vmem:[%s1 + $0x1320] sm:$0xff]
  %v705 = vld [vmem:[%s1 + $0x1328] sm:$0xff]
  %v706 = vld [vmem:[%s1 + $0x1330] sm:$0xff]
  %v707 = vld [vmem:[%s1 + $0x1338] sm:$0xff]
  %v708 = vld [vmem:[%s1 + $0x1340] sm:$0xff]
  %v709 = vld [vmem:[%s1 + $0x1348] sm:$0xff]
  %v710 = vld [vmem:[%s1 + $0x1350] sm:$0xff]
  %v711 = vld [vmem:[%s1 + $0x1358] sm:$0xff]
  %v712 = vld [vmem:[%s1 + $0x1360] sm:$0xff]
  %v713 = vld [vmem:[%s1 + $0x1368] sm:$0xff]
  %v714 = vld [vmem:[%s1 + $0x1370] sm:$0xff]
  %v715 = vld [vmem:[%s1 + $0x1378] sm:$0xff]
  %v716 = vld [vmem:[%s1 + $0x1380] sm:$0xff]
  %v717 = vld [vmem:[%s1 + $0x1388] sm:$0xff]
  %v718 = vld [vmem:[%s1 + $0x1390] sm:$0xff]
  %v719 = vld [vmem:[%s1 + $0x1398] sm:$0xff]
  %v720 = vld [vmem:[%s1 + $0x13a0] sm:$0xff]
  %v721 = vld [vmem:[%s1 + $0x13a8] sm:$0xff]
  %v722 = vld [vmem:[%s1 + $0x13b0] sm:$0xff]
  %v723 = vld [vmem:[%s1 + $0x13b8] sm:$0xff]
  %v724 = vld [vmem:[%s1 + $0x13c0] sm:$0xff]
  %v725 = vld [vmem:[%s1 + $0x13c8] sm:$0xff]
  %v726 = vld [vmem:[%s1 + $0x13d0] sm:$0xff]
  %v727 = vld [vmem:[%s1 + $0x13d8] sm:$0xff]
  %v728 = vld [vmem:[%s1 + $0x13e0] sm:$0xff]
  %v729 = vld [vmem:[%s1 + $0x13e8] sm:$0xff]
  %v730 = vld [vmem:[%s1 + $0x13f0] sm:$0xff]
  %v731 = vld [vmem:[%s1 + $0x13f8] sm:$0xff]
  %v732 = vld [vmem:[%s1 + $0x1400] sm:$0xff]
  %v733 = vld [vmem:[%s1 + $0x1408] sm:$0xff]
  %v734 = vld [vmem:[%s1 + $0x1410] sm:$0xff]
  %v735 = vld [vmem:[%s1 + $0x1418] sm:$0xff]
  %v736 = vld [vmem:[%s1 + $0x1420] sm:$0xff]
  %v737 = vld [vmem:[%s1 + $0x1428] sm:$0xff]
  %v738 = vld [vmem:[%s1 + $0x1430] sm:$0xff]
  %v739 = vld [vmem:[%s1 + $0x1438] sm:$0xff]
  %v740 = vld [vmem:[%s1 + $0x1440] sm:$0xff]
  %v741 = vld [vmem:[%s1 + $0x1448] sm:$0xff]
  %v742 = vld [vmem:[%s1 + $0x1450] sm:$0xff]
  %v743 = vld [vmem:[%s1 + $0x1458] sm:$0xff]
  %v744 = vld [vmem:[%s1 + $0x1460] sm:$0xff]
  %v745 = vld [vmem:[%s1 + $0x1468] sm:$0xff]
  %v746 = vld [vmem:[%s1 + $0x1470] sm:$0xff]
  %v747 = vld [vmem:[%s1 + $0x1478] sm:$0xff]
  %v748 = vld [vmem:[%s1 + $0x1480] sm:$0xff]
  %v749 = vld [vmem:[%s1 + $0x1488] sm:$0xff]
  %v750 = vld [vmem:[%s1 + $0x1490] sm:$0xff]
  %v751 = vld [vmem:[%s1 + $0x1498] sm:$0xff]
  %v752 = vld [vmem:[%s1 + $0x14a0] sm:$0xff]
  %v753 = vld [vmem:[%s1 + $0x14a8] sm:$0xff]
  %v754 = vld [vmem:[%s1 + $0x14b0] sm:$0xff]
  %v755 = vld [vmem:[%s1 + $0x14b8] sm:$0xff]
  %v756 = vld [vmem:[%s1 + $0x14c0] sm:$0xff]
  %v757 = vld [vmem:[%s1 + $0x14c8] sm:$0xff]
  %v758 = vld [vmem:[%s1 + $0x14d0] sm:$0xff]
  %v759 = vld [vmem:[%s1 + $0x14d8] sm:$0xff]
  %v760 = vld [vmem:[%s1 + $0x14e0] sm:$0xff]
  %v761 = vld [vmem:[%s1 + $0x14e8] sm:$0xff]
  %v762 = vld [vmem:[%s1 + $0x14f0] sm:$0xff]
  %v763 = vld [vmem:[%s1 + $0x14f8] sm:$0xff]
  %v764 = vld [vmem:[%s1 + $0x1500] sm:$0xff]
  %v765 = vld [vmem:[%s1 + $0x1508] sm:$0xff]
  %v766 = vld [vmem:[%s1 + $0x1510] sm:$0xff]
  %v767 = vld [vmem:[%s1 + $0x1518] sm:$0xff]
  %v768 = vld [vmem:[%s1 + $0x1520] sm:$0xff]
  %v769 = vld [vmem:[%s1 + $0x1528] sm:$0xff]
  %v770 = vld [vmem:[%s1 + $0x1530] sm:$0xff]
  %v771 = vld [vmem:[%s1 + $0x1538] sm:$0xff]
  %v772 = vld [vmem:[%s1 + $0x1540] sm:$0xff]
  %v773 = vld [vmem:[%s1 + $0x1548] sm:$0xff]
  %v774 = vld [vmem:[%s1 + $0x1550] sm:$0xff]
  %v775 = vld [vmem:[%s1 + $0x1558] sm:$0xff]
  %v776 = vld [vmem:[%s1 + $0x1560] sm:$0xff]
  %v777 = vld [vmem:[%s1 + $0x1568] sm:$0xff]
  %v778 = vld [vmem:[%s1 + $0x1570] sm:$0xff]
  %v779 = vld [vmem:[%s1 + $0x1578] sm:$0xff]
  %v780 = vld [vmem:[%s1 + $0x1580] sm:$0xff]
  %v781 = vld [vmem:[%s1 + $0x1588] sm:$0xff]
  %v782 = vld [vmem:[%s1 + $0x1590] sm:$0xff]
  %v783 = vld [vmem:[%s1 + $0x1598] sm:$0xff]
  %v784 = vld [vmem:[%s1 + $0x15a0] sm:$0xff]
  %v785 = vld [vmem:[%s1 + $0x15a8] sm:$0xff]
  %v786 = vld [vmem:[%s1 + $0x15b0] sm:$0xff]
  %v787 = vld [vmem:[%s1 + $0x15b8] sm:$0xff]
  %v788 = vld [vmem:[%s1 + $0x15c0] sm:$0xff]
  %v789 = vld [vmem:[%s1 + $0x15c8] sm:$0xff]
  %v790 = vld [vmem:[%s1 + $0x15d0] sm:$0xff]
  %v791 = vld [vmem:[%s1 + $0x15d8] sm:$0xff]
  %v792 = vld [vmem:[%s1 + $0x15e0] sm:$0xff]
  %v793 = vld [vmem:[%s1 + $0x15e8] sm:$0xff]
  %v794 = vld [vmem:[%s1 + $0x15f0] sm:$0xff]
  %v795 = vld [vmem:[%s1 + $0x15f8] sm:$0xff]
  %v796 = vld [vmem:[%s1 + $0x1600] sm:$0xff]
  %v797 = vld [vmem:[%s1 + $0x1608] sm:$0xff]
  %v798 = vld [vmem:[%s1 + $0x1610] sm:$0xff]
  %v799 = vld [vmem:[%s1 + $0x1618] sm:$0xff]
  %v800 = vld [vmem:[%s1 + $0x1620] sm:$0xff]
  %v801 = vld [vmem:[%s1 + $0x1628] sm:$0xff]
  %v802 = vld [vmem:[%s1 + $0x1630] sm:$0xff]
  %v803 = vld [vmem:[%s1 + $0x1638] sm:$0xff]
  %v804 = vld [vmem:[%s1 + $0x1640] sm:$0xff]
  %v805 = vld [vmem:[%s1 + $0x1648] sm:$0xff]
  %v806 = vld [vmem:[%s1 + $0x1650] sm:$0xff]
  %v807 = vld [vmem:[%s1 + $0x1658] sm:$0xff]
  %v808 = vld [vmem:[%s1 + $0x1660] sm:$0xff]
  %v809 = vld [vmem:[%s1 + $0x1668] sm:$0xff]
  %v810 = vld [vmem:[%s1 + $0x1670] sm:$0xff]
  %v811 = vld [vmem:[%s1 + $0x1678] sm:$0xff]
  %v812 = vld [vmem:[%s1 + $0x1680] sm:$0xff]
  %v813 = vld [vmem:[%s1 + $0x1688] sm:$0xff]
  %v814 = vld [vmem:[%s1 + $0x1690] sm:$0xff]
  %v815 = vld [vmem:[%s1 + $0x1698] sm:$0xff]
  %v816 = vld [vmem:[%s1 + $0x16a0] sm:$0xff]
  %v817 = vld [vmem:[%s1 + $0x16a8] sm:$0xff]
  %v818 = vld [vmem:[%s1 + $0x16b0] sm:$0xff]
  %v819 = vld [vmem:[%s1 + $0x16b8] sm:$0xff]
  %v820 = vld [vmem:[%s1 + $0x16c0] sm:$0xff]
  %v821 = vld [vmem:[%s1 + $0x16c8] sm:$0xff]
  %v822 = vld [vmem:[%s1 + $0x16d0] sm:$0xff]
  %v823 = vld [vmem:[%s1 + $0x16d8] sm:$0xff]
  %v824 = vld [vmem:[%s1 + $0x16e0] sm:$0xff]
  %v825 = vld [vmem:[%s1 + $0x16e8] sm:$0xff]
  %v826 = vld [vmem:[%s1 + $0x16f0] sm:$0xff]
  %v827 = vld [vmem:[%s1 + $0x16f8] sm:$0xff]
  %v828 = vld [vmem:[%s1 + $0x1700] sm:$0xff]
  %v829 = vld [vmem:[%s1 + $0x1708] sm:$0xff]
  %v830 = vld [vmem:[%s1 + $0x1710] sm:$0xff]
  %v831 = vld [vmem:[%s1 + $0x1718] sm:$0xff]
  %v832 = vld [vmem:[%s1 + $0x1720] sm:$0xff]
  %v833 = vld [vmem:[%s1 + $0x1728] sm:$0xff]
  %v834 = vld [vmem:[%s1 + $0x1730] sm:$0xff]
  %v835 = vld [vmem:[%s1 + $0x1738] sm:$0xff]
  %v836 = vld [vmem:[%s1 + $0x1740] sm:$0xff]
  %v837 = vld [vmem:[%s1 + $0x1748] sm:$0xff]
  %v838 = vld [vmem:[%s1 + $0x1750] sm:$0xff]
  %v839 = vld [vmem:[%s1 + $0x1758] sm:$0xff]
  %v840 = vld [vmem:[%s1 + $0x1760] sm:$0xff]
  %v841 = vld [vmem:[%s1 + $0x1768] sm:$0xff]
  %v842 = vld [vmem:[%s1 + $0x1770] sm:$0xff]
  %v843 = vld [vmem:[%s1 + $0x1778] sm:$0xff]
  %v844 = vld [vmem:[%s1 + $0x1780] sm:$0xff]
  %v845 = vld [vmem:[%s1 + $0x1788] sm:$0xff]
  %v846 = vld [vmem:[%s1 + $0x1790] sm:$0xff]
  %v847 = vld [vmem:[%s1 + $0x1798] sm:$0xff]
  %v848 = vld [vmem:[%s1 + $0x17a0] sm:$0xff]
  %v849 = vld [vmem:[%s1 + $0x17a8] sm:$0xff]
  %v850 = vld [vmem:[%s1 + $0x17b0] sm:$0xff]
  %v851 = vld [vmem:[%s1 + $0x17b8] sm:$0xff]
  %v852 = vld [vmem:[%s1 + $0x17c0] sm:$0xff]
  %v853 = vld [vmem:[%s1 + $0x17c8] sm:$0xff]
  %v854 = vld [vmem:[%s1 + $0x17d0] sm:$0xff]
  %v855 = vld [vmem:[%s1 + $0x17d8] sm:$0xff]
  %v856 = vld [vmem:[%s1 + $0x17e0] sm:$0xff]
  %v857 = vld [vmem:[%s1 + $0x17e8] sm:$0xff]
  %v858 = vld [vmem:[%s1 + $0x17f0] sm:$0xff]
  %v859 = vld [vmem:[%s1 + $0x17f8] sm:$0xff]
  %v860 = vld [vmem:[%s1 + $0x1800] sm:$0xff]
  %v861 = vld [vmem:[%s1 + $0x1808] sm:$0xff]
  %v862 = vld [vmem:[%s1 + $0x1810] sm:$0xff]
  %v863 = vld [vmem:[%s1 + $0x1818] sm:$0xff]
  %v864 = vld [vmem:[%s1 + $0x1820] sm:$0xff]
  %v865 = vld [vmem:[%s1 + $0x1828] sm:$0xff]
  %v866 = vld [vmem:[%s1 + $0x1830] sm:$0xff]
  %v867 = vld [vmem:[%s1 + $0x1838] sm:$0xff]
  %v868 = vld [vmem:[%s1 + $0x1840] sm:$0xff]
  %v869 = vld [vmem:[%s1 + $0x1848] sm:$0xff]
  %v870 = vld [vmem:[%s1 + $0x1850] sm:$0xff]
  %v871 = vld [vmem:[%s1 + $0x1858] sm:$0xff]
  %v872 = vld [vmem:[%s1 + $0x1860] sm:$0xff]
  %v873 = vld [vmem:[%s1 + $0x1868] sm:$0xff]
  %v874 = vld [vmem:[%s1 + $0x1870] sm:$0xff]
  %v875 = vld [vmem:[%s1 + $0x1878] sm:$0xff]
  %v876 = vld [vmem:[%s1 + $0x1880] sm:$0xff]
  %v877 = vld [vmem:[%s1 + $0x1888] sm:$0xff]
  %v878 = vld [vmem:[%s1 + $0x1890] sm:$0xff]
  %v879 = vld [vmem:[%s1 + $0x1898] sm:$0xff]
  %v880 = vld [vmem:[%s1 + $0x18a0] sm:$0xff]
  %v881 = vld [vmem:[%s1 + $0x18a8] sm:$0xff]
  %v882 = vld [vmem:[%s1 + $0x18b0] sm:$0xff]
  %v883 = vld [vmem:[%s1 + $0x18b8] sm:$0xff]
  %v884 = vld [vmem:[%s1 + $0x18c0] sm:$0xff]
  %v885 = vld [vmem:[%s1 + $0x18c8] sm:$0xff]
  %v886 = vld [vmem:[%s1 + $0x18d0] sm:$0xff]
  %v887 = vld [vmem:[%s1 + $0x18d8] sm:$0xff]
  %v888 = vld [vmem:[%s1 + $0x18e0] sm:$0xff]
  %v889 = vld [vmem:[%s1 + $0x18e8] sm:$0xff]
  %v890 = vld [vmem:[%s1 + $0x18f0] sm:$0xff]
  %v891 = vld [vmem:[%s1 + $0x18f8] sm:$0xff]
  %v892 = vld [vmem:[%s1 + $0x1900] sm:$0xff]
  %v893 = vld [vmem:[%s1 + $0x1908] sm:$0xff]
  %v894 = vld [vmem:[%s1 + $0x1910] sm:$0xff]
  %v895 = vld [vmem:[%s1 + $0x1918] sm:$0xff]
  %v896 = vld [vmem:[%s1 + $0x1920] sm:$0xff]
  %v897 = vld [vmem:[%s1 + $0x1928] sm:$0xff]
  %v898 = vld [vmem:[%s1 + $0x1930] sm:$0xff]
  %v899 = vld [vmem:[%s1 + $0x1938] sm:$0xff]
  %v900 = vld [vmem:[%s1 + $0x1940] sm:$0xff]
  %v901 = vld [vmem:[%s1 + $0x1948] sm:$0xff]
  %v902 = vld [vmem:[%s1 + $0x1950] sm:$0xff]
  %v903 = vld [vmem:[%s1 + $0x1958] sm:$0xff]
  %v904 = vld [vmem:[%s1 + $0x1960] sm:$0xff]
  %v905 = vld [vmem:[%s1 + $0x1968] sm:$0xff]
  %v906 = vld [vmem:[%s1 + $0x1970] sm:$0xff]
  %v907 = vld [vmem:[%s1 + $0x1978] sm:$0xff]
  %v908 = vld [vmem:[%s1 + $0x1980] sm:$0xff]
  %v909 = vld [vmem:[%s1 + $0x1988] sm:$0xff]
  %v910 = vld [vmem:[%s1 + $0x1990] sm:$0xff]
  %v911 = vld [vmem:[%s1 + $0x1998] sm:$0xff]
  %v912 = vld [vmem:[%s1 + $0x19a0] sm:$0xff]
  %v913 = vld [vmem:[%s1 + $0x19a8] sm:$0xff]
  %v914 = vld [vmem:[%s1 + $0x19b0] sm:$0xff]
  %v915 = vld [vmem:[%s1 + $0x19b8] sm:$0xff]
  %v916 = vld [vmem:[%s1 + $0x19c0] sm:$0xff]
  %v917 = vld [vmem:[%s1 + $0x19c8] sm:$0xff]
  %v918 = vld [vmem:[%s1 + $0x19d0] sm:$0xff]
  %v919 = vld [vmem:[%s1 + $0x19d8] sm:$0xff]
  %v920 = vld [vmem:[%s1 + $0x19e0] sm:$0xff]
  %v921 = vld [vmem:[%s1 + $0x19e8] sm:$0xff]
  %v922 = vld [vmem:[%s1 + $0x19f0] sm:$0xff]
  %v923 = vld [vmem:[%s1 + $0x19f8] sm:$0xff]
  %v924 = vld [vmem:[%s1 + $0x1a00] sm:$0xff]
  %v925 = vld [vmem:[%s1 + $0x1a08] sm:$0xff]
  %v926 = vld [vmem:[%s1 + $0x1a10] sm:$0xff]
  %v927 = vld [vmem:[%s1 + $0x1a18] sm:$0xff]
  %v928 = vld [vmem:[%s1 + $0x1a20] sm:$0xff]
  %v929 = vld [vmem:[%s1 + $0x1a28] sm:$0xff]
  %v930 = vld [vmem:[%s1 + $0x1a30] sm:$0xff]
  %v931 = vld [vmem:[%s1 + $0x1a38] sm:$0xff]
  %v932 = vld [vmem:[%s1 + $0x1a40] sm:$0xff]
  %v933 = vld [vmem:[%s1 + $0x1a48] sm:$0xff]
  %v934 = vld [vmem:[%s1 + $0x1a50] sm:$0xff]
  %v935 = vld [vmem:[%s1 + $0x1a58] sm:$0xff]
  %v936 = vld [vmem:[%s1 + $0x1a60] sm:$0xff]
  %v937 = vld [vmem:[%s1 + $0x1a68] sm:$0xff]
  %v938 = vld [vmem:[%s1 + $0x1a70] sm:$0xff]
  %v939 = vld [vmem:[%s1 + $0x1a78] sm:$0xff]
  %v940 = vld [vmem:[%s1 + $0x1a80] sm:$0xff]
  %v941 = vld [vmem:[%s1 + $0x1a88] sm:$0xff]
  %v942 = vld [vmem:[%s1 + $0x1a90] sm:$0xff]
  %v943 = vld [vmem:[%s1 + $0x1a98] sm:$0xff]
  %v944 = vld [vmem:[%s1 + $0x1aa0] sm:$0xff]
  %v945 = vld [vmem:[%s1 + $0x1aa8] sm:$0xff]
  %v946 = vld [vmem:[%s1 + $0x1ab0] sm:$0xff]
  %v947 = vld [vmem:[%s1 + $0x1ab8] sm:$0xff]
  %v948 = vld [vmem:[%s1 + $0x1ac0] sm:$0xff]
  %v949 = vld [vmem:[%s1 + $0x1ac8] sm:$0xff]
  %v950 = vld [vmem:[%s1 + $0x1ad0] sm:$0xff]
  %v951 = vld [vmem:[%s1 + $0x1ad8] sm:$0xff]
  %v952 = vld [vmem:[%s1 + $0x1ae0] sm:$0xff]
  %v953 = vld [vmem:[%s1 + $0x1ae8] sm:$0xff]
  %v954 = vld [vmem:[%s1 + $0x1af0] sm:$0xff]
  %v955 = vld [vmem:[%s1 + $0x1af8] sm:$0xff]
  %v956 = vld [vmem:[%s1 + $0x1b00] sm:$0xff]
  %v957 = vld [vmem:[%s1 + $0x1b08] sm:$0xff]
  %v958 = vld [vmem:[%s1 + $0x1b10] sm:$0xff]
  %v959 = vld [vmem:[%s1 + $0x1b18] sm:$0xff]
  %v960 = vld [vmem:[%s1 + $0x1b20] sm:$0xff]
  %v961 = vld [vmem:[%s1 + $0x1b28] sm:$0xff]
  %v962 = vld [vmem:[%s1 + $0x1b30] sm:$0xff]
  %v963 = vld [vmem:[%s1 + $0x1b38] sm:$0xff]
  %v964 = vld [vmem:[%s1 + $0x1b40] sm:$0xff]
  %v965 = vld [vmem:[%s1 + $0x1b48] sm:$0xff]
  %v966 = vld [vmem:[%s1 + $0x1b50] sm:$0xff]
  %v967 = vld [vmem:[%s1 + $0x1b58] sm:$0xff]
  %v968 = vld [vmem:[%s1 + $0x1b60] sm:$0xff]
  %v969 = vld [vmem:[%s1 + $0x1b68] sm:$0xff]
  %v970 = vld [vmem:[%s1 + $0x1b70] sm:$0xff]
  %v971 = vld [vmem:[%s1 + $0x1b78] sm:$0xff]
  %v972 = vld [vmem:[%s1 + $0x1b80] sm:$0xff]
  %v973 = vld [vmem:[%s1 + $0x1b88] sm:$0xff]
  %v974 = vld [vmem:[%s1 + $0x1b90] sm:$0xff]
  %v975 = vld [vmem:[%s1 + $0x1b98] sm:$0xff]
  %v976 = vld [vmem:[%s1 + $0x1ba0] sm:$0xff]
  %v977 = vld [vmem:[%s1 + $0x1ba8] sm:$0xff]
  %v978 = vld [vmem:[%s1 + $0x1bb0] sm:$0xff]
  %v979 = vld [vmem:[%s1 + $0x1bb8] sm:$0xff]
  %v980 = vld [vmem:[%s1 + $0x1bc0] sm:$0xff]
  %v981 = vld [vmem:[%s1 + $0x1bc8] sm:$0xff]
  %v982 = vld [vmem:[%s1 + $0x1bd0] sm:$0xff]
  %v983 = vld [vmem:[%s1 + $0x1bd8] sm:$0xff]
  %v984 = vld [vmem:[%s1 + $0x1be0] sm:$0xff]
  %v985 = vld [vmem:[%s1 + $0x1be8] sm:$0xff]
  %v986 = vld [vmem:[%s1 + $0x1bf0] sm:$0xff]
  %v987 = vld [vmem:[%s1 + $0x1bf8] sm:$0xff]
  %v988 = vld [vmem:[%s1 + $0x1c00] sm:$0xff]
  %v989 = vld [vmem:[%s1 + $0x1c08] sm:$0xff]
  %v990 = vld [vmem:[%s1 + $0x1c10] sm:$0xff]
  %v991 = vld [vmem:[%s1 + $0x1c18] sm:$0xff]
  %v992 = vld [vmem:[%s1 + $0x1c20] sm:$0xff]
  %v993 = vld [vmem:[%s1 + $0x1c28] sm:$0xff]
  %v994 = vld [vmem:[%s1 + $0x1c30] sm:$0xff]
  %v995 = vld [vmem:[%s1 + $0x1c38] sm:$0xff]
  %v996 = vld [vmem:[%s1 + $0x1c40] sm:$0xff]
  %v997 = vld [vmem:[%s1 + $0x1c48] sm:$0xff]
  %v998 = vld [vmem:[%s1 + $0x1c50] sm:$0xff]
  %v999 = vld [vmem:[%s1 + $0x1c58] sm:$0xff]
  %v1000 = vld [vmem:[%s1 + $0x1c60] sm:$0xff]
  %v1001 = vld [vmem:[%s1 + $0x1c68] sm:$0xff]
  %v1002 = vld [vmem:[%s1 + $0x1c70] sm:$0xff]
  %v1003 = vld [vmem:[%s1 + $0x1c78] sm:$0xff]
  %v1004 = vld [vmem:[%s1 + $0x1c80] sm:$0xff]
  %v1005 = vld [vmem:[%s1 + $0x1c88] sm:$0xff]
  %v1006 = vld [vmem:[%s1 + $0x1c90] sm:$0xff]
  %v1007 = vld [vmem:[%s1 + $0x1c98] sm:$0xff]
  %v1008 = vld [vmem:[%s1 + $0x1ca0] sm:$0xff]
  %v1009 = vld [vmem:[%s1 + $0x1ca8] sm:$0xff]
  %v1010 = vld [vmem:[%s1 + $0x1cb0] sm:$0xff]
  %v1011 = vld [vmem:[%s1 + $0x1cb8] sm:$0xff]
  %v1012 = vld [vmem:[%s1 + $0x1cc0] sm:$0xff]
  %v1013 = vld [vmem:[%s1 + $0x1cc8] sm:$0xff]
  %v1014 = vld [vmem:[%s1 + $0x1cd0] sm:$0xff]
  %v1015 = vld [vmem:[%s1 + $0x1cd8] sm:$0xff]
  %v1016 = vld [vmem:[%s1 + $0x1ce0] sm:$0xff]
  %v1017 = vld [vmem:[%s1 + $0x1ce8] sm:$0xff]
  %v1018 = vld [vmem:[%s1 + $0x1cf0] sm:$0xff]
  %v1019 = vld [vmem:[%s1 + $0x1cf8] sm:$0xff]
  %v1020 = vld [vmem:[%s1 + $0x1d00] sm:$0xff]
  %v1021 = vld [vmem:[%s1 + $0x1d08] sm:$0xff]
  %v1022 = vld [vmem:[%s1 + $0x1d10] sm:$0xff]
  %v1023 = vld [vmem:[%s1 + $0x1d18] sm:$0xff]
  %v1024 = vld [vmem:[%s1 + $0x1d20] sm:$0xff]
  %v1025 = vld [vmem:[%s1 + $0x1d28] sm:$0xff]
  %v1026 = vld [vmem:[%s1 + $0x1d30] sm:$0xff]
  %v1027 = vld [vmem:[%s1 + $0x1d38] sm:$0xff]
  %v1028 = vld [vmem:[%s1 + $0x1d40] sm:$0xff]
  %v1029 = vld [vmem:[%s1 + $0x1d48] sm:$0xff]
  %v1030 = vld [vmem:[%s1 + $0x1d50] sm:$0xff]
  %v1031 = vld [vmem:[%s1 + $0x1d58] sm:$0xff]
  %v1032 = vld [vmem:[%s1 + $0x1d60] sm:$0xff]
  %v1033 = vld [vmem:[%s1 + $0x1d68] sm:$0xff]
  %v1034 = vld [vmem:[%s1 + $0x1d70] sm:$0xff]
  %v1035 = vld [vmem:[%s1 + $0x1d78] sm:$0xff]
  %v1036 = vld [vmem:[%s1 + $0x1d80] sm:$0xff]
  %v1037 = vld [vmem:[%s1 + $0x1d88] sm:$0xff]
  %v1038 = vld [vmem:[%s1 + $0x1d90] sm:$0xff]
  %v1039 = vld [vmem:[%s1 + $0x1d98] sm:$0xff]
  %v1040 = vld [vmem:[%s1 + $0x1da0] sm:$0xff]
  %v1041 = vld [vmem:[%s1 + $0x1da8] sm:$0xff]
  %v1042 = vld [vmem:[%s1 + $0x1db0] sm:$0xff]
  %v1043 = vld [vmem:[%s1 + $0x1db8] sm:$0xff]
  %v1044 = vld [vmem:[%s1 + $0x1dc0] sm:$0xff]
  %v1045 = vld [vmem:[%s1 + $0x1dc8] sm:$0xff]
  %v1046 = vld [vmem:[%s1 + $0x1dd0] sm:$0xff]
  %v1047 = vld [vmem:[%s1 + $0x1dd8] sm:$0xff]
  %v1048 = vld [vmem:[%s1 + $0x1de0] sm:$0xff]
  %v1049 = vld [vmem:[%s1 + $0x1de8] sm:$0xff]
  %v1050 = vld [vmem:[%s1 + $0x1df0] sm:$0xff]
  %v1051 = vld [vmem:[%s1 + $0x1df8] sm:$0xff]
  %v1052 = vld [vmem:[%s1 + $0x1e00] sm:$0xff]
  %v1053 = vld [vmem:[%s1 + $0x1e08] sm:$0xff]
  %v1054 = vld [vmem:[%s1 + $0x1e10] sm:$0xff]
  %v1055 = vld [vmem:[%s1 + $0x1e18] sm:$0xff]
  %v1056 = vld [vmem:[%s1 + $0x1e20] sm:$0xff]
  %v1057 = vld [vmem:[%s1 + $0x1e28] sm:$0xff]
  %v1058 = vld [vmem:[%s1 + $0x1e30] sm:$0xff]
  %v1059 = vld [vmem:[%s1 + $0x1e38] sm:$0xff]
  %v1060 = vld [vmem:[%s1 + $0x1e40] sm:$0xff]
  %v1061 = vld [vmem:[%s1 + $0x1e48] sm:$0xff]
  %v1062 = vld [vmem:[%s1 + $0x1e50] sm:$0xff]
  %v1063 = vld [vmem:[%s1 + $0x1e58] sm:$0xff]
  %v1064 = vld [vmem:[%s1 + $0x1e60] sm:$0xff]
  %v1065 = vld [vmem:[%s1 + $0x1e68] sm:$0xff]
  %v1066 = vld [vmem:[%s1 + $0x1e70] sm:$0xff]
  %v1067 = vld [vmem:[%s1 + $0x1e78] sm:$0xff]
  %v1068 = vld [vmem:[%s1 + $0x1e80] sm:$0xff]
  %v1069 = vld [vmem:[%s1 + $0x1e88] sm:$0xff]
  %v1070 = vld [vmem:[%s1 + $0x1e90] sm:$0xff]
  %v1071 = vld [vmem:[%s1 + $0x1e98] sm:$0xff]
  %v1072 = vld [vmem:[%s1 + $0x1ea0] sm:$0xff]
  %v1073 = vld [vmem:[%s1 + $0x1ea8] sm:$0xff]
  %v1074 = vld [vmem:[%s1 + $0x1eb0] sm:$0xff]
  %v1075 = vld [vmem:[%s1 + $0x1eb8] sm:$0xff]
  %v1076 = vld [vmem:[%s1 + $0x1ec0] sm:$0xff]
  %v1077 = vld [vmem:[%s1 + $0x1ec8] sm:$0xff]
  %v1078 = vld [vmem:[%s1 + $0x1ed0] sm:$0xff]
  %v1079 = vld [vmem:[%s1 + $0x1ed8] sm:$0xff]
  %v1080 = vld [vmem:[%s1 + $0x1ee0] sm:$0xff]
  %v1081 = vld [vmem:[%s1 + $0x1ee8] sm:$0xff]
  %v1082 = vld [vmem:[%s1 + $0x1ef0] sm:$0xff]
  %v1083 = vld [vmem:[%s1 + $0x1ef8] sm:$0xff]
  %v1084 = vld [vmem:[%s1 + $0x1f00] sm:$0xff]
  %v1085 = vld [vmem:[%s1 + $0x1f08] sm:$0xff]
  %v1086 = vld [vmem:[%s1 + $0x1f10] sm:$0xff]
  %v1087 = vld [vmem:[%s1 + $0x1f18] sm:$0xff]
  %v1088 = vld [vmem:[%s1 + $0x1f20] sm:$0xff]
  %v1089 = vld [vmem:[%s1 + $0x1f28] sm:$0xff]
  %v1090 = vld [vmem:[%s1 + $0x1f30] sm:$0xff]
  %v1091 = vld [vmem:[%s1 + $0x1f38] sm:$0xff]
  %v1092 = vld [vmem:[%s1 + $0x1f40] sm:$0xff]
  %v1093 = vld [vmem:[%s1 + $0x1f48] sm:$0xff]
  %v1094 = vld [vmem:[%s1 + $0x1f50] sm:$0xff]
  %v1095 = vld [vmem:[%s1 + $0x1f58] sm:$0xff]
  %v1096 = vld [vmem:[%s1 + $0x1f60] sm:$0xff]
  %v1097 = vld [vmem:[%s1 + $0x1f68] sm:$0xff]
  %v1098 = vld [vmem:[%s1 + $0x1f70] sm:$0xff]
  %v1099 = vld [vmem:[%s1 + $0x1f78] sm:$0xff]
  %v1100 = vld [vmem:[%s1 + $0x1f80] sm:$0xff]
  %v1101 = vld [vmem:[%s1 + $0x1f88] sm:$0xff]
  %v1102 = vld [vmem:[%s1 + $0x1f90] sm:$0xff]
  %v1103 = vld [vmem:[%s1 + $0x1f98] sm:$0xff]
  %v1104 = vld [vmem:[%s1 + $0x1fa0] sm:$0xff]
  %v1105 = vld [vmem:[%s1 + $0x1fa8] sm:$0xff]
  %v1106 = vld [vmem:[%s1 + $0x1fb0] sm:$0xff]
  %v1107 = vld [vmem:[%s1 + $0x1fb8] sm:$0xff]
  %v1108 = vld [vmem:[%s1 + $0x1fc0] sm:$0xff]
  %v1109 = vld [vmem:[%s1 + $0x1fc8] sm:$0xff]
  %v1110 = vld [vmem:[%s1 + $0x1fd0] sm:$0xff]
  %v1111 = vld [vmem:[%s1 + $0x1fd8] sm:$0xff]
  %v1112 = vld [vmem:[%s1 + $0x1fe0] sm:$0xff]
  %v1113 = vld [vmem:[%s1 + $0x1fe8] sm:$0xff]
  %v1114 = vld [vmem:[%s1 + $0x1ff0] sm:$0xff]
  %v1115 = vld [vmem:[%s1 + $0x1ff8] sm:$0xff]
  %v1116 = vld [vmem:[%s1 + $0x2000] sm:$0xff]
  %v1117 = vld [vmem:[%s1 + $0x2008] sm:$0xff]
  %v1118 = vld [vmem:[%s1 + $0x2010] sm:$0xff]
  %v1119 = vld [vmem:[%s1 + $0x2018] sm:$0xff]
  %v1120 = vld [vmem:[%s1 + $0x2020] sm:$0xff]
  %v1121 = vld [vmem:[%s1 + $0x2028] sm:$0xff]
  %v1122 = vld [vmem:[%s1 + $0x2030] sm:$0xff]
  %v1123 = vld [vmem:[%s1 + $0x2038] sm:$0xff]
  %v1124 = vld [vmem:[%s1 + $0x2040] sm:$0xff]
  %v1125 = vld [vmem:[%s1 + $0x2048] sm:$0xff]
  %v1126 = vld [vmem:[%s1 + $0x2050] sm:$0xff]
  %v1127 = vld [vmem:[%s1 + $0x2058] sm:$0xff]
  %v1128 = vld [vmem:[%s1 + $0x2060] sm:$0xff]
  %v1129 = vld [vmem:[%s1 + $0x2068] sm:$0xff]
  %v1130 = vld [vmem:[%s1 + $0x2070] sm:$0xff]
  %v1131 = vld [vmem:[%s1 + $0x2078] sm:$0xff]
  %v1132 = vld [vmem:[%s1 + $0x2080] sm:$0xff]
  %v1133 = vld [vmem:[%s1 + $0x2088] sm:$0xff]
  %v1134 = vld [vmem:[%s1 + $0x2090] sm:$0xff]
  %v1135 = vld [vmem:[%s1 + $0x2098] sm:$0xff]
  %v1136 = vld [vmem:[%s1 + $0x20a0] sm:$0xff]
  %v1137 = vld [vmem:[%s1 + $0x20a8] sm:$0xff]
  %v1138 = vld [vmem:[%s1 + $0x20b0] sm:$0xff]
  %v1139 = vld [vmem:[%s1 + $0x20b8] sm:$0xff]
  %v1140 = vld [vmem:[%s1 + $0x20c0] sm:$0xff]
  %v1141 = vld [vmem:[%s1 + $0x20c8] sm:$0xff]
  %v1142 = vld [vmem:[%s1 + $0x20d0] sm:$0xff]
  %v1143 = vld [vmem:[%s1 + $0x20d8] sm:$0xff]
  %v1144 = vld [vmem:[%s1 + $0x20e0] sm:$0xff]
  %v1145 = vld [vmem:[%s1 + $0x20e8] sm:$0xff]
  %v1146 = vld [vmem:[%s1 + $0x20f0] sm:$0xff]
  %v1147 = vld [vmem:[%s1 + $0x20f8] sm:$0xff]
  %v1148 = vld [vmem:[%s1 + $0x2100] sm:$0xff]
  %v1149 = vld [vmem:[%s1 + $0x2108] sm:$0xff]
  %v1150 = vld [vmem:[%s1 + $0x2110] sm:$0xff]
  %v1151 = vld [vmem:[%s1 + $0x2118] sm:$0xff]
  %v1152 = vld [vmem:[%s1 + $0x2120] sm:$0xff]
  %v1153 = vld [vmem:[%s1 + $0x2128] sm:$0xff]
  %v1154 = vld [vmem:[%s1 + $0x2130] sm:$0xff]
  %v1155 = vld [vmem:[%s1 + $0x2138] sm:$0xff]
  %v1156 = vld [vmem:[%s1 + $0x2140] sm:$0xff]
  %v1157 = vld [vmem:[%s1 + $0x2148] sm:$0xff]
  %v1158 = vld [vmem:[%s1 + $0x2150] sm:$0xff]
  %v1159 = vld [vmem:[%s1 + $0x2158] sm:$0xff]
  %v1160 = vld [vmem:[%s1 + $0x2160] sm:$0xff]
  %v1161 = vld [vmem:[%s1 + $0x2168] sm:$0xff]
  %v1162 = vld [vmem:[%s1 + $0x2170] sm:$0xff]
  %v1163 = vld [vmem:[%s1 + $0x2178] sm:$0xff]
  %v1164 = vld [vmem:[%s1 + $0x2180] sm:$0xff]
  %v1165 = vld [vmem:[%s1 + $0x2188] sm:$0xff]
  %v1166 = vld [vmem:[%s1 + $0x2190] sm:$0xff]
  %v1167 = vld [vmem:[%s1 + $0x2198] sm:$0xff]
  %v1168 = vld [vmem:[%s1 + $0x21a0] sm:$0xff]
  %v1169 = vld [vmem:[%s1 + $0x21a8] sm:$0xff]
  %v1170 = vld [vmem:[%s1 + $0x21b0] sm:$0xff]
  %v1171 = vld [vmem:[%s1 + $0x21b8] sm:$0xff]
  %v1172 = vld [vmem:[%s1 + $0x21c0] sm:$0xff]
  %v1173 = vld [vmem:[%s1 + $0x21c8] sm:$0xff]
  %v1174 = vld [vmem:[%s1 + $0x21d0] sm:$0xff]
  %v1175 = vld [vmem:[%s1 + $0x21d8] sm:$0xff]
  %v1176 = vld [vmem:[%s1 + $0x21e0] sm:$0xff]
  %v1177 = vld [vmem:[%s1 + $0x21e8] sm:$0xff]
  %v1178 = vld [vmem:[%s1 + $0x21f0] sm:$0xff]
  %v1179 = vld [vmem:[%s1 + $0x21f8] sm:$0xff]
  %v1180 = vld [vmem:[%s1 + $0x2200] sm:$0xff]
  %v1181 = vld [vmem:[%s1 + $0x2208] sm:$0xff]
  %v1182 = vld [vmem:[%s1 + $0x2210] sm:$0xff]
  %v1183 = vld [vmem:[%s1 + $0x2218] sm:$0xff]
  %v1184 = vld [vmem:[%s1 + $0x2220] sm:$0xff]
  %v1185 = vld [vmem:[%s1 + $0x2228] sm:$0xff]
  %v1186 = vld [vmem:[%s1 + $0x2230] sm:$0xff]
  %v1187 = vld [vmem:[%s1 + $0x2238] sm:$0xff]
  %v1188 = vld [vmem:[%s1 + $0x2240] sm:$0xff]
  %v1189 = vld [vmem:[%s1 + $0x2248] sm:$0xff]
  %v1190 = vld [vmem:[%s1 + $0x2250] sm:$0xff]
  %v1191 = vld [vmem:[%s1 + $0x2258] sm:$0xff]
  %v1192 = vld [vmem:[%s1 + $0x2260] sm:$0xff]
  %v1193 = vld [vmem:[%s1 + $0x2268] sm:$0xff]
  %v1194 = vld [vmem:[%s1 + $0x2270] sm:$0xff]
  %v1195 = vld [vmem:[%s1 + $0x2278] sm:$0xff]
  %v1196 = vld [vmem:[%s1 + $0x2280] sm:$0xff]
  %v1197 = vld [vmem:[%s1 + $0x2288] sm:$0xff]
  %v1198 = vld [vmem:[%s1 + $0x2290] sm:$0xff]
  %v1199 = vld [vmem:[%s1 + $0x2298] sm:$0xff]
  %v1200 = vld [vmem:[%s1 + $0x22a0] sm:$0xff]
  %v1201 = vld [vmem:[%s1 + $0x22a8] sm:$0xff]
  %v1202 = vld [vmem:[%s1 + $0x22b0] sm:$0xff]
  %v1203 = vld [vmem:[%s1 + $0x22b8] sm:$0xff]
  %v1204 = vld [vmem:[%s1 + $0x22c0] sm:$0xff]
  %v1205 = vld [vmem:[%s1 + $0x22c8] sm:$0xff]
  %v1206 = vld [vmem:[%s1 + $0x22d0] sm:$0xff]
  %v1207 = vld [vmem:[%s1 + $0x22d8] sm:$0xff]
  %v1208 = vld [vmem:[%s1 + $0x22e0] sm:$0xff]
  %v1209 = vld [vmem:[%s1 + $0x22e8] sm:$0xff]
  %v1210 = vld [vmem:[%s1 + $0x22f0] sm:$0xff]
  %v1211 = vld [vmem:[%s1 + $0x22f8] sm:$0xff]
  %v1212 = vld [vmem:[%s1 + $0x2300] sm:$0xff]
  %v1213 = vld [vmem:[%s1 + $0x2308] sm:$0xff]
  %v1214 = vld [vmem:[%s1 + $0x2310] sm:$0xff]
  %v1215 = vld [vmem:[%s1 + $0x2318] sm:$0xff]
  %v1216 = vld [vmem:[%s1 + $0x2320] sm:$0xff]
  %v1217 = vld [vmem:[%s1 + $0x2328] sm:$0xff]
  %v1218 = vld [vmem:[%s1 + $0x2330] sm:$0xff]
  %v1219 = vld [vmem:[%s1 + $0x2338] sm:$0xff]
  %v1220 = vld [vmem:[%s1 + $0x2340] sm:$0xff]
  %v1221 = vld [vmem:[%s1 + $0x2348] sm:$0xff]
  %v1222 = vld [vmem:[%s1 + $0x2350] sm:$0xff]
  %v1223 = vld [vmem:[%s1 + $0x2358] sm:$0xff]
  %v1224 = vld [vmem:[%s1 + $0x2360] sm:$0xff]
  %v1225 = vld [vmem:[%s1 + $0x2368] sm:$0xff]
  %v1226 = vld [vmem:[%s1 + $0x2370] sm:$0xff]
  %v1227 = vld [vmem:[%s1 + $0x2378] sm:$0xff]
  %v1228 = vld [vmem:[%s1 + $0x2380] sm:$0xff]
  %v1229 = vld [vmem:[%s1 + $0x2388] sm:$0xff]
  %v1230 = vld [vmem:[%s1 + $0x2390] sm:$0xff]
  %v1231 = vld [vmem:[%s1 + $0x2398] sm:$0xff]
  %v1232 = vld [vmem:[%s1 + $0x23a0] sm:$0xff]
  %v1233 = vld [vmem:[%s1 + $0x23a8] sm:$0xff]
  %v1234 = vld [vmem:[%s1 + $0x23b0] sm:$0xff]
  %v1235 = vld [vmem:[%s1 + $0x23b8] sm:$0xff]
  %v1236 = vld [vmem:[%s1 + $0x23c0] sm:$0xff]
  %v1237 = vld [vmem:[%s1 + $0x23c8] sm:$0xff]
  %v1238 = vld [vmem:[%s1 + $0x23d0] sm:$0xff]
  %v1239 = vld [vmem:[%s1 + $0x23d8] sm:$0xff]
  %v1240 = vld [vmem:[%s1 + $0x23e0] sm:$0xff]
  %v1241 = vld [vmem:[%s1 + $0x23e8] sm:$0xff]
  %v1242 = vld [vmem:[%s1 + $0x23f0] sm:$0xff]
  %v1243 = vld [vmem:[%s1 + $0x23f8] sm:$0xff]
  %v1244 = vld [vmem:[%s2] sm:$0x1]
  %v1246 = vperm.slane %v1244, 0
  %1248 = vmatpush.msra.mxu0 %v107
  %1249 = vmatpush.msra.mxu0 %v106
  %1250 = vmatpush.msra.mxu0 %v105
  %1251 = vmatpush.msra.mxu0 %v104
  %1252 = vmatpush.msra.mxu0 %v103
  %1253 = vmatpush.msra.mxu0 %v102
  %1254 = vmatpush.msra.mxu0 %v101
  %1255 = vmatpush.msra.mxu0 %v100
  %1256 = vmatpush.msra.mxu0 %v99
  %1257 = vmatpush.msra.mxu0 %v98
  %1258 = vmatpush.msra.mxu0 %v97
  %1259 = vmatpush.msra.mxu0 %v96
  %1260 = vmatpush.msra.mxu0 %v95
  %1261 = vmatpush.msra.mxu0 %v94
  %1262 = vmatpush.msra.mxu0 %v93
  %1263 = vmatpush.msra.mxu0 %v92
  %1264 = vmatmul.f32.gmra.mxu0 %v20
  %v1265 = vpop.f32.mrf.mxu0
  %v1266 = vadd.f32 %v1246, %v1265
  %1267 = vdwg.mxu0
  %1268 = vmatpush.msra.mxu0 %v123
  %1269 = vmatpush.msra.mxu0 %v122
  %1270 = vmatpush.msra.mxu0 %v121
  %1271 = vmatpush.msra.mxu0 %v120
  %1272 = vmatpush.msra.mxu0 %v119
  %1273 = vmatpush.msra.mxu0 %v118
  %1274 = vmatpush.msra.mxu0 %v117
  %1275 = vmatpush.msra.mxu0 %v116
  %1276 = vmatpush.msra.mxu0 %v115
  %1277 = vmatpush.msra.mxu0 %v114
  %1278 = vmatpush.msra.mxu0 %v113
  %1279 = vmatpush.msra.mxu0 %v112
  %1280 = vmatpush.msra.mxu0 %v111
  %1281 = vmatpush.msra.mxu0 %v110
  %1282 = vmatpush.msra.mxu0 %v109
  %1283 = vmatpush.msra.mxu0 %v108
  %1284 = vmatmul.f32.gmra.mxu0 %v21
  %v1285 = vpop.f32.mrf.mxu0
  %v1286 = vadd.f32 %v1266, %v1285
  %1287 = vdwg.mxu0
  %1288 = vmatpush.msra.mxu0 %v139
  %1289 = vmatpush.msra.mxu0 %v138
  %1290 = vmatpush.msra.mxu0 %v137
  %1291 = vmatpush.msra.mxu0 %v136
  %1292 = vmatpush.msra.mxu0 %v135
  %1293 = vmatpush.msra.mxu0 %v134
  %1294 = vmatpush.msra.mxu0 %v133
  %1295 = vmatpush.msra.mxu0 %v132
  %1296 = vmatpush.msra.mxu0 %v131
  %1297 = vmatpush.msra.mxu0 %v130
  %1298 = vmatpush.msra.mxu0 %v129
  %1299 = vmatpush.msra.mxu0 %v128
  %1300 = vmatpush.msra.mxu0 %v127
  %1301 = vmatpush.msra.mxu0 %v126
  %1302 = vmatpush.msra.mxu0 %v125
  %1303 = vmatpush.msra.mxu0 %v124
  %1304 = vmatmul.f32.gmra.mxu0 %v22
  %v1305 = vpop.f32.mrf.mxu0
  %v1306 = vadd.f32 %v1286, %v1305
  %1307 = vdwg.mxu0
  %1308 = vmatpush.msra.mxu0 %v155
  %1309 = vmatpush.msra.mxu0 %v154
  %1310 = vmatpush.msra.mxu0 %v153
  %1311 = vmatpush.msra.mxu0 %v152
  %1312 = vmatpush.msra.mxu0 %v151
  %1313 = vmatpush.msra.mxu0 %v150
  %1314 = vmatpush.msra.mxu0 %v149
  %1315 = vmatpush.msra.mxu0 %v148
  %1316 = vmatpush.msra.mxu0 %v147
  %1317 = vmatpush.msra.mxu0 %v146
  %1318 = vmatpush.msra.mxu0 %v145
  %1319 = vmatpush.msra.mxu0 %v144
  %1320 = vmatpush.msra.mxu0 %v143
  %1321 = vmatpush.msra.mxu0 %v142
  %1322 = vmatpush.msra.mxu0 %v141
  %1323 = vmatpush.msra.mxu0 %v140
  %1324 = vmatmul.f32.gmra.mxu0 %v23
  %v1325 = vpop.f32.mrf.mxu0
  %v1326 = vadd.f32 %v1306, %v1325
  %1327 = vdwg.mxu0
  %1328 = vmatpush.msra.mxu0 %v171
  %1329 = vmatpush.msra.mxu0 %v170
  %1330 = vmatpush.msra.mxu0 %v169
  %1331 = vmatpush.msra.mxu0 %v168
  %1332 = vmatpush.msra.mxu0 %v167
  %1333 = vmatpush.msra.mxu0 %v166
  %1334 = vmatpush.msra.mxu0 %v165
  %1335 = vmatpush.msra.mxu0 %v164
  %1336 = vmatpush.msra.mxu0 %v163
  %1337 = vmatpush.msra.mxu0 %v162
  %1338 = vmatpush.msra.mxu0 %v161
  %1339 = vmatpush.msra.mxu0 %v160
  %1340 = vmatpush.msra.mxu0 %v159
  %1341 = vmatpush.msra.mxu0 %v158
  %1342 = vmatpush.msra.mxu0 %v157
  %1343 = vmatpush.msra.mxu0 %v156
  %1344 = vmatmul.f32.gmra.mxu0 %v24
  %v1345 = vpop.f32.mrf.mxu0
  %v1346 = vadd.f32 %v1326, %v1345
  %1347 = vdwg.mxu0
  %1348 = vmatpush.msra.mxu0 %v187
  %1349 = vmatpush.msra.mxu0 %v186
  %1350 = vmatpush.msra.mxu0 %v185
  %1351 = vmatpush.msra.mxu0 %v184
  %1352 = vmatpush.msra.mxu0 %v183
  %1353 = vmatpush.msra.mxu0 %v182
  %1354 = vmatpush.msra.mxu0 %v181
  %1355 = vmatpush.msra.mxu0 %v180
  %1356 = vmatpush.msra.mxu0 %v179
  %1357 = vmatpush.msra.mxu0 %v178
  %1358 = vmatpush.msra.mxu0 %v177
  %1359 = vmatpush.msra.mxu0 %v176
  %1360 = vmatpush.msra.mxu0 %v175
  %1361 = vmatpush.msra.mxu0 %v174
  %1362 = vmatpush.msra.mxu0 %v173
  %1363 = vmatpush.msra.mxu0 %v172
  %1364 = vmatmul.f32.gmra.mxu0 %v25
  %v1365 = vpop.f32.mrf.mxu0
  %v1366 = vadd.f32 %v1346, %v1365
  %1367 = vdwg.mxu0
  %1368 = vmatpush.msra.mxu0 %v203
  %1369 = vmatpush.msra.mxu0 %v202
  %1370 = vmatpush.msra.mxu0 %v201
  %1371 = vmatpush.msra.mxu0 %v200
  %1372 = vmatpush.msra.mxu0 %v199
  %1373 = vmatpush.msra.mxu0 %v198
  %1374 = vmatpush.msra.mxu0 %v197
  %1375 = vmatpush.msra.mxu0 %v196
  %1376 = vmatpush.msra.mxu0 %v195
  %1377 = vmatpush.msra.mxu0 %v194
  %1378 = vmatpush.msra.mxu0 %v193
  %1379 = vmatpush.msra.mxu0 %v192
  %1380 = vmatpush.msra.mxu0 %v191
  %1381 = vmatpush.msra.mxu0 %v190
  %1382 = vmatpush.msra.mxu0 %v189
  %1383 = vmatpush.msra.mxu0 %v188
  %1384 = vmatmul.f32.gmra.mxu0 %v26
  %v1385 = vpop.f32.mrf.mxu0
  %v1386 = vadd.f32 %v1366, %v1385
  %1387 = vdwg.mxu0
  %1388 = vmatpush.msra.mxu0 %v219
  %1389 = vmatpush.msra.mxu0 %v218
  %1390 = vmatpush.msra.mxu0 %v217
  %1391 = vmatpush.msra.mxu0 %v216
  %1392 = vmatpush.msra.mxu0 %v215
  %1393 = vmatpush.msra.mxu0 %v214
  %1394 = vmatpush.msra.mxu0 %v213
  %1395 = vmatpush.msra.mxu0 %v212
  %1396 = vmatpush.msra.mxu0 %v211
  %1397 = vmatpush.msra.mxu0 %v210
  %1398 = vmatpush.msra.mxu0 %v209
  %1399 = vmatpush.msra.mxu0 %v208
  %1400 = vmatpush.msra.mxu0 %v207
  %1401 = vmatpush.msra.mxu0 %v206
  %1402 = vmatpush.msra.mxu0 %v205
  %1403 = vmatpush.msra.mxu0 %v204
  %1404 = vmatmul.f32.gmra.mxu0 %v27
  %v1405 = vpop.f32.mrf.mxu0
  %v1406 = vadd.f32 %v1386, %v1405
  %1407 = vdwg.mxu0
  %1408 = vmatpush.msra.mxu0 %v235
  %1409 = vmatpush.msra.mxu0 %v234
  %1410 = vmatpush.msra.mxu0 %v233
  %1411 = vmatpush.msra.mxu0 %v232
  %1412 = vmatpush.msra.mxu0 %v231
  %1413 = vmatpush.msra.mxu0 %v230
  %1414 = vmatpush.msra.mxu0 %v229
  %1415 = vmatpush.msra.mxu0 %v228
  %1416 = vmatpush.msra.mxu0 %v227
  %1417 = vmatpush.msra.mxu0 %v226
  %1418 = vmatpush.msra.mxu0 %v225
  %1419 = vmatpush.msra.mxu0 %v224
  %1420 = vmatpush.msra.mxu0 %v223
  %1421 = vmatpush.msra.mxu0 %v222
  %1422 = vmatpush.msra.mxu0 %v221
  %1423 = vmatpush.msra.mxu0 %v220
  %1424 = vmatmul.f32.gmra.mxu0 %v28
  %v1425 = vpop.f32.mrf.mxu0
  %v1426 = vadd.f32 %v1406, %v1425
  %1427 = vdwg.mxu0
  %1428 = vmatpush.msra.mxu0 %v251
  %1429 = vmatpush.msra.mxu0 %v250
  %1430 = vmatpush.msra.mxu0 %v249
  %1431 = vmatpush.msra.mxu0 %v248
  %1432 = vmatpush.msra.mxu0 %v247
  %1433 = vmatpush.msra.mxu0 %v246
  %1434 = vmatpush.msra.mxu0 %v245
  %1435 = vmatpush.msra.mxu0 %v244
  %1436 = vmatpush.msra.mxu0 %v243
  %1437 = vmatpush.msra.mxu0 %v242
  %1438 = vmatpush.msra.mxu0 %v241
  %1439 = vmatpush.msra.mxu0 %v240
  %1440 = vmatpush.msra.mxu0 %v239
  %1441 = vmatpush.msra.mxu0 %v238
  %1442 = vmatpush.msra.mxu0 %v237
  %1443 = vmatpush.msra.mxu0 %v236
  %1444 = vmatmul.f32.gmra.mxu0 %v29
  %v1445 = vpop.f32.mrf.mxu0
  %v1446 = vadd.f32 %v1426, %v1445
  %1447 = vdwg.mxu0
  %1448 = vmatpush.msra.mxu0 %v267
  %1449 = vmatpush.msra.mxu0 %v266
  %1450 = vmatpush.msra.mxu0 %v265
  %1451 = vmatpush.msra.mxu0 %v264
  %1452 = vmatpush.msra.mxu0 %v263
  %1453 = vmatpush.msra.mxu0 %v262
  %1454 = vmatpush.msra.mxu0 %v261
  %1455 = vmatpush.msra.mxu0 %v260
  %1456 = vmatpush.msra.mxu0 %v259
  %1457 = vmatpush.msra.mxu0 %v258
  %1458 = vmatpush.msra.mxu0 %v257
  %1459 = vmatpush.msra.mxu0 %v256
  %1460 = vmatpush.msra.mxu0 %v255
  %1461 = vmatpush.msra.mxu0 %v254
  %1462 = vmatpush.msra.mxu0 %v253
  %1463 = vmatpush.msra.mxu0 %v252
  %1464 = vmatmul.f32.gmra.mxu0 %v30
  %v1465 = vpop.f32.mrf.mxu0
  %v1466 = vadd.f32 %v1446, %v1465
  %1467 = vdwg.mxu0
  %1468 = vmatpush.msra.mxu0 %v283
  %1469 = vmatpush.msra.mxu0 %v282
  %1470 = vmatpush.msra.mxu0 %v281
  %1471 = vmatpush.msra.mxu0 %v280
  %1472 = vmatpush.msra.mxu0 %v279
  %1473 = vmatpush.msra.mxu0 %v278
  %1474 = vmatpush.msra.mxu0 %v277
  %1475 = vmatpush.msra.mxu0 %v276
  %1476 = vmatpush.msra.mxu0 %v275
  %1477 = vmatpush.msra.mxu0 %v274
  %1478 = vmatpush.msra.mxu0 %v273
  %1479 = vmatpush.msra.mxu0 %v272
  %1480 = vmatpush.msra.mxu0 %v271
  %1481 = vmatpush.msra.mxu0 %v270
  %1482 = vmatpush.msra.mxu0 %v269
  %1483 = vmatpush.msra.mxu0 %v268
  %1484 = vmatmul.f32.gmra.mxu0 %v31
  %v1485 = vpop.f32.mrf.mxu0
  %v1486 = vadd.f32 %v1466, %v1485
  %1487 = vdwg.mxu0
  %1488 = vmatpush.msra.mxu0 %v299
  %1489 = vmatpush.msra.mxu0 %v298
  %1490 = vmatpush.msra.mxu0 %v297
  %1491 = vmatpush.msra.mxu0 %v296
  %1492 = vmatpush.msra.mxu0 %v295
  %1493 = vmatpush.msra.mxu0 %v294
  %1494 = vmatpush.msra.mxu0 %v293
  %1495 = vmatpush.msra.mxu0 %v292
  %1496 = vmatpush.msra.mxu0 %v291
  %1497 = vmatpush.msra.mxu0 %v290
  %1498 = vmatpush.msra.mxu0 %v289
  %1499 = vmatpush.msra.mxu0 %v288
  %1500 = vmatpush.msra.mxu0 %v287
  %1501 = vmatpush.msra.mxu0 %v286
  %1502 = vmatpush.msra.mxu0 %v285
  %1503 = vmatpush.msra.mxu0 %v284
  %1504 = vmatmul.f32.gmra.mxu0 %v32
  %v1505 = vpop.f32.mrf.mxu0
  %v1506 = vadd.f32 %v1486, %v1505
  %1507 = vdwg.mxu0
  %1508 = vmatpush.msra.mxu0 %v315
  %1509 = vmatpush.msra.mxu0 %v314
  %1510 = vmatpush.msra.mxu0 %v313
  %1511 = vmatpush.msra.mxu0 %v312
  %1512 = vmatpush.msra.mxu0 %v311
  %1513 = vmatpush.msra.mxu0 %v310
  %1514 = vmatpush.msra.mxu0 %v309
  %1515 = vmatpush.msra.mxu0 %v308
  %1516 = vmatpush.msra.mxu0 %v307
  %1517 = vmatpush.msra.mxu0 %v306
  %1518 = vmatpush.msra.mxu0 %v305
  %1519 = vmatpush.msra.mxu0 %v304
  %1520 = vmatpush.msra.mxu0 %v303
  %1521 = vmatpush.msra.mxu0 %v302
  %1522 = vmatpush.msra.mxu0 %v301
  %1523 = vmatpush.msra.mxu0 %v300
  %1524 = vmatmul.f32.gmra.mxu0 %v33
  %v1525 = vpop.f32.mrf.mxu0
  %v1526 = vadd.f32 %v1506, %v1525
  %1527 = vdwg.mxu0
  %1528 = vmatpush.msra.mxu0 %v331
  %1529 = vmatpush.msra.mxu0 %v330
  %1530 = vmatpush.msra.mxu0 %v329
  %1531 = vmatpush.msra.mxu0 %v328
  %1532 = vmatpush.msra.mxu0 %v327
  %1533 = vmatpush.msra.mxu0 %v326
  %1534 = vmatpush.msra.mxu0 %v325
  %1535 = vmatpush.msra.mxu0 %v324
  %1536 = vmatpush.msra.mxu0 %v323
  %1537 = vmatpush.msra.mxu0 %v322
  %1538 = vmatpush.msra.mxu0 %v321
  %1539 = vmatpush.msra.mxu0 %v320
  %1540 = vmatpush.msra.mxu0 %v319
  %1541 = vmatpush.msra.mxu0 %v318
  %1542 = vmatpush.msra.mxu0 %v317
  %1543 = vmatpush.msra.mxu0 %v316
  %1544 = vmatmul.f32.gmra.mxu0 %v34
  %v1545 = vpop.f32.mrf.mxu0
  %v1546 = vadd.f32 %v1526, %v1545
  %1547 = vdwg.mxu0
  %1548 = vmatpush.msra.mxu0 %v347
  %1549 = vmatpush.msra.mxu0 %v346
  %1550 = vmatpush.msra.mxu0 %v345
  %1551 = vmatpush.msra.mxu0 %v344
  %1552 = vmatpush.msra.mxu0 %v343
  %1553 = vmatpush.msra.mxu0 %v342
  %1554 = vmatpush.msra.mxu0 %v341
  %1555 = vmatpush.msra.mxu0 %v340
  %1556 = vmatpush.msra.mxu0 %v339
  %1557 = vmatpush.msra.mxu0 %v338
  %1558 = vmatpush.msra.mxu0 %v337
  %1559 = vmatpush.msra.mxu0 %v336
  %1560 = vmatpush.msra.mxu0 %v335
  %1561 = vmatpush.msra.mxu0 %v334
  %1562 = vmatpush.msra.mxu0 %v333
  %1563 = vmatpush.msra.mxu0 %v332
  %1564 = vmatmul.f32.gmra.mxu0 %v35
  %v1565 = vpop.f32.mrf.mxu0
  %v1566 = vadd.f32 %v1546, %v1565
  %1567 = vdwg.mxu0
  %1568 = vmatpush.msra.mxu0 %v363
  %1569 = vmatpush.msra.mxu0 %v362
  %1570 = vmatpush.msra.mxu0 %v361
  %1571 = vmatpush.msra.mxu0 %v360
  %1572 = vmatpush.msra.mxu0 %v359
  %1573 = vmatpush.msra.mxu0 %v358
  %1574 = vmatpush.msra.mxu0 %v357
  %1575 = vmatpush.msra.mxu0 %v356
  %1576 = vmatpush.msra.mxu0 %v355
  %1577 = vmatpush.msra.mxu0 %v354
  %1578 = vmatpush.msra.mxu0 %v353
  %1579 = vmatpush.msra.mxu0 %v352
  %1580 = vmatpush.msra.mxu0 %v351
  %1581 = vmatpush.msra.mxu0 %v350
  %1582 = vmatpush.msra.mxu0 %v349
  %1583 = vmatpush.msra.mxu0 %v348
  %1584 = vmatmul.f32.gmra.mxu0 %v36
  %v1585 = vpop.f32.mrf.mxu0
  %v1586 = vadd.f32 %v1566, %v1585
  %1587 = vdwg.mxu0
  %1588 = vmatpush.msra.mxu0 %v379
  %1589 = vmatpush.msra.mxu0 %v378
  %1590 = vmatpush.msra.mxu0 %v377
  %1591 = vmatpush.msra.mxu0 %v376
  %1592 = vmatpush.msra.mxu0 %v375
  %1593 = vmatpush.msra.mxu0 %v374
  %1594 = vmatpush.msra.mxu0 %v373
  %1595 = vmatpush.msra.mxu0 %v372
  %1596 = vmatpush.msra.mxu0 %v371
  %1597 = vmatpush.msra.mxu0 %v370
  %1598 = vmatpush.msra.mxu0 %v369
  %1599 = vmatpush.msra.mxu0 %v368
  %1600 = vmatpush.msra.mxu0 %v367
  %1601 = vmatpush.msra.mxu0 %v366
  %1602 = vmatpush.msra.mxu0 %v365
  %1603 = vmatpush.msra.mxu0 %v364
  %1604 = vmatmul.f32.gmra.mxu0 %v37
  %v1605 = vpop.f32.mrf.mxu0
  %v1606 = vadd.f32 %v1586, %v1605
  %1607 = vdwg.mxu0
  %1608 = vmatpush.msra.mxu0 %v395
  %1609 = vmatpush.msra.mxu0 %v394
  %1610 = vmatpush.msra.mxu0 %v393
  %1611 = vmatpush.msra.mxu0 %v392
  %1612 = vmatpush.msra.mxu0 %v391
  %1613 = vmatpush.msra.mxu0 %v390
  %1614 = vmatpush.msra.mxu0 %v389
  %1615 = vmatpush.msra.mxu0 %v388
  %1616 = vmatpush.msra.mxu0 %v387
  %1617 = vmatpush.msra.mxu0 %v386
  %1618 = vmatpush.msra.mxu0 %v385
  %1619 = vmatpush.msra.mxu0 %v384
  %1620 = vmatpush.msra.mxu0 %v383
  %1621 = vmatpush.msra.mxu0 %v382
  %1622 = vmatpush.msra.mxu0 %v381
  %1623 = vmatpush.msra.mxu0 %v380
  %1624 = vmatmul.f32.gmra.mxu0 %v38
  %v1625 = vpop.f32.mrf.mxu0
  %v1626 = vadd.f32 %v1606, %v1625
  %1627 = vdwg.mxu0
  %1628 = vmatpush.msra.mxu0 %v411
  %1629 = vmatpush.msra.mxu0 %v410
  %1630 = vmatpush.msra.mxu0 %v409
  %1631 = vmatpush.msra.mxu0 %v408
  %1632 = vmatpush.msra.mxu0 %v407
  %1633 = vmatpush.msra.mxu0 %v406
  %1634 = vmatpush.msra.mxu0 %v405
  %1635 = vmatpush.msra.mxu0 %v404
  %1636 = vmatpush.msra.mxu0 %v403
  %1637 = vmatpush.msra.mxu0 %v402
  %1638 = vmatpush.msra.mxu0 %v401
  %1639 = vmatpush.msra.mxu0 %v400
  %1640 = vmatpush.msra.mxu0 %v399
  %1641 = vmatpush.msra.mxu0 %v398
  %1642 = vmatpush.msra.mxu0 %v397
  %1643 = vmatpush.msra.mxu0 %v396
  %1644 = vmatmul.f32.gmra.mxu0 %v39
  %v1645 = vpop.f32.mrf.mxu0
  %v1646 = vadd.f32 %v1626, %v1645
  %1647 = vdwg.mxu0
  %1648 = vmatpush.msra.mxu0 %v427
  %1649 = vmatpush.msra.mxu0 %v426
  %1650 = vmatpush.msra.mxu0 %v425
  %1651 = vmatpush.msra.mxu0 %v424
  %1652 = vmatpush.msra.mxu0 %v423
  %1653 = vmatpush.msra.mxu0 %v422
  %1654 = vmatpush.msra.mxu0 %v421
  %1655 = vmatpush.msra.mxu0 %v420
  %1656 = vmatpush.msra.mxu0 %v419
  %1657 = vmatpush.msra.mxu0 %v418
  %1658 = vmatpush.msra.mxu0 %v417
  %1659 = vmatpush.msra.mxu0 %v416
  %1660 = vmatpush.msra.mxu0 %v415
  %1661 = vmatpush.msra.mxu0 %v414
  %1662 = vmatpush.msra.mxu0 %v413
  %1663 = vmatpush.msra.mxu0 %v412
  %1664 = vmatmul.f32.gmra.mxu0 %v40
  %v1665 = vpop.f32.mrf.mxu0
  %v1666 = vadd.f32 %v1646, %v1665
  %1667 = vdwg.mxu0
  %1668 = vmatpush.msra.mxu0 %v443
  %1669 = vmatpush.msra.mxu0 %v442
  %1670 = vmatpush.msra.mxu0 %v441
  %1671 = vmatpush.msra.mxu0 %v440
  %1672 = vmatpush.msra.mxu0 %v439
  %1673 = vmatpush.msra.mxu0 %v438
  %1674 = vmatpush.msra.mxu0 %v437
  %1675 = vmatpush.msra.mxu0 %v436
  %1676 = vmatpush.msra.mxu0 %v435
  %1677 = vmatpush.msra.mxu0 %v434
  %1678 = vmatpush.msra.mxu0 %v433
  %1679 = vmatpush.msra.mxu0 %v432
  %1680 = vmatpush.msra.mxu0 %v431
  %1681 = vmatpush.msra.mxu0 %v430
  %1682 = vmatpush.msra.mxu0 %v429
  %1683 = vmatpush.msra.mxu0 %v428
  %1684 = vmatmul.f32.gmra.mxu0 %v41
  %v1685 = vpop.f32.mrf.mxu0
  %v1686 = vadd.f32 %v1666, %v1685
  %1687 = vdwg.mxu0
  %1688 = vmatpush.msra.mxu0 %v459
  %1689 = vmatpush.msra.mxu0 %v458
  %1690 = vmatpush.msra.mxu0 %v457
  %1691 = vmatpush.msra.mxu0 %v456
  %1692 = vmatpush.msra.mxu0 %v455
  %1693 = vmatpush.msra.mxu0 %v454
  %1694 = vmatpush.msra.mxu0 %v453
  %1695 = vmatpush.msra.mxu0 %v452
  %1696 = vmatpush.msra.mxu0 %v451
  %1697 = vmatpush.msra.mxu0 %v450
  %1698 = vmatpush.msra.mxu0 %v449
  %1699 = vmatpush.msra.mxu0 %v448
  %1700 = vmatpush.msra.mxu0 %v447
  %1701 = vmatpush.msra.mxu0 %v446
  %1702 = vmatpush.msra.mxu0 %v445
  %1703 = vmatpush.msra.mxu0 %v444
  %1704 = vmatmul.f32.gmra.mxu0 %v42
  %v1705 = vpop.f32.mrf.mxu0
  %v1706 = vadd.f32 %v1686, %v1705
  %1707 = vdwg.mxu0
  %1708 = vmatpush.msra.mxu0 %v475
  %1709 = vmatpush.msra.mxu0 %v474
  %1710 = vmatpush.msra.mxu0 %v473
  %1711 = vmatpush.msra.mxu0 %v472
  %1712 = vmatpush.msra.mxu0 %v471
  %1713 = vmatpush.msra.mxu0 %v470
  %1714 = vmatpush.msra.mxu0 %v469
  %1715 = vmatpush.msra.mxu0 %v468
  %1716 = vmatpush.msra.mxu0 %v467
  %1717 = vmatpush.msra.mxu0 %v466
  %1718 = vmatpush.msra.mxu0 %v465
  %1719 = vmatpush.msra.mxu0 %v464
  %1720 = vmatpush.msra.mxu0 %v463
  %1721 = vmatpush.msra.mxu0 %v462
  %1722 = vmatpush.msra.mxu0 %v461
  %1723 = vmatpush.msra.mxu0 %v460
  %1724 = vmatmul.f32.gmra.mxu0 %v43
  %v1725 = vpop.f32.mrf.mxu0
  %v1726 = vadd.f32 %v1706, %v1725
  %1727 = vdwg.mxu0
  %1728 = vmatpush.msra.mxu0 %v491
  %1729 = vmatpush.msra.mxu0 %v490
  %1730 = vmatpush.msra.mxu0 %v489
  %1731 = vmatpush.msra.mxu0 %v488
  %1732 = vmatpush.msra.mxu0 %v487
  %1733 = vmatpush.msra.mxu0 %v486
  %1734 = vmatpush.msra.mxu0 %v485
  %1735 = vmatpush.msra.mxu0 %v484
  %1736 = vmatpush.msra.mxu0 %v483
  %1737 = vmatpush.msra.mxu0 %v482
  %1738 = vmatpush.msra.mxu0 %v481
  %1739 = vmatpush.msra.mxu0 %v480
  %1740 = vmatpush.msra.mxu0 %v479
  %1741 = vmatpush.msra.mxu0 %v478
  %1742 = vmatpush.msra.mxu0 %v477
  %1743 = vmatpush.msra.mxu0 %v476
  %1744 = vmatmul.f32.gmra.mxu0 %v44
  %v1745 = vpop.f32.mrf.mxu0
  %v1746 = vadd.f32 %v1726, %v1745
  %1747 = vdwg.mxu0
  %1748 = vmatpush.msra.mxu0 %v507
  %1749 = vmatpush.msra.mxu0 %v506
  %1750 = vmatpush.msra.mxu0 %v505
  %1751 = vmatpush.msra.mxu0 %v504
  %1752 = vmatpush.msra.mxu0 %v503
  %1753 = vmatpush.msra.mxu0 %v502
  %1754 = vmatpush.msra.mxu0 %v501
  %1755 = vmatpush.msra.mxu0 %v500
  %1756 = vmatpush.msra.mxu0 %v499
  %1757 = vmatpush.msra.mxu0 %v498
  %1758 = vmatpush.msra.mxu0 %v497
  %1759 = vmatpush.msra.mxu0 %v496
  %1760 = vmatpush.msra.mxu0 %v495
  %1761 = vmatpush.msra.mxu0 %v494
  %1762 = vmatpush.msra.mxu0 %v493
  %1763 = vmatpush.msra.mxu0 %v492
  %1764 = vmatmul.f32.gmra.mxu0 %v45
  %v1765 = vpop.f32.mrf.mxu0
  %v1766 = vadd.f32 %v1746, %v1765
  %1767 = vdwg.mxu0
  %1768 = vmatpush.msra.mxu0 %v523
  %1769 = vmatpush.msra.mxu0 %v522
  %1770 = vmatpush.msra.mxu0 %v521
  %1771 = vmatpush.msra.mxu0 %v520
  %1772 = vmatpush.msra.mxu0 %v519
  %1773 = vmatpush.msra.mxu0 %v518
  %1774 = vmatpush.msra.mxu0 %v517
  %1775 = vmatpush.msra.mxu0 %v516
  %1776 = vmatpush.msra.mxu0 %v515
  %1777 = vmatpush.msra.mxu0 %v514
  %1778 = vmatpush.msra.mxu0 %v513
  %1779 = vmatpush.msra.mxu0 %v512
  %1780 = vmatpush.msra.mxu0 %v511
  %1781 = vmatpush.msra.mxu0 %v510
  %1782 = vmatpush.msra.mxu0 %v509
  %1783 = vmatpush.msra.mxu0 %v508
  %1784 = vmatmul.f32.gmra.mxu0 %v46
  %v1785 = vpop.f32.mrf.mxu0
  %v1786 = vadd.f32 %v1766, %v1785
  %1787 = vdwg.mxu0
  %1788 = vmatpush.msra.mxu0 %v539
  %1789 = vmatpush.msra.mxu0 %v538
  %1790 = vmatpush.msra.mxu0 %v537
  %1791 = vmatpush.msra.mxu0 %v536
  %1792 = vmatpush.msra.mxu0 %v535
  %1793 = vmatpush.msra.mxu0 %v534
  %1794 = vmatpush.msra.mxu0 %v533
  %1795 = vmatpush.msra.mxu0 %v532
  %1796 = vmatpush.msra.mxu0 %v531
  %1797 = vmatpush.msra.mxu0 %v530
  %1798 = vmatpush.msra.mxu0 %v529
  %1799 = vmatpush.msra.mxu0 %v528
  %1800 = vmatpush.msra.mxu0 %v527
  %1801 = vmatpush.msra.mxu0 %v526
  %1802 = vmatpush.msra.mxu0 %v525
  %1803 = vmatpush.msra.mxu0 %v524
  %1804 = vmatmul.f32.gmra.mxu0 %v47
  %v1805 = vpop.f32.mrf.mxu0
  %v1806 = vadd.f32 %v1786, %v1805
  %1807 = vdwg.mxu0
  %1808 = vmatpush.msra.mxu0 %v555
  %1809 = vmatpush.msra.mxu0 %v554
  %1810 = vmatpush.msra.mxu0 %v553
  %1811 = vmatpush.msra.mxu0 %v552
  %1812 = vmatpush.msra.mxu0 %v551
  %1813 = vmatpush.msra.mxu0 %v550
  %1814 = vmatpush.msra.mxu0 %v549
  %1815 = vmatpush.msra.mxu0 %v548
  %1816 = vmatpush.msra.mxu0 %v547
  %1817 = vmatpush.msra.mxu0 %v546
  %1818 = vmatpush.msra.mxu0 %v545
  %1819 = vmatpush.msra.mxu0 %v544
  %1820 = vmatpush.msra.mxu0 %v543
  %1821 = vmatpush.msra.mxu0 %v542
  %1822 = vmatpush.msra.mxu0 %v541
  %1823 = vmatpush.msra.mxu0 %v540
  %1824 = vmatmul.f32.gmra.mxu0 %v48
  %v1825 = vpop.f32.mrf.mxu0
  %v1826 = vadd.f32 %v1806, %v1825
  %1827 = vdwg.mxu0
  %1828 = vmatpush.msra.mxu0 %v571
  %1829 = vmatpush.msra.mxu0 %v570
  %1830 = vmatpush.msra.mxu0 %v569
  %1831 = vmatpush.msra.mxu0 %v568
  %1832 = vmatpush.msra.mxu0 %v567
  %1833 = vmatpush.msra.mxu0 %v566
  %1834 = vmatpush.msra.mxu0 %v565
  %1835 = vmatpush.msra.mxu0 %v564
  %1836 = vmatpush.msra.mxu0 %v563
  %1837 = vmatpush.msra.mxu0 %v562
  %1838 = vmatpush.msra.mxu0 %v561
  %1839 = vmatpush.msra.mxu0 %v560
  %1840 = vmatpush.msra.mxu0 %v559
  %1841 = vmatpush.msra.mxu0 %v558
  %1842 = vmatpush.msra.mxu0 %v557
  %1843 = vmatpush.msra.mxu0 %v556
  %1844 = vmatmul.f32.gmra.mxu0 %v49
  %v1845 = vpop.f32.mrf.mxu0
  %v1846 = vadd.f32 %v1826, %v1845
  %1847 = vdwg.mxu0
  %1848 = vmatpush.msra.mxu0 %v587
  %1849 = vmatpush.msra.mxu0 %v586
  %1850 = vmatpush.msra.mxu0 %v585
  %1851 = vmatpush.msra.mxu0 %v584
  %1852 = vmatpush.msra.mxu0 %v583
  %1853 = vmatpush.msra.mxu0 %v582
  %1854 = vmatpush.msra.mxu0 %v581
  %1855 = vmatpush.msra.mxu0 %v580
  %1856 = vmatpush.msra.mxu0 %v579
  %1857 = vmatpush.msra.mxu0 %v578
  %1858 = vmatpush.msra.mxu0 %v577
  %1859 = vmatpush.msra.mxu0 %v576
  %1860 = vmatpush.msra.mxu0 %v575
  %1861 = vmatpush.msra.mxu0 %v574
  %1862 = vmatpush.msra.mxu0 %v573
  %1863 = vmatpush.msra.mxu0 %v572
  %1864 = vmatmul.f32.gmra.mxu0 %v50
  %v1865 = vpop.f32.mrf.mxu0
  %v1866 = vadd.f32 %v1846, %v1865
  %1867 = vdwg.mxu0
  %1868 = vmatpush.msra.mxu0 %v603
  %1869 = vmatpush.msra.mxu0 %v602
  %1870 = vmatpush.msra.mxu0 %v601
  %1871 = vmatpush.msra.mxu0 %v600
  %1872 = vmatpush.msra.mxu0 %v599
  %1873 = vmatpush.msra.mxu0 %v598
  %1874 = vmatpush.msra.mxu0 %v597
  %1875 = vmatpush.msra.mxu0 %v596
  %1876 = vmatpush.msra.mxu0 %v595
  %1877 = vmatpush.msra.mxu0 %v594
  %1878 = vmatpush.msra.mxu0 %v593
  %1879 = vmatpush.msra.mxu0 %v592
  %1880 = vmatpush.msra.mxu0 %v591
  %1881 = vmatpush.msra.mxu0 %v590
  %1882 = vmatpush.msra.mxu0 %v589
  %1883 = vmatpush.msra.mxu0 %v588
  %1884 = vmatmul.f32.gmra.mxu0 %v51
  %v1885 = vpop.f32.mrf.mxu0
  %v1886 = vadd.f32 %v1866, %v1885
  %1887 = vdwg.mxu0
  %1888 = vmatpush.msra.mxu0 %v619
  %1889 = vmatpush.msra.mxu0 %v618
  %1890 = vmatpush.msra.mxu0 %v617
  %1891 = vmatpush.msra.mxu0 %v616
  %1892 = vmatpush.msra.mxu0 %v615
  %1893 = vmatpush.msra.mxu0 %v614
  %1894 = vmatpush.msra.mxu0 %v613
  %1895 = vmatpush.msra.mxu0 %v612
  %1896 = vmatpush.msra.mxu0 %v611
  %1897 = vmatpush.msra.mxu0 %v610
  %1898 = vmatpush.msra.mxu0 %v609
  %1899 = vmatpush.msra.mxu0 %v608
  %1900 = vmatpush.msra.mxu0 %v607
  %1901 = vmatpush.msra.mxu0 %v606
  %1902 = vmatpush.msra.mxu0 %v605
  %1903 = vmatpush.msra.mxu0 %v604
  %1904 = vmatmul.f32.gmra.mxu0 %v52
  %v1905 = vpop.f32.mrf.mxu0
  %v1906 = vadd.f32 %v1886, %v1905
  %1907 = vdwg.mxu0
  %1908 = vmatpush.msra.mxu0 %v635
  %1909 = vmatpush.msra.mxu0 %v634
  %1910 = vmatpush.msra.mxu0 %v633
  %1911 = vmatpush.msra.mxu0 %v632
  %1912 = vmatpush.msra.mxu0 %v631
  %1913 = vmatpush.msra.mxu0 %v630
  %1914 = vmatpush.msra.mxu0 %v629
  %1915 = vmatpush.msra.mxu0 %v628
  %1916 = vmatpush.msra.mxu0 %v627
  %1917 = vmatpush.msra.mxu0 %v626
  %1918 = vmatpush.msra.mxu0 %v625
  %1919 = vmatpush.msra.mxu0 %v624
  %1920 = vmatpush.msra.mxu0 %v623
  %1921 = vmatpush.msra.mxu0 %v622
  %1922 = vmatpush.msra.mxu0 %v621
  %1923 = vmatpush.msra.mxu0 %v620
  %1924 = vmatmul.f32.gmra.mxu0 %v53
  %v1925 = vpop.f32.mrf.mxu0
  %v1926 = vadd.f32 %v1906, %v1925
  %1927 = vdwg.mxu0
  %1928 = vmatpush.msra.mxu0 %v651
  %1929 = vmatpush.msra.mxu0 %v650
  %1930 = vmatpush.msra.mxu0 %v649
  %1931 = vmatpush.msra.mxu0 %v648
  %1932 = vmatpush.msra.mxu0 %v647
  %1933 = vmatpush.msra.mxu0 %v646
  %1934 = vmatpush.msra.mxu0 %v645
  %1935 = vmatpush.msra.mxu0 %v644
  %1936 = vmatpush.msra.mxu0 %v643
  %1937 = vmatpush.msra.mxu0 %v642
  %1938 = vmatpush.msra.mxu0 %v641
  %1939 = vmatpush.msra.mxu0 %v640
  %1940 = vmatpush.msra.mxu0 %v639
  %1941 = vmatpush.msra.mxu0 %v638
  %1942 = vmatpush.msra.mxu0 %v637
  %1943 = vmatpush.msra.mxu0 %v636
  %1944 = vmatmul.f32.gmra.mxu0 %v54
  %v1945 = vpop.f32.mrf.mxu0
  %v1946 = vadd.f32 %v1926, %v1945
  %1947 = vdwg.mxu0
  %1948 = vmatpush.msra.mxu0 %v667
  %1949 = vmatpush.msra.mxu0 %v666
  %1950 = vmatpush.msra.mxu0 %v665
  %1951 = vmatpush.msra.mxu0 %v664
  %1952 = vmatpush.msra.mxu0 %v663
  %1953 = vmatpush.msra.mxu0 %v662
  %1954 = vmatpush.msra.mxu0 %v661
  %1955 = vmatpush.msra.mxu0 %v660
  %1956 = vmatpush.msra.mxu0 %v659
  %1957 = vmatpush.msra.mxu0 %v658
  %1958 = vmatpush.msra.mxu0 %v657
  %1959 = vmatpush.msra.mxu0 %v656
  %1960 = vmatpush.msra.mxu0 %v655
  %1961 = vmatpush.msra.mxu0 %v654
  %1962 = vmatpush.msra.mxu0 %v653
  %1963 = vmatpush.msra.mxu0 %v652
  %1964 = vmatmul.f32.gmra.mxu0 %v55
  %v1965 = vpop.f32.mrf.mxu0
  %v1966 = vadd.f32 %v1946, %v1965
  %1967 = vdwg.mxu0
  %1968 = vmatpush.msra.mxu0 %v683
  %1969 = vmatpush.msra.mxu0 %v682
  %1970 = vmatpush.msra.mxu0 %v681
  %1971 = vmatpush.msra.mxu0 %v680
  %1972 = vmatpush.msra.mxu0 %v679
  %1973 = vmatpush.msra.mxu0 %v678
  %1974 = vmatpush.msra.mxu0 %v677
  %1975 = vmatpush.msra.mxu0 %v676
  %1976 = vmatpush.msra.mxu0 %v675
  %1977 = vmatpush.msra.mxu0 %v674
  %1978 = vmatpush.msra.mxu0 %v673
  %1979 = vmatpush.msra.mxu0 %v672
  %1980 = vmatpush.msra.mxu0 %v671
  %1981 = vmatpush.msra.mxu0 %v670
  %1982 = vmatpush.msra.mxu0 %v669
  %1983 = vmatpush.msra.mxu0 %v668
  %1984 = vmatmul.f32.gmra.mxu0 %v56
  %v1985 = vpop.f32.mrf.mxu0
  %v1986 = vadd.f32 %v1966, %v1985
  %1987 = vdwg.mxu0
  %1988 = vmatpush.msra.mxu0 %v699
  %1989 = vmatpush.msra.mxu0 %v698
  %1990 = vmatpush.msra.mxu0 %v697
  %1991 = vmatpush.msra.mxu0 %v696
  %1992 = vmatpush.msra.mxu0 %v695
  %1993 = vmatpush.msra.mxu0 %v694
  %1994 = vmatpush.msra.mxu0 %v693
  %1995 = vmatpush.msra.mxu0 %v692
  %1996 = vmatpush.msra.mxu0 %v691
  %1997 = vmatpush.msra.mxu0 %v690
  %1998 = vmatpush.msra.mxu0 %v689
  %1999 = vmatpush.msra.mxu0 %v688
  %2000 = vmatpush.msra.mxu0 %v687
  %2001 = vmatpush.msra.mxu0 %v686
  %2002 = vmatpush.msra.mxu0 %v685
  %2003 = vmatpush.msra.mxu0 %v684
  %2004 = vmatmul.f32.gmra.mxu0 %v57
  %v2005 = vpop.f32.mrf.mxu0
  %v2006 = vadd.f32 %v1986, %v2005
  %2007 = vdwg.mxu0
  %2008 = vmatpush.msra.mxu0 %v715
  %2009 = vmatpush.msra.mxu0 %v714
  %2010 = vmatpush.msra.mxu0 %v713
  %2011 = vmatpush.msra.mxu0 %v712
  %2012 = vmatpush.msra.mxu0 %v711
  %2013 = vmatpush.msra.mxu0 %v710
  %2014 = vmatpush.msra.mxu0 %v709
  %2015 = vmatpush.msra.mxu0 %v708
  %2016 = vmatpush.msra.mxu0 %v707
  %2017 = vmatpush.msra.mxu0 %v706
  %2018 = vmatpush.msra.mxu0 %v705
  %2019 = vmatpush.msra.mxu0 %v704
  %2020 = vmatpush.msra.mxu0 %v703
  %2021 = vmatpush.msra.mxu0 %v702
  %2022 = vmatpush.msra.mxu0 %v701
  %2023 = vmatpush.msra.mxu0 %v700
  %2024 = vmatmul.f32.gmra.mxu0 %v58
  %v2025 = vpop.f32.mrf.mxu0
  %v2026 = vadd.f32 %v2006, %v2025
  %2027 = vdwg.mxu0
  %2028 = vmatpush.msra.mxu0 %v731
  %2029 = vmatpush.msra.mxu0 %v730
  %2030 = vmatpush.msra.mxu0 %v729
  %2031 = vmatpush.msra.mxu0 %v728
  %2032 = vmatpush.msra.mxu0 %v727
  %2033 = vmatpush.msra.mxu0 %v726
  %2034 = vmatpush.msra.mxu0 %v725
  %2035 = vmatpush.msra.mxu0 %v724
  %2036 = vmatpush.msra.mxu0 %v723
  %2037 = vmatpush.msra.mxu0 %v722
  %2038 = vmatpush.msra.mxu0 %v721
  %2039 = vmatpush.msra.mxu0 %v720
  %2040 = vmatpush.msra.mxu0 %v719
  %2041 = vmatpush.msra.mxu0 %v718
  %2042 = vmatpush.msra.mxu0 %v717
  %2043 = vmatpush.msra.mxu0 %v716
  %2044 = vmatmul.f32.gmra.mxu0 %v59
  %v2045 = vpop.f32.mrf.mxu0
  %v2046 = vadd.f32 %v2026, %v2045
  %2047 = vdwg.mxu0
  %2048 = vmatpush.msra.mxu0 %v747
  %2049 = vmatpush.msra.mxu0 %v746
  %2050 = vmatpush.msra.mxu0 %v745
  %2051 = vmatpush.msra.mxu0 %v744
  %2052 = vmatpush.msra.mxu0 %v743
  %2053 = vmatpush.msra.mxu0 %v742
  %2054 = vmatpush.msra.mxu0 %v741
  %2055 = vmatpush.msra.mxu0 %v740
  %2056 = vmatpush.msra.mxu0 %v739
  %2057 = vmatpush.msra.mxu0 %v738
  %2058 = vmatpush.msra.mxu0 %v737
  %2059 = vmatpush.msra.mxu0 %v736
  %2060 = vmatpush.msra.mxu0 %v735
  %2061 = vmatpush.msra.mxu0 %v734
  %2062 = vmatpush.msra.mxu0 %v733
  %2063 = vmatpush.msra.mxu0 %v732
  %2064 = vmatmul.f32.gmra.mxu0 %v60
  %v2065 = vpop.f32.mrf.mxu0
  %v2066 = vadd.f32 %v2046, %v2065
  %2067 = vdwg.mxu0
  %2068 = vmatpush.msra.mxu0 %v763
  %2069 = vmatpush.msra.mxu0 %v762
  %2070 = vmatpush.msra.mxu0 %v761
  %2071 = vmatpush.msra.mxu0 %v760
  %2072 = vmatpush.msra.mxu0 %v759
  %2073 = vmatpush.msra.mxu0 %v758
  %2074 = vmatpush.msra.mxu0 %v757
  %2075 = vmatpush.msra.mxu0 %v756
  %2076 = vmatpush.msra.mxu0 %v755
  %2077 = vmatpush.msra.mxu0 %v754
  %2078 = vmatpush.msra.mxu0 %v753
  %2079 = vmatpush.msra.mxu0 %v752
  %2080 = vmatpush.msra.mxu0 %v751
  %2081 = vmatpush.msra.mxu0 %v750
  %2082 = vmatpush.msra.mxu0 %v749
  %2083 = vmatpush.msra.mxu0 %v748
  %2084 = vmatmul.f32.gmra.mxu0 %v61
  %v2085 = vpop.f32.mrf.mxu0
  %v2086 = vadd.f32 %v2066, %v2085
  %2087 = vdwg.mxu0
  %2088 = vmatpush.msra.mxu0 %v779
  %2089 = vmatpush.msra.mxu0 %v778
  %2090 = vmatpush.msra.mxu0 %v777
  %2091 = vmatpush.msra.mxu0 %v776
  %2092 = vmatpush.msra.mxu0 %v775
  %2093 = vmatpush.msra.mxu0 %v774
  %2094 = vmatpush.msra.mxu0 %v773
  %2095 = vmatpush.msra.mxu0 %v772
  %2096 = vmatpush.msra.mxu0 %v771
  %2097 = vmatpush.msra.mxu0 %v770
  %2098 = vmatpush.msra.mxu0 %v769
  %2099 = vmatpush.msra.mxu0 %v768
  %2100 = vmatpush.msra.mxu0 %v767
  %2101 = vmatpush.msra.mxu0 %v766
  %2102 = vmatpush.msra.mxu0 %v765
  %2103 = vmatpush.msra.mxu0 %v764
  %2104 = vmatmul.f32.gmra.mxu0 %v62
  %v2105 = vpop.f32.mrf.mxu0
  %v2106 = vadd.f32 %v2086, %v2105
  %2107 = vdwg.mxu0
  %2108 = vmatpush.msra.mxu0 %v795
  %2109 = vmatpush.msra.mxu0 %v794
  %2110 = vmatpush.msra.mxu0 %v793
  %2111 = vmatpush.msra.mxu0 %v792
  %2112 = vmatpush.msra.mxu0 %v791
  %2113 = vmatpush.msra.mxu0 %v790
  %2114 = vmatpush.msra.mxu0 %v789
  %2115 = vmatpush.msra.mxu0 %v788
  %2116 = vmatpush.msra.mxu0 %v787
  %2117 = vmatpush.msra.mxu0 %v786
  %2118 = vmatpush.msra.mxu0 %v785
  %2119 = vmatpush.msra.mxu0 %v784
  %2120 = vmatpush.msra.mxu0 %v783
  %2121 = vmatpush.msra.mxu0 %v782
  %2122 = vmatpush.msra.mxu0 %v781
  %2123 = vmatpush.msra.mxu0 %v780
  %2124 = vmatmul.f32.gmra.mxu0 %v63
  %v2125 = vpop.f32.mrf.mxu0
  %v2126 = vadd.f32 %v2106, %v2125
  %2127 = vdwg.mxu0
  %2128 = vmatpush.msra.mxu0 %v811
  %2129 = vmatpush.msra.mxu0 %v810
  %2130 = vmatpush.msra.mxu0 %v809
  %2131 = vmatpush.msra.mxu0 %v808
  %2132 = vmatpush.msra.mxu0 %v807
  %2133 = vmatpush.msra.mxu0 %v806
  %2134 = vmatpush.msra.mxu0 %v805
  %2135 = vmatpush.msra.mxu0 %v804
  %2136 = vmatpush.msra.mxu0 %v803
  %2137 = vmatpush.msra.mxu0 %v802
  %2138 = vmatpush.msra.mxu0 %v801
  %2139 = vmatpush.msra.mxu0 %v800
  %2140 = vmatpush.msra.mxu0 %v799
  %2141 = vmatpush.msra.mxu0 %v798
  %2142 = vmatpush.msra.mxu0 %v797
  %2143 = vmatpush.msra.mxu0 %v796
  %2144 = vmatmul.f32.gmra.mxu0 %v64
  %v2145 = vpop.f32.mrf.mxu0
  %v2146 = vadd.f32 %v2126, %v2145
  %2147 = vdwg.mxu0
  %2148 = vmatpush.msra.mxu0 %v827
  %2149 = vmatpush.msra.mxu0 %v826
  %2150 = vmatpush.msra.mxu0 %v825
  %2151 = vmatpush.msra.mxu0 %v824
  %2152 = vmatpush.msra.mxu0 %v823
  %2153 = vmatpush.msra.mxu0 %v822
  %2154 = vmatpush.msra.mxu0 %v821
  %2155 = vmatpush.msra.mxu0 %v820
  %2156 = vmatpush.msra.mxu0 %v819
  %2157 = vmatpush.msra.mxu0 %v818
  %2158 = vmatpush.msra.mxu0 %v817
  %2159 = vmatpush.msra.mxu0 %v816
  %2160 = vmatpush.msra.mxu0 %v815
  %2161 = vmatpush.msra.mxu0 %v814
  %2162 = vmatpush.msra.mxu0 %v813
  %2163 = vmatpush.msra.mxu0 %v812
  %2164 = vmatmul.f32.gmra.mxu0 %v65
  %v2165 = vpop.f32.mrf.mxu0
  %v2166 = vadd.f32 %v2146, %v2165
  %2167 = vdwg.mxu0
  %2168 = vmatpush.msra.mxu0 %v843
  %2169 = vmatpush.msra.mxu0 %v842
  %2170 = vmatpush.msra.mxu0 %v841
  %2171 = vmatpush.msra.mxu0 %v840
  %2172 = vmatpush.msra.mxu0 %v839
  %2173 = vmatpush.msra.mxu0 %v838
  %2174 = vmatpush.msra.mxu0 %v837
  %2175 = vmatpush.msra.mxu0 %v836
  %2176 = vmatpush.msra.mxu0 %v835
  %2177 = vmatpush.msra.mxu0 %v834
  %2178 = vmatpush.msra.mxu0 %v833
  %2179 = vmatpush.msra.mxu0 %v832
  %2180 = vmatpush.msra.mxu0 %v831
  %2181 = vmatpush.msra.mxu0 %v830
  %2182 = vmatpush.msra.mxu0 %v829
  %2183 = vmatpush.msra.mxu0 %v828
  %2184 = vmatmul.f32.gmra.mxu0 %v66
  %v2185 = vpop.f32.mrf.mxu0
  %v2186 = vadd.f32 %v2166, %v2185
  %2187 = vdwg.mxu0
  %2188 = vmatpush.msra.mxu0 %v859
  %2189 = vmatpush.msra.mxu0 %v858
  %2190 = vmatpush.msra.mxu0 %v857
  %2191 = vmatpush.msra.mxu0 %v856
  %2192 = vmatpush.msra.mxu0 %v855
  %2193 = vmatpush.msra.mxu0 %v854
  %2194 = vmatpush.msra.mxu0 %v853
  %2195 = vmatpush.msra.mxu0 %v852
  %2196 = vmatpush.msra.mxu0 %v851
  %2197 = vmatpush.msra.mxu0 %v850
  %2198 = vmatpush.msra.mxu0 %v849
  %2199 = vmatpush.msra.mxu0 %v848
  %2200 = vmatpush.msra.mxu0 %v847
  %2201 = vmatpush.msra.mxu0 %v846
  %2202 = vmatpush.msra.mxu0 %v845
  %2203 = vmatpush.msra.mxu0 %v844
  %2204 = vmatmul.f32.gmra.mxu0 %v67
  %v2205 = vpop.f32.mrf.mxu0
  %v2206 = vadd.f32 %v2186, %v2205
  %2207 = vdwg.mxu0
  %2208 = vmatpush.msra.mxu0 %v875
  %2209 = vmatpush.msra.mxu0 %v874
  %2210 = vmatpush.msra.mxu0 %v873
  %2211 = vmatpush.msra.mxu0 %v872
  %2212 = vmatpush.msra.mxu0 %v871
  %2213 = vmatpush.msra.mxu0 %v870
  %2214 = vmatpush.msra.mxu0 %v869
  %2215 = vmatpush.msra.mxu0 %v868
  %2216 = vmatpush.msra.mxu0 %v867
  %2217 = vmatpush.msra.mxu0 %v866
  %2218 = vmatpush.msra.mxu0 %v865
  %2219 = vmatpush.msra.mxu0 %v864
  %2220 = vmatpush.msra.mxu0 %v863
  %2221 = vmatpush.msra.mxu0 %v862
  %2222 = vmatpush.msra.mxu0 %v861
  %2223 = vmatpush.msra.mxu0 %v860
  %2224 = vmatmul.f32.gmra.mxu0 %v68
  %v2225 = vpop.f32.mrf.mxu0
  %v2226 = vadd.f32 %v2206, %v2225
  %2227 = vdwg.mxu0
  %2228 = vmatpush.msra.mxu0 %v891
  %2229 = vmatpush.msra.mxu0 %v890
  %2230 = vmatpush.msra.mxu0 %v889
  %2231 = vmatpush.msra.mxu0 %v888
  %2232 = vmatpush.msra.mxu0 %v887
  %2233 = vmatpush.msra.mxu0 %v886
  %2234 = vmatpush.msra.mxu0 %v885
  %2235 = vmatpush.msra.mxu0 %v884
  %2236 = vmatpush.msra.mxu0 %v883
  %2237 = vmatpush.msra.mxu0 %v882
  %2238 = vmatpush.msra.mxu0 %v881
  %2239 = vmatpush.msra.mxu0 %v880
  %2240 = vmatpush.msra.mxu0 %v879
  %2241 = vmatpush.msra.mxu0 %v878
  %2242 = vmatpush.msra.mxu0 %v877
  %2243 = vmatpush.msra.mxu0 %v876
  %2244 = vmatmul.f32.gmra.mxu0 %v69
  %v2245 = vpop.f32.mrf.mxu0
  %v2246 = vadd.f32 %v2226, %v2245
  %2247 = vdwg.mxu0
  %2248 = vmatpush.msra.mxu0 %v907
  %2249 = vmatpush.msra.mxu0 %v906
  %2250 = vmatpush.msra.mxu0 %v905
  %2251 = vmatpush.msra.mxu0 %v904
  %2252 = vmatpush.msra.mxu0 %v903
  %2253 = vmatpush.msra.mxu0 %v902
  %2254 = vmatpush.msra.mxu0 %v901
  %2255 = vmatpush.msra.mxu0 %v900
  %2256 = vmatpush.msra.mxu0 %v899
  %2257 = vmatpush.msra.mxu0 %v898
  %2258 = vmatpush.msra.mxu0 %v897
  %2259 = vmatpush.msra.mxu0 %v896
  %2260 = vmatpush.msra.mxu0 %v895
  %2261 = vmatpush.msra.mxu0 %v894
  %2262 = vmatpush.msra.mxu0 %v893
  %2263 = vmatpush.msra.mxu0 %v892
  %2264 = vmatmul.f32.gmra.mxu0 %v70
  %v2265 = vpop.f32.mrf.mxu0
  %v2266 = vadd.f32 %v2246, %v2265
  %2267 = vdwg.mxu0
  %2268 = vmatpush.msra.mxu0 %v923
  %2269 = vmatpush.msra.mxu0 %v922
  %2270 = vmatpush.msra.mxu0 %v921
  %2271 = vmatpush.msra.mxu0 %v920
  %2272 = vmatpush.msra.mxu0 %v919
  %2273 = vmatpush.msra.mxu0 %v918
  %2274 = vmatpush.msra.mxu0 %v917
  %2275 = vmatpush.msra.mxu0 %v916
  %2276 = vmatpush.msra.mxu0 %v915
  %2277 = vmatpush.msra.mxu0 %v914
  %2278 = vmatpush.msra.mxu0 %v913
  %2279 = vmatpush.msra.mxu0 %v912
  %2280 = vmatpush.msra.mxu0 %v911
  %2281 = vmatpush.msra.mxu0 %v910
  %2282 = vmatpush.msra.mxu0 %v909
  %2283 = vmatpush.msra.mxu0 %v908
  %2284 = vmatmul.f32.gmra.mxu0 %v71
  %v2285 = vpop.f32.mrf.mxu0
  %v2286 = vadd.f32 %v2266, %v2285
  %2287 = vdwg.mxu0
  %2288 = vmatpush.msra.mxu0 %v939
  %2289 = vmatpush.msra.mxu0 %v938
  %2290 = vmatpush.msra.mxu0 %v937
  %2291 = vmatpush.msra.mxu0 %v936
  %2292 = vmatpush.msra.mxu0 %v935
  %2293 = vmatpush.msra.mxu0 %v934
  %2294 = vmatpush.msra.mxu0 %v933
  %2295 = vmatpush.msra.mxu0 %v932
  %2296 = vmatpush.msra.mxu0 %v931
  %2297 = vmatpush.msra.mxu0 %v930
  %2298 = vmatpush.msra.mxu0 %v929
  %2299 = vmatpush.msra.mxu0 %v928
  %2300 = vmatpush.msra.mxu0 %v927
  %2301 = vmatpush.msra.mxu0 %v926
  %2302 = vmatpush.msra.mxu0 %v925
  %2303 = vmatpush.msra.mxu0 %v924
  %2304 = vmatmul.f32.gmra.mxu0 %v72
  %v2305 = vpop.f32.mrf.mxu0
  %v2306 = vadd.f32 %v2286, %v2305
  %2307 = vdwg.mxu0
  %2308 = vmatpush.msra.mxu0 %v955
  %2309 = vmatpush.msra.mxu0 %v954
  %2310 = vmatpush.msra.mxu0 %v953
  %2311 = vmatpush.msra.mxu0 %v952
  %2312 = vmatpush.msra.mxu0 %v951
  %2313 = vmatpush.msra.mxu0 %v950
  %2314 = vmatpush.msra.mxu0 %v949
  %2315 = vmatpush.msra.mxu0 %v948
  %2316 = vmatpush.msra.mxu0 %v947
  %2317 = vmatpush.msra.mxu0 %v946
  %2318 = vmatpush.msra.mxu0 %v945
  %2319 = vmatpush.msra.mxu0 %v944
  %2320 = vmatpush.msra.mxu0 %v943
  %2321 = vmatpush.msra.mxu0 %v942
  %2322 = vmatpush.msra.mxu0 %v941
  %2323 = vmatpush.msra.mxu0 %v940
  %2324 = vmatmul.f32.gmra.mxu0 %v73
  %v2325 = vpop.f32.mrf.mxu0
  %v2326 = vadd.f32 %v2306, %v2325
  %2327 = vdwg.mxu0
  %2328 = vmatpush.msra.mxu0 %v971
  %2329 = vmatpush.msra.mxu0 %v970
  %2330 = vmatpush.msra.mxu0 %v969
  %2331 = vmatpush.msra.mxu0 %v968
  %2332 = vmatpush.msra.mxu0 %v967
  %2333 = vmatpush.msra.mxu0 %v966
  %2334 = vmatpush.msra.mxu0 %v965
  %2335 = vmatpush.msra.mxu0 %v964
  %2336 = vmatpush.msra.mxu0 %v963
  %2337 = vmatpush.msra.mxu0 %v962
  %2338 = vmatpush.msra.mxu0 %v961
  %2339 = vmatpush.msra.mxu0 %v960
  %2340 = vmatpush.msra.mxu0 %v959
  %2341 = vmatpush.msra.mxu0 %v958
  %2342 = vmatpush.msra.mxu0 %v957
  %2343 = vmatpush.msra.mxu0 %v956
  %2344 = vmatmul.f32.gmra.mxu0 %v74
  %v2345 = vpop.f32.mrf.mxu0
  %v2346 = vadd.f32 %v2326, %v2345
  %2347 = vdwg.mxu0
  %2348 = vmatpush.msra.mxu0 %v987
  %2349 = vmatpush.msra.mxu0 %v986
  %2350 = vmatpush.msra.mxu0 %v985
  %2351 = vmatpush.msra.mxu0 %v984
  %2352 = vmatpush.msra.mxu0 %v983
  %2353 = vmatpush.msra.mxu0 %v982
  %2354 = vmatpush.msra.mxu0 %v981
  %2355 = vmatpush.msra.mxu0 %v980
  %2356 = vmatpush.msra.mxu0 %v979
  %2357 = vmatpush.msra.mxu0 %v978
  %2358 = vmatpush.msra.mxu0 %v977
  %2359 = vmatpush.msra.mxu0 %v976
  %2360 = vmatpush.msra.mxu0 %v975
  %2361 = vmatpush.msra.mxu0 %v974
  %2362 = vmatpush.msra.mxu0 %v973
  %2363 = vmatpush.msra.mxu0 %v972
  %2364 = vmatmul.f32.gmra.mxu0 %v75
  %v2365 = vpop.f32.mrf.mxu0
  %v2366 = vadd.f32 %v2346, %v2365
  %2367 = vdwg.mxu0
  %2368 = vmatpush.msra.mxu0 %v1003
  %2369 = vmatpush.msra.mxu0 %v1002
  %2370 = vmatpush.msra.mxu0 %v1001
  %2371 = vmatpush.msra.mxu0 %v1000
  %2372 = vmatpush.msra.mxu0 %v999
  %2373 = vmatpush.msra.mxu0 %v998
  %2374 = vmatpush.msra.mxu0 %v997
  %2375 = vmatpush.msra.mxu0 %v996
  %2376 = vmatpush.msra.mxu0 %v995
  %2377 = vmatpush.msra.mxu0 %v994
  %2378 = vmatpush.msra.mxu0 %v993
  %2379 = vmatpush.msra.mxu0 %v992
  %2380 = vmatpush.msra.mxu0 %v991
  %2381 = vmatpush.msra.mxu0 %v990
  %2382 = vmatpush.msra.mxu0 %v989
  %2383 = vmatpush.msra.mxu0 %v988
  %2384 = vmatmul.f32.gmra.mxu0 %v76
  %v2385 = vpop.f32.mrf.mxu0
  %v2386 = vadd.f32 %v2366, %v2385
  %2387 = vdwg.mxu0
  %2388 = vmatpush.msra.mxu0 %v1019
  %2389 = vmatpush.msra.mxu0 %v1018
  %2390 = vmatpush.msra.mxu0 %v1017
  %2391 = vmatpush.msra.mxu0 %v1016
  %2392 = vmatpush.msra.mxu0 %v1015
  %2393 = vmatpush.msra.mxu0 %v1014
  %2394 = vmatpush.msra.mxu0 %v1013
  %2395 = vmatpush.msra.mxu0 %v1012
  %2396 = vmatpush.msra.mxu0 %v1011
  %2397 = vmatpush.msra.mxu0 %v1010
  %2398 = vmatpush.msra.mxu0 %v1009
  %2399 = vmatpush.msra.mxu0 %v1008
  %2400 = vmatpush.msra.mxu0 %v1007
  %2401 = vmatpush.msra.mxu0 %v1006
  %2402 = vmatpush.msra.mxu0 %v1005
  %2403 = vmatpush.msra.mxu0 %v1004
  %2404 = vmatmul.f32.gmra.mxu0 %v77
  %v2405 = vpop.f32.mrf.mxu0
  %v2406 = vadd.f32 %v2386, %v2405
  %2407 = vdwg.mxu0
  %2408 = vmatpush.msra.mxu0 %v1035
  %2409 = vmatpush.msra.mxu0 %v1034
  %2410 = vmatpush.msra.mxu0 %v1033
  %2411 = vmatpush.msra.mxu0 %v1032
  %2412 = vmatpush.msra.mxu0 %v1031
  %2413 = vmatpush.msra.mxu0 %v1030
  %2414 = vmatpush.msra.mxu0 %v1029
  %2415 = vmatpush.msra.mxu0 %v1028
  %2416 = vmatpush.msra.mxu0 %v1027
  %2417 = vmatpush.msra.mxu0 %v1026
  %2418 = vmatpush.msra.mxu0 %v1025
  %2419 = vmatpush.msra.mxu0 %v1024
  %2420 = vmatpush.msra.mxu0 %v1023
  %2421 = vmatpush.msra.mxu0 %v1022
  %2422 = vmatpush.msra.mxu0 %v1021
  %2423 = vmatpush.msra.mxu0 %v1020
  %2424 = vmatmul.f32.gmra.mxu0 %v78
  %v2425 = vpop.f32.mrf.mxu0
  %v2426 = vadd.f32 %v2406, %v2425
  %2427 = vdwg.mxu0
  %2428 = vmatpush.msra.mxu0 %v1051
  %2429 = vmatpush.msra.mxu0 %v1050
  %2430 = vmatpush.msra.mxu0 %v1049
  %2431 = vmatpush.msra.mxu0 %v1048
  %2432 = vmatpush.msra.mxu0 %v1047
  %2433 = vmatpush.msra.mxu0 %v1046
  %2434 = vmatpush.msra.mxu0 %v1045
  %2435 = vmatpush.msra.mxu0 %v1044
  %2436 = vmatpush.msra.mxu0 %v1043
  %2437 = vmatpush.msra.mxu0 %v1042
  %2438 = vmatpush.msra.mxu0 %v1041
  %2439 = vmatpush.msra.mxu0 %v1040
  %2440 = vmatpush.msra.mxu0 %v1039
  %2441 = vmatpush.msra.mxu0 %v1038
  %2442 = vmatpush.msra.mxu0 %v1037
  %2443 = vmatpush.msra.mxu0 %v1036
  %2444 = vmatmul.f32.gmra.mxu0 %v79
  %v2445 = vpop.f32.mrf.mxu0
  %v2446 = vadd.f32 %v2426, %v2445
  %2447 = vdwg.mxu0
  %2448 = vmatpush.msra.mxu0 %v1067
  %2449 = vmatpush.msra.mxu0 %v1066
  %2450 = vmatpush.msra.mxu0 %v1065
  %2451 = vmatpush.msra.mxu0 %v1064
  %2452 = vmatpush.msra.mxu0 %v1063
  %2453 = vmatpush.msra.mxu0 %v1062
  %2454 = vmatpush.msra.mxu0 %v1061
  %2455 = vmatpush.msra.mxu0 %v1060
  %2456 = vmatpush.msra.mxu0 %v1059
  %2457 = vmatpush.msra.mxu0 %v1058
  %2458 = vmatpush.msra.mxu0 %v1057
  %2459 = vmatpush.msra.mxu0 %v1056
  %2460 = vmatpush.msra.mxu0 %v1055
  %2461 = vmatpush.msra.mxu0 %v1054
  %2462 = vmatpush.msra.mxu0 %v1053
  %2463 = vmatpush.msra.mxu0 %v1052
  %2464 = vmatmul.f32.gmra.mxu0 %v80
  %v2465 = vpop.f32.mrf.mxu0
  %v2466 = vadd.f32 %v2446, %v2465
  %2467 = vdwg.mxu0
  %2468 = vmatpush.msra.mxu0 %v1083
  %2469 = vmatpush.msra.mxu0 %v1082
  %2470 = vmatpush.msra.mxu0 %v1081
  %2471 = vmatpush.msra.mxu0 %v1080
  %2472 = vmatpush.msra.mxu0 %v1079
  %2473 = vmatpush.msra.mxu0 %v1078
  %2474 = vmatpush.msra.mxu0 %v1077
  %2475 = vmatpush.msra.mxu0 %v1076
  %2476 = vmatpush.msra.mxu0 %v1075
  %2477 = vmatpush.msra.mxu0 %v1074
  %2478 = vmatpush.msra.mxu0 %v1073
  %2479 = vmatpush.msra.mxu0 %v1072
  %2480 = vmatpush.msra.mxu0 %v1071
  %2481 = vmatpush.msra.mxu0 %v1070
  %2482 = vmatpush.msra.mxu0 %v1069
  %2483 = vmatpush.msra.mxu0 %v1068
  %2484 = vmatmul.f32.gmra.mxu0 %v81
  %v2485 = vpop.f32.mrf.mxu0
  %v2486 = vadd.f32 %v2466, %v2485
  %2487 = vdwg.mxu0
  %2488 = vmatpush.msra.mxu0 %v1099
  %2489 = vmatpush.msra.mxu0 %v1098
  %2490 = vmatpush.msra.mxu0 %v1097
  %2491 = vmatpush.msra.mxu0 %v1096
  %2492 = vmatpush.msra.mxu0 %v1095
  %2493 = vmatpush.msra.mxu0 %v1094
  %2494 = vmatpush.msra.mxu0 %v1093
  %2495 = vmatpush.msra.mxu0 %v1092
  %2496 = vmatpush.msra.mxu0 %v1091
  %2497 = vmatpush.msra.mxu0 %v1090
  %2498 = vmatpush.msra.mxu0 %v1089
  %2499 = vmatpush.msra.mxu0 %v1088
  %2500 = vmatpush.msra.mxu0 %v1087
  %2501 = vmatpush.msra.mxu0 %v1086
  %2502 = vmatpush.msra.mxu0 %v1085
  %2503 = vmatpush.msra.mxu0 %v1084
  %2504 = vmatmul.f32.gmra.mxu0 %v82
  %v2505 = vpop.f32.mrf.mxu0
  %v2506 = vadd.f32 %v2486, %v2505
  %2507 = vdwg.mxu0
  %2508 = vmatpush.msra.mxu0 %v1115
  %2509 = vmatpush.msra.mxu0 %v1114
  %2510 = vmatpush.msra.mxu0 %v1113
  %2511 = vmatpush.msra.mxu0 %v1112
  %2512 = vmatpush.msra.mxu0 %v1111
  %2513 = vmatpush.msra.mxu0 %v1110
  %2514 = vmatpush.msra.mxu0 %v1109
  %2515 = vmatpush.msra.mxu0 %v1108
  %2516 = vmatpush.msra.mxu0 %v1107
  %2517 = vmatpush.msra.mxu0 %v1106
  %2518 = vmatpush.msra.mxu0 %v1105
  %2519 = vmatpush.msra.mxu0 %v1104
  %2520 = vmatpush.msra.mxu0 %v1103
  %2521 = vmatpush.msra.mxu0 %v1102
  %2522 = vmatpush.msra.mxu0 %v1101
  %2523 = vmatpush.msra.mxu0 %v1100
  %2524 = vmatmul.f32.gmra.mxu0 %v83
  %v2525 = vpop.f32.mrf.mxu0
  %v2526 = vadd.f32 %v2506, %v2525
  %2527 = vdwg.mxu0
  %2528 = vmatpush.msra.mxu0 %v1131
  %2529 = vmatpush.msra.mxu0 %v1130
  %2530 = vmatpush.msra.mxu0 %v1129
  %2531 = vmatpush.msra.mxu0 %v1128
  %2532 = vmatpush.msra.mxu0 %v1127
  %2533 = vmatpush.msra.mxu0 %v1126
  %2534 = vmatpush.msra.mxu0 %v1125
  %2535 = vmatpush.msra.mxu0 %v1124
  %2536 = vmatpush.msra.mxu0 %v1123
  %2537 = vmatpush.msra.mxu0 %v1122
  %2538 = vmatpush.msra.mxu0 %v1121
  %2539 = vmatpush.msra.mxu0 %v1120
  %2540 = vmatpush.msra.mxu0 %v1119
  %2541 = vmatpush.msra.mxu0 %v1118
  %2542 = vmatpush.msra.mxu0 %v1117
  %2543 = vmatpush.msra.mxu0 %v1116
  %2544 = vmatmul.f32.gmra.mxu0 %v84
  %v2545 = vpop.f32.mrf.mxu0
  %v2546 = vadd.f32 %v2526, %v2545
  %2547 = vdwg.mxu0
  %2548 = vmatpush.msra.mxu0 %v1147
  %2549 = vmatpush.msra.mxu0 %v1146
  %2550 = vmatpush.msra.mxu0 %v1145
  %2551 = vmatpush.msra.mxu0 %v1144
  %2552 = vmatpush.msra.mxu0 %v1143
  %2553 = vmatpush.msra.mxu0 %v1142
  %2554 = vmatpush.msra.mxu0 %v1141
  %2555 = vmatpush.msra.mxu0 %v1140
  %2556 = vmatpush.msra.mxu0 %v1139
  %2557 = vmatpush.msra.mxu0 %v1138
  %2558 = vmatpush.msra.mxu0 %v1137
  %2559 = vmatpush.msra.mxu0 %v1136
  %2560 = vmatpush.msra.mxu0 %v1135
  %2561 = vmatpush.msra.mxu0 %v1134
  %2562 = vmatpush.msra.mxu0 %v1133
  %2563 = vmatpush.msra.mxu0 %v1132
  %2564 = vmatmul.f32.gmra.mxu0 %v85
  %v2565 = vpop.f32.mrf.mxu0
  %v2566 = vadd.f32 %v2546, %v2565
  %2567 = vdwg.mxu0
  %2568 = vmatpush.msra.mxu0 %v1163
  %2569 = vmatpush.msra.mxu0 %v1162
  %2570 = vmatpush.msra.mxu0 %v1161
  %2571 = vmatpush.msra.mxu0 %v1160
  %2572 = vmatpush.msra.mxu0 %v1159
  %2573 = vmatpush.msra.mxu0 %v1158
  %2574 = vmatpush.msra.mxu0 %v1157
  %2575 = vmatpush.msra.mxu0 %v1156
  %2576 = vmatpush.msra.mxu0 %v1155
  %2577 = vmatpush.msra.mxu0 %v1154
  %2578 = vmatpush.msra.mxu0 %v1153
  %2579 = vmatpush.msra.mxu0 %v1152
  %2580 = vmatpush.msra.mxu0 %v1151
  %2581 = vmatpush.msra.mxu0 %v1150
  %2582 = vmatpush.msra.mxu0 %v1149
  %2583 = vmatpush.msra.mxu0 %v1148
  %2584 = vmatmul.f32.gmra.mxu0 %v86
  %v2585 = vpop.f32.mrf.mxu0
  %v2586 = vadd.f32 %v2566, %v2585
  %2587 = vdwg.mxu0
  %2588 = vmatpush.msra.mxu0 %v1179
  %2589 = vmatpush.msra.mxu0 %v1178
  %2590 = vmatpush.msra.mxu0 %v1177
  %2591 = vmatpush.msra.mxu0 %v1176
  %2592 = vmatpush.msra.mxu0 %v1175
  %2593 = vmatpush.msra.mxu0 %v1174
  %2594 = vmatpush.msra.mxu0 %v1173
  %2595 = vmatpush.msra.mxu0 %v1172
  %2596 = vmatpush.msra.mxu0 %v1171
  %2597 = vmatpush.msra.mxu0 %v1170
  %2598 = vmatpush.msra.mxu0 %v1169
  %2599 = vmatpush.msra.mxu0 %v1168
  %2600 = vmatpush.msra.mxu0 %v1167
  %2601 = vmatpush.msra.mxu0 %v1166
  %2602 = vmatpush.msra.mxu0 %v1165
  %2603 = vmatpush.msra.mxu0 %v1164
  %2604 = vmatmul.f32.gmra.mxu0 %v87
  %v2605 = vpop.f32.mrf.mxu0
  %v2606 = vadd.f32 %v2586, %v2605
  %2607 = vdwg.mxu0
  %2608 = vmatpush.msra.mxu0 %v1195
  %2609 = vmatpush.msra.mxu0 %v1194
  %2610 = vmatpush.msra.mxu0 %v1193
  %2611 = vmatpush.msra.mxu0 %v1192
  %2612 = vmatpush.msra.mxu0 %v1191
  %2613 = vmatpush.msra.mxu0 %v1190
  %2614 = vmatpush.msra.mxu0 %v1189
  %2615 = vmatpush.msra.mxu0 %v1188
  %2616 = vmatpush.msra.mxu0 %v1187
  %2617 = vmatpush.msra.mxu0 %v1186
  %2618 = vmatpush.msra.mxu0 %v1185
  %2619 = vmatpush.msra.mxu0 %v1184
  %2620 = vmatpush.msra.mxu0 %v1183
  %2621 = vmatpush.msra.mxu0 %v1182
  %2622 = vmatpush.msra.mxu0 %v1181
  %2623 = vmatpush.msra.mxu0 %v1180
  %2624 = vmatmul.f32.gmra.mxu0 %v88
  %v2625 = vpop.f32.mrf.mxu0
  %v2626 = vadd.f32 %v2606, %v2625
  %2627 = vdwg.mxu0
  %2628 = vmatpush.msra.mxu0 %v1211
  %2629 = vmatpush.msra.mxu0 %v1210
  %2630 = vmatpush.msra.mxu0 %v1209
  %2631 = vmatpush.msra.mxu0 %v1208
  %2632 = vmatpush.msra.mxu0 %v1207
  %2633 = vmatpush.msra.mxu0 %v1206
  %2634 = vmatpush.msra.mxu0 %v1205
  %2635 = vmatpush.msra.mxu0 %v1204
  %2636 = vmatpush.msra.mxu0 %v1203
  %2637 = vmatpush.msra.mxu0 %v1202
  %2638 = vmatpush.msra.mxu0 %v1201
  %2639 = vmatpush.msra.mxu0 %v1200
  %2640 = vmatpush.msra.mxu0 %v1199
  %2641 = vmatpush.msra.mxu0 %v1198
  %2642 = vmatpush.msra.mxu0 %v1197
  %2643 = vmatpush.msra.mxu0 %v1196
  %2644 = vmatmul.f32.gmra.mxu0 %v89
  %v2645 = vpop.f32.mrf.mxu0
  %v2646 = vadd.f32 %v2626, %v2645
  %2647 = vdwg.mxu0
  %2648 = vmatpush.msra.mxu0 %v1227
  %2649 = vmatpush.msra.mxu0 %v1226
  %2650 = vmatpush.msra.mxu0 %v1225
  %2651 = vmatpush.msra.mxu0 %v1224
  %2652 = vmatpush.msra.mxu0 %v1223
  %2653 = vmatpush.msra.mxu0 %v1222
  %2654 = vmatpush.msra.mxu0 %v1221
  %2655 = vmatpush.msra.mxu0 %v1220
  %2656 = vmatpush.msra.mxu0 %v1219
  %2657 = vmatpush.msra.mxu0 %v1218
  %2658 = vmatpush.msra.mxu0 %v1217
  %2659 = vmatpush.msra.mxu0 %v1216
  %2660 = vmatpush.msra.mxu0 %v1215
  %2661 = vmatpush.msra.mxu0 %v1214
  %2662 = vmatpush.msra.mxu0 %v1213
  %2663 = vmatpush.msra.mxu0 %v1212
  %2664 = vmatmul.f32.gmra.mxu0 %v90
  %v2665 = vpop.f32.mrf.mxu0
  %v2666 = vadd.f32 %v2646, %v2665
  %2667 = vdwg.mxu0
  %2668 = vmatpush.msra.mxu0 %v1243
  %2669 = vmatpush.msra.mxu0 %v1242
  %2670 = vmatpush.msra.mxu0 %v1241
  %2671 = vmatpush.msra.mxu0 %v1240
  %2672 = vmatpush.msra.mxu0 %v1239
  %2673 = vmatpush.msra.mxu0 %v1238
  %2674 = vmatpush.msra.mxu0 %v1237
  %2675 = vmatpush.msra.mxu0 %v1236
  %2676 = vmatpush.msra.mxu0 %v1235
  %2677 = vmatpush.msra.mxu0 %v1234
  %2678 = vmatpush.msra.mxu0 %v1233
  %2679 = vmatpush.msra.mxu0 %v1232
  %2680 = vmatpush.msra.mxu0 %v1231
  %2681 = vmatpush.msra.mxu0 %v1230
  %2682 = vmatpush.msra.mxu0 %v1229
  %2683 = vmatpush.msra.mxu0 %v1228
  %2684 = vmatmul.f32.gmra.mxu0 %v91
  %v2685 = vpop.f32.mrf.mxu0
  %v2686 = vadd.f32 %v2666, %v2685
  %2687 = vdwg.mxu0
  %v2688 = vmax.f32 %v2686, 0.0
  %v2689 = vld [vmem:[%s3] sm:$0xff]
  %v2690 = vld [vmem:[%s3 + $0x8] sm:$0xff]
  %v2691 = vld [vmem:[%s3 + $0x10] sm:$0xff]
  %v2692 = vld [vmem:[%s3 + $0x18] sm:$0xff]
  %v2693 = vld [vmem:[%s3 + $0x20] sm:$0xff]
  %v2694 = vld [vmem:[%s3 + $0x28] sm:$0xff]
  %v2695 = vld [vmem:[%s3 + $0x30] sm:$0xff]
  %v2696 = vld [vmem:[%s3 + $0x38] sm:$0xff]
  %v2697 = vld [vmem:[%s3 + $0x40] sm:$0xff]
  %v2698 = vld [vmem:[%s3 + $0x48] sm:$0xff]
  %v2699 = vld [vmem:[%s3 + $0x50] sm:$0xff]
  %v2700 = vld [vmem:[%s3 + $0x58] sm:$0xff]
  %v2701 = vld [vmem:[%s3 + $0x60] sm:$0xff]
  %v2702 = vld [vmem:[%s3 + $0x68] sm:$0xff]
  %v2703 = vld [vmem:[%s3 + $0x70] sm:$0xff]
  %v2704 = vld [vmem:[%s3 + $0x78] sm:$0xff]
  %v2705 = vld [vmem:[%s4] sm:$0x1]
  %v2707 = vperm.slane %v2705, 0
  %2709 = vmatpush.msra.mxu0 %v2704
  %2710 = vmatpush.msra.mxu0 %v2703
  %2711 = vmatpush.msra.mxu0 %v2702
  %2712 = vmatpush.msra.mxu0 %v2701
  %2713 = vmatpush.msra.mxu0 %v2700
  %2714 = vmatpush.msra.mxu0 %v2699
  %2715 = vmatpush.msra.mxu0 %v2698
  %2716 = vmatpush.msra.mxu0 %v2697
  %2717 = vmatpush.msra.mxu0 %v2696
  %2718 = vmatpush.msra.mxu0 %v2695
  %2719 = vmatpush.msra.mxu0 %v2694
  %2720 = vmatpush.msra.mxu0 %v2693
  %2721 = vmatpush.msra.mxu0 %v2692
  %2722 = vmatpush.msra.mxu0 %v2691
  %2723 = vmatpush.msra.mxu0 %v2690
  %2724 = vmatpush.msra.mxu0 %v2689
  %2725 = vmatmul.f32.gmra.mxu0 %v2688
  %v2726 = vpop.f32.mrf.mxu0
  %v2727 = vadd.f32 %v2707, %v2726
  %2728 = vdwg.mxu0
  %vm2729 = vcmask 80896
  %v2730 = vsel %vm2729, %v2727, -inf
  %2731 = vmax.xlane.f32.xlu0 %v2730
  %v2732 = vpop.xlane.xlu0 %2731
  %v2733 = vsub.f32 %v2727, %v2732
  %v2734 = vmul.f32 %v2733, 1.442695
  %v2735 = vpow.pop %v2734
  %v2736 = vsel %vm2729, %v2735, 0.0
  %2737 = vadd.xlane.f32.xlu0 %v2736
  %v2738 = vpop.xlane.xlu0 %2737
  %v2739 = vlog2.pop %v2738
  %v2740 = vmul.f32 %v2739, 0.6931472
  %v2741 = vsub.f32 %v2733, %v2740
  %2742 = vst.msk [vmem:[%s5] sm:$0xff] %vm2729, %v2741
  // Predicated region
  $region22: #{net_forward.3} parent=0 // pred_check
    _
  $region23: #{net_forward.3} parent=0 // pred_check_branch
    %2744 = sbr.rel (0) target = $region25
  $region24: #{net_forward.3} parent=0 // pred_region
    _
  $region25: #{net_forward.3} parent=0 // pred_fallthru
    _
  // Predicated region
  $region26: #{net_forward.3} parent=0 // pred_check
    _
  $region27: #{net_forward.3} parent=0 // pred_check_branch
    %2746 = sbr.rel (0) target = $region29
  $region28: #{net_forward.3} parent=0 // pred_region
    _
  $region29: #{net_forward.3} parent=0 // pred_fallthru
    _

</llo_original>
